<compile_context>
chip_gen: v7x
topology: tpu7x:2x2x1
jax: 0.10.0
libtpu: 0.0.40
codegen_flags: <defaults>
</compile_context>

<pallas_src>
import functools

import jax
import jax.numpy as jnp
import numpy as np
from jax.experimental import pallas as pl
from jax.experimental.pallas import tpu as pltpu


def _round_up(a, m):
    return (a + m - 1) // m * m


def _dac_kernel(mask_ref, x_ref, w1_ref, b1_ref, wt_ref, bt_ref, o_ref,
                y1f_ref, pif_ref, *, Wp, L_out):
    """One grid step = NB images concatenated along the lane axis.

    Per-image frame: index p = r*Wp + c (Wp >= W+4); real pixel (h, w) at
    r = h+2, c = w+2.  Output lane for image j, pixel (h, w):
    Q = j*Fin + h*Wp + w.  Every conv / pool tap is then a single contiguous
    lane slice [off : off + L_out] of the frame (off = dy*Wp + dx), valid for
    all images at once because q + off stays inside each image's own frame.

    mask_ref : (1, F)        1.0 at real pixels, 0.0 on the halo/garbage lanes
    x_ref    : (1, Cp, F)    zero-padded flattened input frames (f32)
    w1_ref   : (Cp, Cp)      1x1 conv weight (bf16)
    b1_ref   : (Cp, 1)       f32
    wt_ref   : (25, 2Cp, Cp) per-tap [3x3-embedded ; 5x5] weights (bf16)
    bt_ref   : (2Cp, 1)      f32
    o_ref    : (1, Cp, L_out) lane-dense output frames (f32)
    y1f_ref  : (Cp, F) bf16  scratch: conv1x1 output, halo zeroed
    pif_ref  : (Cp, F) f32   scratch: x with -1e30 halo (max-pool padding)
    """
    Cp = w1_ref.shape[0]
    mask = mask_ref[...]                               # (1, F)
    x = x_ref[0]                                       # (Cp, F) f32

    # ---- conv1x1 over every lane at once: one MXU matmul (bf16 in, f32 acc) --
    y1 = jax.lax.dot_general(
        w1_ref[...], x.astype(jnp.bfloat16),
        dimension_numbers=(((1,), (0,)), ((), ())),
        preferred_element_type=jnp.float32) + b1_ref[...]
    # zeroed halo == the zero padding the 3x3 / 5x5 convs expect
    y1f_ref[...] = (y1 * mask).astype(jnp.bfloat16)
    # "-inf" padding for the max pool (assumes |x| << 1e30, fine for activations)
    pif_ref[...] = jnp.where(mask > 0.5, x, -1e30)

    c0 = 2 * Wp + 2                                    # frame offset of pixel (h, w)
    d1 = jnp.maximum(y1f_ref[:, c0:c0 + L_out].astype(jnp.float32), 0.0)

    # ---- combined (3x3 embedded into 5x5) + 5x5 convs ------------------------
    # 25 accumulating MXU matmuls straight from the y1 scratch; no im2col
    # materialization, accumulator lives in f32 registers.
    acc = jnp.broadcast_to(bt_ref[...], (2 * Cp, L_out))
    for dy in range(5):
        for dx in range(5):
            t = dy * 5 + dx
            off = dy * Wp + dx
            acc = acc + jax.lax.dot_general(
                wt_ref[t], y1f_ref[:, off:off + L_out],
                dimension_numbers=(((1,), (0,)), ((), ())),
                preferred_element_type=jnp.float32)
    d23 = jnp.maximum(acc, 0.0)                        # rows [0:Cp]=3x3, [Cp:2Cp]=5x5

    # ---- 3x3 / stride-1 / pad-1 max-pool on x --------------------------------
    pool = pif_ref[:, Wp + 1:Wp + 1 + L_out]
    for dy in range(3):
        for dx in range(3):
            if dy == 0 and dx == 0:
                continue
            off = (dy + 1) * Wp + (dx + 1)
            pool = jnp.maximum(pool, pif_ref[:, off:off + L_out])

    o_ref[0] = (d1 + d23[:Cp] + d23[Cp:] + pool).astype(o_ref.dtype)


def dac_block_forward(x, params):
    """DACblock_with_inception_blocks forward.  x: (N, C, H, W) f32 NCHW."""
    N, C, H, W = x.shape
    Cp = _round_up(max(C, 8), 8)                       # sublane-padded channels

    # Frame row stride: smallest Wp >= W+4 with H*Wp % 128 == 0 (lane-dense
    # output / tap slices); fall back to W+4 if that would waste too much.
    Wp = W + 4
    for cand in range(W + 4, W + 4 + 33):
        if (H * cand) % 128 == 0:
            Wp = cand
            break
    Hp = H + 4
    L = H * Wp                                         # per-image output width
    Fin = _round_up(Hp * Wp + 4, 128)                  # per-image frame width (+4 tap reach)

    # Batch grouping: G grid blocks (>=2 when N>=2 -> both v7x TCs busy),
    # NB images concatenated along lanes inside each block.
    G = 1 if N == 1 else 2
    NB = -(-N // G)
    Np = G * NB
    F = NB * Fin                                       # lanes per block (input)
    L_out = (NB - 1) * Fin + L                         # lanes per block (output)

    # ---- zero-padded, channel-padded, flattened input frames -----------------
    xp = jnp.pad(x, ((0, Np - N), (0, Cp - C), (2, 2), (2, Wp - W - 2)))
    xf = jnp.pad(xp.reshape(Np, Cp, Hp * Wp), ((0, 0), (0, 0), (0, Fin - Hp * Wp)))
    xf = xf.reshape(G, NB, Cp, Fin).transpose(0, 2, 1, 3).reshape(G, Cp, F)

    # interior mask, tiled over the NB images of a block
    m2 = jnp.zeros((Hp, Wp), jnp.float32).at[2:2 + H, 2:2 + W].set(1.0)
    m1 = jnp.pad(m2.reshape(1, Hp * Wp), ((0, 0), (0, Fin - Hp * Wp)))
    mask = jnp.tile(m1, (1, NB))                       # (1, F)

    # ---- weights: channel-padded, bf16 MXU operands ---------------------------
    w1 = jnp.zeros((Cp, Cp), jnp.float32).at[:C, :C].set(params["w1"][:, :, 0, 0])
    b1 = jnp.zeros((Cp, 1), jnp.float32).at[:C, 0].set(params["b1"])
    w3e = jnp.pad(params["w3"], ((0, 0), (0, 0), (1, 1), (1, 1)))   # 3x3 -> 5x5 taps
    wt = jnp.zeros((25, 2 * Cp, Cp), jnp.float32)
    wt = wt.at[:, :C, :C].set(jnp.transpose(w3e, (2, 3, 0, 1)).reshape(25, C, C))
    wt = wt.at[:, Cp:Cp + C, :C].set(
        jnp.transpose(params["w5"], (2, 3, 0, 1)).reshape(25, C, C))
    bt = (jnp.zeros((2 * Cp, 1), jnp.float32)
          .at[:C, 0].set(params["b3"]).at[Cp:Cp + C, 0].set(params["b5"]))
    w1 = w1.astype(jnp.bfloat16)
    wt = wt.astype(jnp.bfloat16)

    # explicit scoped-VMEM limit (generous at toy sizes; re-derive for big C)
    block_bytes = (Cp * F * 4 + Cp * L_out * 4 + Cp * F * (2 + 4) + F * 4
                   + (25 * 2 * Cp * Cp + Cp * Cp) * 2 + 3 * Cp * 4)
    vmem_limit = int(min(64 * 2**20, max(16 * 2**20, 6 * block_bytes)))

    kernel = functools.partial(_dac_kernel, Wp=Wp, L_out=L_out)
    out = pl.pallas_call(
        kernel,
        out_shape=jax.ShapeDtypeStruct((G, Cp, L_out), jnp.float32),
        grid=(G,),
        in_specs=[
            pl.BlockSpec((1, F), lambda g: (0, 0)),
            pl.BlockSpec((1, Cp, F), lambda g: (g, 0, 0)),
            pl.BlockSpec((Cp, Cp), lambda g: (0, 0)),
            pl.BlockSpec((Cp, 1), lambda g: (0, 0)),
            pl.BlockSpec((25, 2 * Cp, Cp), lambda g: (0, 0, 0)),
            pl.BlockSpec((2 * Cp, 1), lambda g: (0, 0)),
        ],
        out_specs=pl.BlockSpec((1, Cp, L_out), lambda g: (g, 0, 0)),
        scratch_shapes=[
            pltpu.VMEM((Cp, F), jnp.bfloat16),   # y1f: conv1x1 out, halo zeroed
            pltpu.VMEM((Cp, F), jnp.float32),    # pif: x with -1e30 halo
        ],
        compiler_params=pltpu.CompilerParams(
            dimension_semantics=("parallel",),
            vmem_limit_bytes=vmem_limit),
    )(mask, xf, w1, b1, wt, bt)

    # extract per-image output frames, drop padded channels / garbage columns.
    # (One wrapper-side copy is kept on purpose: emitting exact NCHW from the
    #  kernel would cost per-row masked stores, which is worse.)
    frames = jnp.stack([out[:, :, j * Fin:j * Fin + L] for j in range(NB)], axis=1)
    frames = frames.reshape(Np, Cp, L)[:N, :C].reshape(N, C, H, Wp)
    return frames[:, :, :, :W]


def init_dac_params(key, channel):
    """Synthetic parameters matching the PyTorch module (biases zeroed in __init__)."""
    k1, k2, k3 = jax.random.split(key, 3)
    return {
        "w1": jax.random.normal(k1, (channel, channel, 1, 1), jnp.float32) * 0.2,
        "w3": jax.random.normal(k2, (channel, channel, 3, 3), jnp.float32) * 0.1,
        "w5": jax.random.normal(k3, (channel, channel, 5, 5), jnp.float32) * 0.05,
        "b1": jnp.zeros((channel,), jnp.float32),
        "b3": jnp.zeros((channel,), jnp.float32),
        "b5": jnp.zeros((channel,), jnp.float32),
    }


def _reference_forward(x, p):
    """Plain-JAX f32 reference (NCHW) mirroring the PyTorch forward."""
    def conv(inp, w, b, pad):
        y = jax.lax.conv_general_dilated(
            inp, w, window_strides=(1, 1), padding=((pad, pad), (pad, pad)),
            dimension_numbers=("NCHW", "OIHW", "NCHW"))
        return y + b[None, :, None, None]

    y1 = conv(x, p["w1"], p["b1"], 0)
    d1 = jax.nn.relu(y1)
    d2 = jax.nn.relu(conv(y1, p["w3"], p["b3"], 1))
    d3 = jax.nn.relu(conv(y1, p["w5"], p["b5"], 2))
    d4 = jax.lax.reduce_window(
        x, -jnp.inf, jax.lax.max,
        window_dimensions=(1, 1, 3, 3), window_strides=(1, 1, 1, 1),
        padding=((0, 0), (0, 0), (1, 1), (1, 1)))
    return d1 + d2 + d3 + d4


if __name__ == "__main__":
    N, C, H, W = 2, 4, 16, 16
    key = jax.random.PRNGKey(0)
    kx, kp = jax.random.split(key)
    x = jax.random.normal(kx, (N, C, H, W), jnp.float32)
    params = init_dac_params(kp, C)

    out = jax.block_until_ready(dac_block_forward(x, params))
    ref = jax.block_until_ready(_reference_forward(x, params))
    # tolerance accounts for bf16 MXU operands (accumulation is f32)
    np.testing.assert_allclose(np.asarray(out), np.asarray(ref), atol=2e-2, rtol=2e-2)

    # secondary check: N=4 exercises the multi-image-per-grid-step path (NB=2)
    x4 = jax.random.normal(jax.random.PRNGKey(1), (4, C, H, W), jnp.float32)
    out4 = jax.block_until_ready(dac_block_forward(x4, params))
    ref4 = _reference_forward(x4, params)
    np.testing.assert_allclose(np.asarray(out4), np.asarray(ref4), atol=2e-2, rtol=2e-2)

    print("KERNEL_OK")
</pallas_src>

<mosaic_0001>
module attributes {stable_mosaic.version = 11 : i64} {
  func.func @_dac_kernel(%arg0: i32, %arg1: memref<1x512xf32, #tpu.memory_space<vmem>>, %arg2: memref<1x8x512xf32, #tpu.memory_space<vmem>>, %arg3: memref<8x8xbf16, #tpu.memory_space<vmem>>, %arg4: memref<8x1xf32, #tpu.memory_space<vmem>>, %arg5: memref<25x16x8xbf16, #tpu.memory_space<vmem>>, %arg6: memref<16x1xf32, #tpu.memory_space<vmem>>, %arg7: memref<1x8x384xf32, #tpu.memory_space<vmem>>, %arg8: memref<8x512xbf16, #tpu.memory_space<vmem>>, %arg9: memref<8x512xf32, #tpu.memory_space<vmem>>) attributes {dimension_semantics = [#tpu.dimension_semantics<parallel>], iteration_bounds = array<i64: 2>, scalar_prefetch = 0 : i64, scratch_operands = 2 : i64, tpu.core_type = #tpu.core_type<tc>, window_params = [{pipeline_mode = #tpu.pipeline_mode<synchronous>, transform_indices = @transform_0, window_bounds = array<i64: 1, 512>}, {transform_indices = @transform_1, window_bounds = array<i64: 1, 8, 512>}, {pipeline_mode = #tpu.pipeline_mode<synchronous>, transform_indices = @transform_2, window_bounds = array<i64: 8, 8>}, {pipeline_mode = #tpu.pipeline_mode<synchronous>, transform_indices = @transform_3, window_bounds = array<i64: 8, 1>}, {pipeline_mode = #tpu.pipeline_mode<synchronous>, transform_indices = @transform_4, window_bounds = array<i64: 25, 16, 8>}, {pipeline_mode = #tpu.pipeline_mode<synchronous>, transform_indices = @transform_5, window_bounds = array<i64: 16, 1>}, {transform_indices = @transform_6, window_bounds = array<i64: 1, 8, 384>}]} {
    %c0 = arith.constant 0 : index
    %c0_0 = arith.constant 0 : index
    %0 = vector.load %arg1[%c0, %c0_0] : memref<1x512xf32, #tpu.memory_space<vmem>>, vector<1x512xf32>
    %c0_1 = arith.constant 0 : index
    %c0_2 = arith.constant 0 : index
    %c0_3 = arith.constant 0 : index
    %1 = vector.load %arg2[%c0_1, %c0_2, %c0_3] : memref<1x8x512xf32, #tpu.memory_space<vmem>>, vector<1x8x512xf32>
    %2 = vector.shape_cast %1 : vector<1x8x512xf32> to vector<8x512xf32>
    %c0_4 = arith.constant 0 : index
    %c0_5 = arith.constant 0 : index
    %3 = vector.load %arg3[%c0_4, %c0_5] : memref<8x8xbf16, #tpu.memory_space<vmem>>, vector<8x8xbf16>
    %4 = arith.truncf %2 : vector<8x512xf32> to vector<8x512xbf16>
    %cst = arith.constant dense<0.000000e+00> : vector<8x512xf32>
    %5 = tpu.matmul %3, %4, %cst {dimension_numbers = #tpu.dot_dimension_numbers<[1], [0], [0], [1], [0, 0, 1, 1], [], []>} : vector<8x8xbf16>, vector<8x512xbf16>, vector<8x512xf32> -> vector<8x512xf32>
    %c0_6 = arith.constant 0 : index
    %c0_7 = arith.constant 0 : index
    %6 = vector.load %arg4[%c0_6, %c0_7] : memref<8x1xf32, #tpu.memory_space<vmem>>, vector<8x1xf32>
    %7 = vector.broadcast %6 : vector<8x1xf32> to vector<8x512xf32>
    %8 = arith.addf %5, %7 : vector<8x512xf32>
    %9 = vector.broadcast %0 : vector<1x512xf32> to vector<8x512xf32>
    %10 = arith.mulf %8, %9 : vector<8x512xf32>
    %11 = arith.truncf %10 : vector<8x512xf32> to vector<8x512xbf16>
    %c0_8 = arith.constant 0 : index
    %c0_9 = arith.constant 0 : index
    %12 = vector.load %arg8[%c0_8, %c0_9] : memref<8x512xbf16, #tpu.memory_space<vmem>>, vector<8x512xbf16>
    tpu.vector_store %arg8[%c0_8, %c0_9], %11 {strides = array<i32>} : memref<8x512xbf16, #tpu.memory_space<vmem>>, vector<8x512xbf16>,
    %cst_10 = arith.constant 5.000000e-01 : f32
    %13 = vector.broadcast %cst_10 : f32 to vector<1x512xf32>
    %14 = arith.cmpf ogt, %0, %13 : vector<1x512xf32>
    %cst_11 = arith.constant -1.000000e+30 : f32
    %15 = vector.shape_cast %14 : vector<1x512xi1> to vector<1x512xi1>
    %16 = vector.broadcast %15 : vector<1x512xi1> to vector<8x512xi1>
    %17 = vector.broadcast %cst_11 : f32 to vector<8x512xf32>
    %18 = arith.select %16, %2, %17 : vector<8x512xi1>, vector<8x512xf32>
    %c0_12 = arith.constant 0 : index
    %c0_13 = arith.constant 0 : index
    %19 = vector.load %arg9[%c0_12, %c0_13] : memref<8x512xf32, #tpu.memory_space<vmem>>, vector<8x512xf32>
    tpu.vector_store %arg9[%c0_12, %c0_13], %18 {strides = array<i32>} : memref<8x512xf32, #tpu.memory_space<vmem>>, vector<8x512xf32>,
    %c0_14 = arith.constant 0 : index
    %c50 = arith.constant 50 : index
    %20 = vector.load %arg8[%c0_14, %c50] : memref<8x512xbf16, #tpu.memory_space<vmem>>, vector<8x384xbf16>
    %21 = arith.extf %20 : vector<8x384xbf16> to vector<8x384xf32>
    %cst_15 = arith.constant 0.000000e+00 : f32
    %22 = vector.broadcast %cst_15 : f32 to vector<8x384xf32>
    %23 = arith.maximumf %21, %22 : vector<8x384xf32>
    %c0_16 = arith.constant 0 : index
    %c0_17 = arith.constant 0 : index
    %24 = vector.load %arg6[%c0_16, %c0_17] : memref<16x1xf32, #tpu.memory_space<vmem>>, vector<16x1xf32>
    %25 = vector.shape_cast %24 : vector<16x1xf32> to vector<16x1xf32>
    %26 = vector.broadcast %25 : vector<16x1xf32> to vector<16x384xf32>
    %c0_18 = arith.constant 0 : index
    %c0_19 = arith.constant 0 : index
    %c0_20 = arith.constant 0 : index
    %27 = vector.load %arg5[%c0_18, %c0_19, %c0_20] : memref<25x16x8xbf16, #tpu.memory_space<vmem>>, vector<1x16x8xbf16>
    %28 = vector.shape_cast %27 : vector<1x16x8xbf16> to vector<16x8xbf16>
    %c0_21 = arith.constant 0 : index
    %c0_22 = arith.constant 0 : index
    %29 = vector.load %arg8[%c0_21, %c0_22] : memref<8x512xbf16, #tpu.memory_space<vmem>>, vector<8x384xbf16>
    %cst_23 = arith.constant dense<0.000000e+00> : vector<16x384xf32>
    %30 = tpu.matmul %28, %29, %cst_23 {dimension_numbers = #tpu.dot_dimension_numbers<[1], [0], [0], [1], [0, 0, 1, 1], [], []>} : vector<16x8xbf16>, vector<8x384xbf16>, vector<16x384xf32> -> vector<16x384xf32>
    %31 = arith.addf %26, %30 : vector<16x384xf32>
    %c1 = arith.constant 1 : index
    %c0_24 = arith.constant 0 : index
    %c0_25 = arith.constant 0 : index
    %32 = vector.load %arg5[%c1, %c0_24, %c0_25] : memref<25x16x8xbf16, #tpu.memory_space<vmem>>, vector<1x16x8xbf16>
    %33 = vector.shape_cast %32 : vector<1x16x8xbf16> to vector<16x8xbf16>
    %c0_26 = arith.constant 0 : index
    %c1_27 = arith.constant 1 : index
    %34 = vector.load %arg8[%c0_26, %c1_27] : memref<8x512xbf16, #tpu.memory_space<vmem>>, vector<8x384xbf16>
    %cst_28 = arith.constant dense<0.000000e+00> : vector<16x384xf32>
    %35 = tpu.matmul %33, %34, %cst_28 {dimension_numbers = #tpu.dot_dimension_numbers<[1], [0], [0], [1], [0, 0, 1, 1], [], []>} : vector<16x8xbf16>, vector<8x384xbf16>, vector<16x384xf32> -> vector<16x384xf32>
    %36 = arith.addf %31, %35 : vector<16x384xf32>
    %c2 = arith.constant 2 : index
    %c0_29 = arith.constant 0 : index
    %c0_30 = arith.constant 0 : index
    %37 = vector.load %arg5[%c2, %c0_29, %c0_30] : memref<25x16x8xbf16, #tpu.memory_space<vmem>>, vector<1x16x8xbf16>
    %38 = vector.shape_cast %37 : vector<1x16x8xbf16> to vector<16x8xbf16>
    %c0_31 = arith.constant 0 : index
    %c2_32 = arith.constant 2 : index
    %39 = vector.load %arg8[%c0_31, %c2_32] : memref<8x512xbf16, #tpu.memory_space<vmem>>, vector<8x384xbf16>
    %cst_33 = arith.constant dense<0.000000e+00> : vector<16x384xf32>
    %40 = tpu.matmul %38, %39, %cst_33 {dimension_numbers = #tpu.dot_dimension_numbers<[1], [0], [0], [1], [0, 0, 1, 1], [], []>} : vector<16x8xbf16>, vector<8x384xbf16>, vector<16x384xf32> -> vector<16x384xf32>
    %41 = arith.addf %36, %40 : vector<16x384xf32>
    %c3 = arith.constant 3 : index
    %c0_34 = arith.constant 0 : index
    %c0_35 = arith.constant 0 : index
    %42 = vector.load %arg5[%c3, %c0_34, %c0_35] : memref<25x16x8xbf16, #tpu.memory_space<vmem>>, vector<1x16x8xbf16>
    %43 = vector.shape_cast %42 : vector<1x16x8xbf16> to vector<16x8xbf16>
    %c0_36 = arith.constant 0 : index
    %c3_37 = arith.constant 3 : index
    %44 = vector.load %arg8[%c0_36, %c3_37] : memref<8x512xbf16, #tpu.memory_space<vmem>>, vector<8x384xbf16>
    %cst_38 = arith.constant dense<0.000000e+00> : vector<16x384xf32>
    %45 = tpu.matmul %43, %44, %cst_38 {dimension_numbers = #tpu.dot_dimension_numbers<[1], [0], [0], [1], [0, 0, 1, 1], [], []>} : vector<16x8xbf16>, vector<8x384xbf16>, vector<16x384xf32> -> vector<16x384xf32>
    %46 = arith.addf %41, %45 : vector<16x384xf32>
    %c4 = arith.constant 4 : index
    %c0_39 = arith.constant 0 : index
    %c0_40 = arith.constant 0 : index
    %47 = vector.load %arg5[%c4, %c0_39, %c0_40] : memref<25x16x8xbf16, #tpu.memory_space<vmem>>, vector<1x16x8xbf16>
    %48 = vector.shape_cast %47 : vector<1x16x8xbf16> to vector<16x8xbf16>
    %c0_41 = arith.constant 0 : index
    %c4_42 = arith.constant 4 : index
    %49 = vector.load %arg8[%c0_41, %c4_42] : memref<8x512xbf16, #tpu.memory_space<vmem>>, vector<8x384xbf16>
    %cst_43 = arith.constant dense<0.000000e+00> : vector<16x384xf32>
    %50 = tpu.matmul %48, %49, %cst_43 {dimension_numbers = #tpu.dot_dimension_numbers<[1], [0], [0], [1], [0, 0, 1, 1], [], []>} : vector<16x8xbf16>, vector<8x384xbf16>, vector<16x384xf32> -> vector<16x384xf32>
    %51 = arith.addf %46, %50 : vector<16x384xf32>
    %c5 = arith.constant 5 : index
    %c0_44 = arith.constant 0 : index
    %c0_45 = arith.constant 0 : index
    %52 = vector.load %arg5[%c5, %c0_44, %c0_45] : memref<25x16x8xbf16, #tpu.memory_space<vmem>>, vector<1x16x8xbf16>
    %53 = vector.shape_cast %52 : vector<1x16x8xbf16> to vector<16x8xbf16>
    %c0_46 = arith.constant 0 : index
    %c24 = arith.constant 24 : index
    %54 = vector.load %arg8[%c0_46, %c24] : memref<8x512xbf16, #tpu.memory_space<vmem>>, vector<8x384xbf16>
    %cst_47 = arith.constant dense<0.000000e+00> : vector<16x384xf32>
    %55 = tpu.matmul %53, %54, %cst_47 {dimension_numbers = #tpu.dot_dimension_numbers<[1], [0], [0], [1], [0, 0, 1, 1], [], []>} : vector<16x8xbf16>, vector<8x384xbf16>, vector<16x384xf32> -> vector<16x384xf32>
    %56 = arith.addf %51, %55 : vector<16x384xf32>
    %c6 = arith.constant 6 : index
    %c0_48 = arith.constant 0 : index
    %c0_49 = arith.constant 0 : index
    %57 = vector.load %arg5[%c6, %c0_48, %c0_49] : memref<25x16x8xbf16, #tpu.memory_space<vmem>>, vector<1x16x8xbf16>
    %58 = vector.shape_cast %57 : vector<1x16x8xbf16> to vector<16x8xbf16>
    %c0_50 = arith.constant 0 : index
    %c25 = arith.constant 25 : index
    %59 = vector.load %arg8[%c0_50, %c25] : memref<8x512xbf16, #tpu.memory_space<vmem>>, vector<8x384xbf16>
    %cst_51 = arith.constant dense<0.000000e+00> : vector<16x384xf32>
    %60 = tpu.matmul %58, %59, %cst_51 {dimension_numbers = #tpu.dot_dimension_numbers<[1], [0], [0], [1], [0, 0, 1, 1], [], []>} : vector<16x8xbf16>, vector<8x384xbf16>, vector<16x384xf32> -> vector<16x384xf32>
    %61 = arith.addf %56, %60 : vector<16x384xf32>
    %c7 = arith.constant 7 : index
    %c0_52 = arith.constant 0 : index
    %c0_53 = arith.constant 0 : index
    %62 = vector.load %arg5[%c7, %c0_52, %c0_53] : memref<25x16x8xbf16, #tpu.memory_space<vmem>>, vector<1x16x8xbf16>
    %63 = vector.shape_cast %62 : vector<1x16x8xbf16> to vector<16x8xbf16>
    %c0_54 = arith.constant 0 : index
    %c26 = arith.constant 26 : index
    %64 = vector.load %arg8[%c0_54, %c26] : memref<8x512xbf16, #tpu.memory_space<vmem>>, vector<8x384xbf16>
    %cst_55 = arith.constant dense<0.000000e+00> : vector<16x384xf32>
    %65 = tpu.matmul %63, %64, %cst_55 {dimension_numbers = #tpu.dot_dimension_numbers<[1], [0], [0], [1], [0, 0, 1, 1], [], []>} : vector<16x8xbf16>, vector<8x384xbf16>, vector<16x384xf32> -> vector<16x384xf32>
    %66 = arith.addf %61, %65 : vector<16x384xf32>
    %c8 = arith.constant 8 : index
    %c0_56 = arith.constant 0 : index
    %c0_57 = arith.constant 0 : index
    %67 = vector.load %arg5[%c8, %c0_56, %c0_57] : memref<25x16x8xbf16, #tpu.memory_space<vmem>>, vector<1x16x8xbf16>
    %68 = vector.shape_cast %67 : vector<1x16x8xbf16> to vector<16x8xbf16>
    %c0_58 = arith.constant 0 : index
    %c27 = arith.constant 27 : index
    %69 = vector.load %arg8[%c0_58, %c27] : memref<8x512xbf16, #tpu.memory_space<vmem>>, vector<8x384xbf16>
    %cst_59 = arith.constant dense<0.000000e+00> : vector<16x384xf32>
    %70 = tpu.matmul %68, %69, %cst_59 {dimension_numbers = #tpu.dot_dimension_numbers<[1], [0], [0], [1], [0, 0, 1, 1], [], []>} : vector<16x8xbf16>, vector<8x384xbf16>, vector<16x384xf32> -> vector<16x384xf32>
    %71 = arith.addf %66, %70 : vector<16x384xf32>
    %c9 = arith.constant 9 : index
    %c0_60 = arith.constant 0 : index
    %c0_61 = arith.constant 0 : index
    %72 = vector.load %arg5[%c9, %c0_60, %c0_61] : memref<25x16x8xbf16, #tpu.memory_space<vmem>>, vector<1x16x8xbf16>
    %73 = vector.shape_cast %72 : vector<1x16x8xbf16> to vector<16x8xbf16>
    %c0_62 = arith.constant 0 : index
    %c28 = arith.constant 28 : index
    %74 = vector.load %arg8[%c0_62, %c28] : memref<8x512xbf16, #tpu.memory_space<vmem>>, vector<8x384xbf16>
    %cst_63 = arith.constant dense<0.000000e+00> : vector<16x384xf32>
    %75 = tpu.matmul %73, %74, %cst_63 {dimension_numbers = #tpu.dot_dimension_numbers<[1], [0], [0], [1], [0, 0, 1, 1], [], []>} : vector<16x8xbf16>, vector<8x384xbf16>, vector<16x384xf32> -> vector<16x384xf32>
    %76 = arith.addf %71, %75 : vector<16x384xf32>
    %c10 = arith.constant 10 : index
    %c0_64 = arith.constant 0 : index
    %c0_65 = arith.constant 0 : index
    %77 = vector.load %arg5[%c10, %c0_64, %c0_65] : memref<25x16x8xbf16, #tpu.memory_space<vmem>>, vector<1x16x8xbf16>
    %78 = vector.shape_cast %77 : vector<1x16x8xbf16> to vector<16x8xbf16>
    %c0_66 = arith.constant 0 : index
    %c48 = arith.constant 48 : index
    %79 = vector.load %arg8[%c0_66, %c48] : memref<8x512xbf16, #tpu.memory_space<vmem>>, vector<8x384xbf16>
    %cst_67 = arith.constant dense<0.000000e+00> : vector<16x384xf32>
    %80 = tpu.matmul %78, %79, %cst_67 {dimension_numbers = #tpu.dot_dimension_numbers<[1], [0], [0], [1], [0, 0, 1, 1], [], []>} : vector<16x8xbf16>, vector<8x384xbf16>, vector<16x384xf32> -> vector<16x384xf32>
    %81 = arith.addf %76, %80 : vector<16x384xf32>
    %c11 = arith.constant 11 : index
    %c0_68 = arith.constant 0 : index
    %c0_69 = arith.constant 0 : index
    %82 = vector.load %arg5[%c11, %c0_68, %c0_69] : memref<25x16x8xbf16, #tpu.memory_space<vmem>>, vector<1x16x8xbf16>
    %83 = vector.shape_cast %82 : vector<1x16x8xbf16> to vector<16x8xbf16>
    %c0_70 = arith.constant 0 : index
    %c49 = arith.constant 49 : index
    %84 = vector.load %arg8[%c0_70, %c49] : memref<8x512xbf16, #tpu.memory_space<vmem>>, vector<8x384xbf16>
    %cst_71 = arith.constant dense<0.000000e+00> : vector<16x384xf32>
    %85 = tpu.matmul %83, %84, %cst_71 {dimension_numbers = #tpu.dot_dimension_numbers<[1], [0], [0], [1], [0, 0, 1, 1], [], []>} : vector<16x8xbf16>, vector<8x384xbf16>, vector<16x384xf32> -> vector<16x384xf32>
    %86 = arith.addf %81, %85 : vector<16x384xf32>
    %c12 = arith.constant 12 : index
    %c0_72 = arith.constant 0 : index
    %c0_73 = arith.constant 0 : index
    %87 = vector.load %arg5[%c12, %c0_72, %c0_73] : memref<25x16x8xbf16, #tpu.memory_space<vmem>>, vector<1x16x8xbf16>
    %88 = vector.shape_cast %87 : vector<1x16x8xbf16> to vector<16x8xbf16>
    %c0_74 = arith.constant 0 : index
    %c50_75 = arith.constant 50 : index
    %89 = vector.load %arg8[%c0_74, %c50_75] : memref<8x512xbf16, #tpu.memory_space<vmem>>, vector<8x384xbf16>
    %cst_76 = arith.constant dense<0.000000e+00> : vector<16x384xf32>
    %90 = tpu.matmul %88, %89, %cst_76 {dimension_numbers = #tpu.dot_dimension_numbers<[1], [0], [0], [1], [0, 0, 1, 1], [], []>} : vector<16x8xbf16>, vector<8x384xbf16>, vector<16x384xf32> -> vector<16x384xf32>
    %91 = arith.addf %86, %90 : vector<16x384xf32>
    %c13 = arith.constant 13 : index
    %c0_77 = arith.constant 0 : index
    %c0_78 = arith.constant 0 : index
    %92 = vector.load %arg5[%c13, %c0_77, %c0_78] : memref<25x16x8xbf16, #tpu.memory_space<vmem>>, vector<1x16x8xbf16>
    %93 = vector.shape_cast %92 : vector<1x16x8xbf16> to vector<16x8xbf16>
    %c0_79 = arith.constant 0 : index
    %c51 = arith.constant 51 : index
    %94 = vector.load %arg8[%c0_79, %c51] : memref<8x512xbf16, #tpu.memory_space<vmem>>, vector<8x384xbf16>
    %cst_80 = arith.constant dense<0.000000e+00> : vector<16x384xf32>
    %95 = tpu.matmul %93, %94, %cst_80 {dimension_numbers = #tpu.dot_dimension_numbers<[1], [0], [0], [1], [0, 0, 1, 1], [], []>} : vector<16x8xbf16>, vector<8x384xbf16>, vector<16x384xf32> -> vector<16x384xf32>
    %96 = arith.addf %91, %95 : vector<16x384xf32>
    %c14 = arith.constant 14 : index
    %c0_81 = arith.constant 0 : index
    %c0_82 = arith.constant 0 : index
    %97 = vector.load %arg5[%c14, %c0_81, %c0_82] : memref<25x16x8xbf16, #tpu.memory_space<vmem>>, vector<1x16x8xbf16>
    %98 = vector.shape_cast %97 : vector<1x16x8xbf16> to vector<16x8xbf16>
    %c0_83 = arith.constant 0 : index
    %c52 = arith.constant 52 : index
    %99 = vector.load %arg8[%c0_83, %c52] : memref<8x512xbf16, #tpu.memory_space<vmem>>, vector<8x384xbf16>
    %cst_84 = arith.constant dense<0.000000e+00> : vector<16x384xf32>
    %100 = tpu.matmul %98, %99, %cst_84 {dimension_numbers = #tpu.dot_dimension_numbers<[1], [0], [0], [1], [0, 0, 1, 1], [], []>} : vector<16x8xbf16>, vector<8x384xbf16>, vector<16x384xf32> -> vector<16x384xf32>
    %101 = arith.addf %96, %100 : vector<16x384xf32>
    %c15 = arith.constant 15 : index
    %c0_85 = arith.constant 0 : index
    %c0_86 = arith.constant 0 : index
    %102 = vector.load %arg5[%c15, %c0_85, %c0_86] : memref<25x16x8xbf16, #tpu.memory_space<vmem>>, vector<1x16x8xbf16>
    %103 = vector.shape_cast %102 : vector<1x16x8xbf16> to vector<16x8xbf16>
    %c0_87 = arith.constant 0 : index
    %c72 = arith.constant 72 : index
    %104 = vector.load %arg8[%c0_87, %c72] : memref<8x512xbf16, #tpu.memory_space<vmem>>, vector<8x384xbf16>
    %cst_88 = arith.constant dense<0.000000e+00> : vector<16x384xf32>
    %105 = tpu.matmul %103, %104, %cst_88 {dimension_numbers = #tpu.dot_dimension_numbers<[1], [0], [0], [1], [0, 0, 1, 1], [], []>} : vector<16x8xbf16>, vector<8x384xbf16>, vector<16x384xf32> -> vector<16x384xf32>
    %106 = arith.addf %101, %105 : vector<16x384xf32>
    %c16 = arith.constant 16 : index
    %c0_89 = arith.constant 0 : index
    %c0_90 = arith.constant 0 : index
    %107 = vector.load %arg5[%c16, %c0_89, %c0_90] : memref<25x16x8xbf16, #tpu.memory_space<vmem>>, vector<1x16x8xbf16>
    %108 = vector.shape_cast %107 : vector<1x16x8xbf16> to vector<16x8xbf16>
    %c0_91 = arith.constant 0 : index
    %c73 = arith.constant 73 : index
    %109 = vector.load %arg8[%c0_91, %c73] : memref<8x512xbf16, #tpu.memory_space<vmem>>, vector<8x384xbf16>
    %cst_92 = arith.constant dense<0.000000e+00> : vector<16x384xf32>
    %110 = tpu.matmul %108, %109, %cst_92 {dimension_numbers = #tpu.dot_dimension_numbers<[1], [0], [0], [1], [0, 0, 1, 1], [], []>} : vector<16x8xbf16>, vector<8x384xbf16>, vector<16x384xf32> -> vector<16x384xf32>
    %111 = arith.addf %106, %110 : vector<16x384xf32>
    %c17 = arith.constant 17 : index
    %c0_93 = arith.constant 0 : index
    %c0_94 = arith.constant 0 : index
    %112 = vector.load %arg5[%c17, %c0_93, %c0_94] : memref<25x16x8xbf16, #tpu.memory_space<vmem>>, vector<1x16x8xbf16>
    %113 = vector.shape_cast %112 : vector<1x16x8xbf16> to vector<16x8xbf16>
    %c0_95 = arith.constant 0 : index
    %c74 = arith.constant 74 : index
    %114 = vector.load %arg8[%c0_95, %c74] : memref<8x512xbf16, #tpu.memory_space<vmem>>, vector<8x384xbf16>
    %cst_96 = arith.constant dense<0.000000e+00> : vector<16x384xf32>
    %115 = tpu.matmul %113, %114, %cst_96 {dimension_numbers = #tpu.dot_dimension_numbers<[1], [0], [0], [1], [0, 0, 1, 1], [], []>} : vector<16x8xbf16>, vector<8x384xbf16>, vector<16x384xf32> -> vector<16x384xf32>
    %116 = arith.addf %111, %115 : vector<16x384xf32>
    %c18 = arith.constant 18 : index
    %c0_97 = arith.constant 0 : index
    %c0_98 = arith.constant 0 : index
    %117 = vector.load %arg5[%c18, %c0_97, %c0_98] : memref<25x16x8xbf16, #tpu.memory_space<vmem>>, vector<1x16x8xbf16>
    %118 = vector.shape_cast %117 : vector<1x16x8xbf16> to vector<16x8xbf16>
    %c0_99 = arith.constant 0 : index
    %c75 = arith.constant 75 : index
    %119 = vector.load %arg8[%c0_99, %c75] : memref<8x512xbf16, #tpu.memory_space<vmem>>, vector<8x384xbf16>
    %cst_100 = arith.constant dense<0.000000e+00> : vector<16x384xf32>
    %120 = tpu.matmul %118, %119, %cst_100 {dimension_numbers = #tpu.dot_dimension_numbers<[1], [0], [0], [1], [0, 0, 1, 1], [], []>} : vector<16x8xbf16>, vector<8x384xbf16>, vector<16x384xf32> -> vector<16x384xf32>
    %121 = arith.addf %116, %120 : vector<16x384xf32>
    %c19 = arith.constant 19 : index
    %c0_101 = arith.constant 0 : index
    %c0_102 = arith.constant 0 : index
    %122 = vector.load %arg5[%c19, %c0_101, %c0_102] : memref<25x16x8xbf16, #tpu.memory_space<vmem>>, vector<1x16x8xbf16>
    %123 = vector.shape_cast %122 : vector<1x16x8xbf16> to vector<16x8xbf16>
    %c0_103 = arith.constant 0 : index
    %c76 = arith.constant 76 : index
    %124 = vector.load %arg8[%c0_103, %c76] : memref<8x512xbf16, #tpu.memory_space<vmem>>, vector<8x384xbf16>
    %cst_104 = arith.constant dense<0.000000e+00> : vector<16x384xf32>
    %125 = tpu.matmul %123, %124, %cst_104 {dimension_numbers = #tpu.dot_dimension_numbers<[1], [0], [0], [1], [0, 0, 1, 1], [], []>} : vector<16x8xbf16>, vector<8x384xbf16>, vector<16x384xf32> -> vector<16x384xf32>
    %126 = arith.addf %121, %125 : vector<16x384xf32>
    %c20 = arith.constant 20 : index
    %c0_105 = arith.constant 0 : index
    %c0_106 = arith.constant 0 : index
    %127 = vector.load %arg5[%c20, %c0_105, %c0_106] : memref<25x16x8xbf16, #tpu.memory_space<vmem>>, vector<1x16x8xbf16>
    %128 = vector.shape_cast %127 : vector<1x16x8xbf16> to vector<16x8xbf16>
    %c0_107 = arith.constant 0 : index
    %c96 = arith.constant 96 : index
    %129 = vector.load %arg8[%c0_107, %c96] : memref<8x512xbf16, #tpu.memory_space<vmem>>, vector<8x384xbf16>
    %cst_108 = arith.constant dense<0.000000e+00> : vector<16x384xf32>
    %130 = tpu.matmul %128, %129, %cst_108 {dimension_numbers = #tpu.dot_dimension_numbers<[1], [0], [0], [1], [0, 0, 1, 1], [], []>} : vector<16x8xbf16>, vector<8x384xbf16>, vector<16x384xf32> -> vector<16x384xf32>
    %131 = arith.addf %126, %130 : vector<16x384xf32>
    %c21 = arith.constant 21 : index
    %c0_109 = arith.constant 0 : index
    %c0_110 = arith.constant 0 : index
    %132 = vector.load %arg5[%c21, %c0_109, %c0_110] : memref<25x16x8xbf16, #tpu.memory_space<vmem>>, vector<1x16x8xbf16>
    %133 = vector.shape_cast %132 : vector<1x16x8xbf16> to vector<16x8xbf16>
    %c0_111 = arith.constant 0 : index
    %c97 = arith.constant 97 : index
    %134 = vector.load %arg8[%c0_111, %c97] : memref<8x512xbf16, #tpu.memory_space<vmem>>, vector<8x384xbf16>
    %cst_112 = arith.constant dense<0.000000e+00> : vector<16x384xf32>
    %135 = tpu.matmul %133, %134, %cst_112 {dimension_numbers = #tpu.dot_dimension_numbers<[1], [0], [0], [1], [0, 0, 1, 1], [], []>} : vector<16x8xbf16>, vector<8x384xbf16>, vector<16x384xf32> -> vector<16x384xf32>
    %136 = arith.addf %131, %135 : vector<16x384xf32>
    %c22 = arith.constant 22 : index
    %c0_113 = arith.constant 0 : index
    %c0_114 = arith.constant 0 : index
    %137 = vector.load %arg5[%c22, %c0_113, %c0_114] : memref<25x16x8xbf16, #tpu.memory_space<vmem>>, vector<1x16x8xbf16>
    %138 = vector.shape_cast %137 : vector<1x16x8xbf16> to vector<16x8xbf16>
    %c0_115 = arith.constant 0 : index
    %c98 = arith.constant 98 : index
    %139 = vector.load %arg8[%c0_115, %c98] : memref<8x512xbf16, #tpu.memory_space<vmem>>, vector<8x384xbf16>
    %cst_116 = arith.constant dense<0.000000e+00> : vector<16x384xf32>
    %140 = tpu.matmul %138, %139, %cst_116 {dimension_numbers = #tpu.dot_dimension_numbers<[1], [0], [0], [1], [0, 0, 1, 1], [], []>} : vector<16x8xbf16>, vector<8x384xbf16>, vector<16x384xf32> -> vector<16x384xf32>
    %141 = arith.addf %136, %140 : vector<16x384xf32>
    %c23 = arith.constant 23 : index
    %c0_117 = arith.constant 0 : index
    %c0_118 = arith.constant 0 : index
    %142 = vector.load %arg5[%c23, %c0_117, %c0_118] : memref<25x16x8xbf16, #tpu.memory_space<vmem>>, vector<1x16x8xbf16>
    %143 = vector.shape_cast %142 : vector<1x16x8xbf16> to vector<16x8xbf16>
    %c0_119 = arith.constant 0 : index
    %c99 = arith.constant 99 : index
    %144 = vector.load %arg8[%c0_119, %c99] : memref<8x512xbf16, #tpu.memory_space<vmem>>, vector<8x384xbf16>
    %cst_120 = arith.constant dense<0.000000e+00> : vector<16x384xf32>
    %145 = tpu.matmul %143, %144, %cst_120 {dimension_numbers = #tpu.dot_dimension_numbers<[1], [0], [0], [1], [0, 0, 1, 1], [], []>} : vector<16x8xbf16>, vector<8x384xbf16>, vector<16x384xf32> -> vector<16x384xf32>
    %146 = arith.addf %141, %145 : vector<16x384xf32>
    %c24_121 = arith.constant 24 : index
    %c0_122 = arith.constant 0 : index
    %c0_123 = arith.constant 0 : index
    %147 = vector.load %arg5[%c24_121, %c0_122, %c0_123] : memref<25x16x8xbf16, #tpu.memory_space<vmem>>, vector<1x16x8xbf16>
    %148 = vector.shape_cast %147 : vector<1x16x8xbf16> to vector<16x8xbf16>
    %c0_124 = arith.constant 0 : index
    %c100 = arith.constant 100 : index
    %149 = vector.load %arg8[%c0_124, %c100] : memref<8x512xbf16, #tpu.memory_space<vmem>>, vector<8x384xbf16>
    %cst_125 = arith.constant dense<0.000000e+00> : vector<16x384xf32>
    %150 = tpu.matmul %148, %149, %cst_125 {dimension_numbers = #tpu.dot_dimension_numbers<[1], [0], [0], [1], [0, 0, 1, 1], [], []>} : vector<16x8xbf16>, vector<8x384xbf16>, vector<16x384xf32> -> vector<16x384xf32>
    %151 = arith.addf %146, %150 : vector<16x384xf32>
    %cst_126 = arith.constant 0.000000e+00 : f32
    %152 = vector.broadcast %cst_126 : f32 to vector<16x384xf32>
    %153 = arith.maximumf %151, %152 : vector<16x384xf32>
    %c0_127 = arith.constant 0 : index
    %c25_128 = arith.constant 25 : index
    %154 = vector.load %arg9[%c0_127, %c25_128] : memref<8x512xf32, #tpu.memory_space<vmem>>, vector<8x384xf32>
    %c0_129 = arith.constant 0 : index
    %c26_130 = arith.constant 26 : index
    %155 = vector.load %arg9[%c0_129, %c26_130] : memref<8x512xf32, #tpu.memory_space<vmem>>, vector<8x384xf32>
    %156 = arith.maximumf %154, %155 : vector<8x384xf32>
    %c0_131 = arith.constant 0 : index
    %c27_132 = arith.constant 27 : index
    %157 = vector.load %arg9[%c0_131, %c27_132] : memref<8x512xf32, #tpu.memory_space<vmem>>, vector<8x384xf32>
    %158 = arith.maximumf %156, %157 : vector<8x384xf32>
    %c0_133 = arith.constant 0 : index
    %c49_134 = arith.constant 49 : index
    %159 = vector.load %arg9[%c0_133, %c49_134] : memref<8x512xf32, #tpu.memory_space<vmem>>, vector<8x384xf32>
    %160 = arith.maximumf %158, %159 : vector<8x384xf32>
    %c0_135 = arith.constant 0 : index
    %c50_136 = arith.constant 50 : index
    %161 = vector.load %arg9[%c0_135, %c50_136] : memref<8x512xf32, #tpu.memory_space<vmem>>, vector<8x384xf32>
    %162 = arith.maximumf %160, %161 : vector<8x384xf32>
    %c0_137 = arith.constant 0 : index
    %c51_138 = arith.constant 51 : index
    %163 = vector.load %arg9[%c0_137, %c51_138] : memref<8x512xf32, #tpu.memory_space<vmem>>, vector<8x384xf32>
    %164 = arith.maximumf %162, %163 : vector<8x384xf32>
    %c0_139 = arith.constant 0 : index
    %c73_140 = arith.constant 73 : index
    %165 = vector.load %arg9[%c0_139, %c73_140] : memref<8x512xf32, #tpu.memory_space<vmem>>, vector<8x384xf32>
    %166 = arith.maximumf %164, %165 : vector<8x384xf32>
    %c0_141 = arith.constant 0 : index
    %c74_142 = arith.constant 74 : index
    %167 = vector.load %arg9[%c0_141, %c74_142] : memref<8x512xf32, #tpu.memory_space<vmem>>, vector<8x384xf32>
    %168 = arith.maximumf %166, %167 : vector<8x384xf32>
    %c0_143 = arith.constant 0 : index
    %c75_144 = arith.constant 75 : index
    %169 = vector.load %arg9[%c0_143, %c75_144] : memref<8x512xf32, #tpu.memory_space<vmem>>, vector<8x384xf32>
    %170 = arith.maximumf %168, %169 : vector<8x384xf32>
    %171 = vector.extract_strided_slice %153 {offsets = [0, 0], sizes = [8, 384], strides = [1, 1]} : vector<16x384xf32> to vector<8x384xf32>
    %172 = arith.addf %23, %171 : vector<8x384xf32>
    %173 = vector.extract_strided_slice %153 {offsets = [8, 0], sizes = [8, 384], strides = [1, 1]} : vector<16x384xf32> to vector<8x384xf32>
    %174 = arith.addf %172, %173 : vector<8x384xf32>
    %175 = arith.addf %174, %170 : vector<8x384xf32>
    %c0_145 = arith.constant 0 : index
    %c0_146 = arith.constant 0 : index
    %c0_147 = arith.constant 0 : index
    %176 = vector.load %arg7[%c0_145, %c0_146, %c0_147] : memref<1x8x384xf32, #tpu.memory_space<vmem>>, vector<1x8x384xf32>
    %177 = vector.shape_cast %176 : vector<1x8x384xf32> to vector<8x384xf32>
    %178 = vector.shape_cast %175 : vector<8x384xf32> to vector<1x8x384xf32>
    tpu.vector_store %arg7[%c0_145, %c0_146, %c0_147], %178 {strides = array<i32>} : memref<1x8x384xf32, #tpu.memory_space<vmem>>, vector<1x8x384xf32>,
    return
  }
  func.func @transform_0(%arg0: i32) -> (i32, i32) {
    %c0_i32 = arith.constant 0 : i32
    %c0_i32_0 = arith.constant 0 : i32
    %c0_i32_1 = arith.constant 0 : i32
    return %c0_i32, %c0_i32_0 : i32, i32
  }
  func.func @transform_1(%arg0: i32) -> (i32, i32, i32) {
    %c0_i32 = arith.constant 0 : i32
    %c0_i32_0 = arith.constant 0 : i32
    %c0_i32_1 = arith.constant 0 : i32
    return %arg0, %c0_i32, %c0_i32_0 : i32, i32, i32
  }
  func.func @transform_2(%arg0: i32) -> (i32, i32) {
    %c0_i32 = arith.constant 0 : i32
    %c0_i32_0 = arith.constant 0 : i32
    %c0_i32_1 = arith.constant 0 : i32
    return %c0_i32, %c0_i32_0 : i32, i32
  }
  func.func @transform_3(%arg0: i32) -> (i32, i32) {
    %c0_i32 = arith.constant 0 : i32
    %c0_i32_0 = arith.constant 0 : i32
    %c0_i32_1 = arith.constant 0 : i32
    return %c0_i32, %c0_i32_0 : i32, i32
  }
  func.func @transform_4(%arg0: i32) -> (i32, i32, i32) {
    %c0_i32 = arith.constant 0 : i32
    %c0_i32_0 = arith.constant 0 : i32
    %c0_i32_1 = arith.constant 0 : i32
    %c0_i32_2 = arith.constant 0 : i32
    return %c0_i32, %c0_i32_0, %c0_i32_1 : i32, i32, i32
  }
  func.func @transform_5(%arg0: i32) -> (i32, i32) {
    %c0_i32 = arith.constant 0 : i32
    %c0_i32_0 = arith.constant 0 : i32
    %c0_i32_1 = arith.constant 0 : i32
    return %c0_i32, %c0_i32_0 : i32, i32
  }
  func.func @transform_6(%arg0: i32) -> (i32, i32, i32) {
    %c0_i32 = arith.constant 0 : i32
    %c0_i32_0 = arith.constant 0 : i32
    %c0_i32_1 = arith.constant 0 : i32
    return %arg0, %c0_i32, %c0_i32_0 : i32, i32, i32
  }
}

</mosaic_0001>

<llo_original>
// kernel: tpu_custom_call.1
$region0: #{tpu_custom_call.1}
  #allocation0 [shape = 'u32[]', space=smem, size = 0x4, offset = 0x4, fixed_abs, tag = 'smem constant byte address 0x4 - core index']
  #allocation1 [shape = 'u32[144,128]{1,0:T(1,128)}', space=vmem, size = 0x12000, scoped, tag = 'internal scratch']
  #allocation2 [shape = 'bf16[8,512]{1,0:T(8,128)(2,1)}', space=vmem, size = 0x2000, scoped, tag = 'scratch operand']
  #allocation3 [shape = 'f32[8,512]{1,0:T(8,128)}', space=vmem, size = 0x4000, scoped, tag = 'scratch operand']
  %s0 = inlined_call_operand.vmem [shape: f32[1,512], index: 0, kind: input, shape index: {}]
  %s1 = inlined_call_operand.vmem [shape: f32[2,8,512], index: 1, kind: input, shape index: {}]
  %s2 = inlined_call_operand.vmem [shape: bf16[8,8], index: 2, kind: input, shape index: {}]
  %s3 = inlined_call_operand.vmem [shape: f32[8,1], index: 3, kind: input, shape index: {}]
  %s4 = inlined_call_operand.vmem [shape: bf16[25,16,8], index: 4, kind: input, shape index: {}]
  %s5 = inlined_call_operand.vmem [shape: f32[16,1], index: 5, kind: input, shape index: {}]
  %s6 = inlined_call_operand.hbm [shape: f32[2,8,384], index: 6, kind: output, shape index: {}]
  %s7 = sld [smem:[#allocation0]]
  $region57: #{tpu_custom_call.1} parent=0
    _
  %s9 = ssub.s32 1, %s7
  %s10 = scalar_select 0, %s9, %s7
  $region1: #{tpu_custom_call.1} parent=0
    #allocation4 [shape = 'u8[24576]{0}', space=vmem, size = 0x6000, scoped, tag = 'output window, operand 0']
    #allocation5 [shape = 's32[2]{0}', space=sflag, size = 0x8, scoped, tag = 'scoped memory for tpu_custom_call.1']
    %11 = vsyncpa [#allocation5], 0
    %s12 = scalar_lea.sflag [#allocation5], 1
    %13 = vsyncpa %s12, 0
    loop: start=0, step=1, limit=4
    $region2: #{tpu_custom_call.1} parent=1 // loop_pre_header
      _
    $region3: #{tpu_custom_call.1} parent=1 // loop_header
      %s15 = sphi 0, %s19
      %p16 = scmp.ge.s32.totalorder %s15, 4
      %s23 = sphi 0, %s23
      %s25 = sphi 0, %s23
      %s26 = sphi 0, %s25
      %s40 = sphi 0, %s26
      %s46 = sphi 0, %s48
      %s49 = sphi 0, %s46
      %s50 = sphi 0, %s49
      %s66 = sphi 0, %s50
      %s70 = sphi 0, %s70
      %s72 = sphi 0, %s70
      %s73 = sphi 0, %s72
      %s87 = sphi 0, %s73
      %s91 = sphi 0, %s91
      %s93 = sphi 0, %s91
      %s94 = sphi 0, %s93
      %s108 = sphi 0, %s94
      %s112 = sphi 0, %s112
      %s114 = sphi 0, %s112
      %s115 = sphi 0, %s114
      %s129 = sphi 0, %s115
      %s133 = sphi 0, %s133
      %s135 = sphi 0, %s133
      %s136 = sphi 0, %s135
      %s150 = sphi 0, %s136
      %s156 = sphi 0, %s158
      %s159 = sphi 0, %s156
      %s160 = sphi 0, %s159
      %s176 = sphi 0, %s160
    $region4: #{tpu_custom_call.1} parent=1 // loop_header_branch
      %18 = sbr.rel (%p16) target = $region8
    $region5: #{tpu_custom_call.1} parent=1 // loop_body
      %s20 = ssub.s32 %s15, 1
      %s21 = ssub.s32 %s15, 2
      %s22 = sadd.s32 %s15, 1
      %s24 = sadd.s32 %s23, 1
      %p27 = scmp.eq.s32.totalorder %s15, 1
      %p28 = scmp.ne.s32.totalorder %s23, %s25
      %p29 = scmp.eq.s32.totalorder %s15, 0
      %p30 = por %p28, %p29
      %p31 = scmp.ne.s32.totalorder %s23, %s25
      %p32 = scmp.eq.s32.totalorder %s20, 1
      %p33 = por %p31, %p32
      %p34 = scmp.ne.s32.totalorder %s25, %s26
      %p35 = scmp.eq.s32.totalorder %s20, 0
      %p36 = por %p34, %p35
      %p37 = scmp.ne.s32.totalorder %s25, %s26
      %p38 = scmp.eq.s32.totalorder %s21, 1
      %p39 = por %p37, %p38
      %p41 = scmp.ne.s32.totalorder %s26, %s40
      %p42 = scmp.eq.s32.totalorder %s21, 0
      %p43 = por %p41, %p42
      %s44 = ssub.s32 %s15, %s22
      %p45 = scmp.eq.s32.totalorder %s44, 0
      %s47 = sadd.s32 %s46, 1
      %s48 = scalar_select %p45, %s46, %s47
      %p51 = pneg %p45
      %p52 = scmp.eq.s32.totalorder %s15, 1
      %p53 = por %p51, %p52
      %p54 = scmp.ne.s32.totalorder %s46, %s49
      %p55 = scmp.eq.s32.totalorder %s15, 0
      %p56 = por %p54, %p55
      %p57 = scmp.ne.s32.totalorder %s46, %s49
      %p58 = scmp.eq.s32.totalorder %s20, 1
      %p59 = por %p57, %p58
      %p60 = scmp.ne.s32.totalorder %s49, %s50
      %p61 = scmp.eq.s32.totalorder %s20, 0
      %p62 = por %p60, %p61
      %p63 = scmp.ne.s32.totalorder %s49, %s50
      %p64 = scmp.eq.s32.totalorder %s21, 1
      %p65 = por %p63, %p64
      %p67 = scmp.ne.s32.totalorder %s50, %s66
      %p68 = scmp.eq.s32.totalorder %s21, 0
      %p69 = por %p67, %p68
      %s71 = sadd.s32 %s70, 1
      %p74 = scmp.eq.s32.totalorder %s15, 1
      %p75 = scmp.ne.s32.totalorder %s70, %s72
      %p76 = scmp.eq.s32.totalorder %s15, 0
      %p77 = por %p75, %p76
      %p78 = scmp.ne.s32.totalorder %s70, %s72
      %p79 = scmp.eq.s32.totalorder %s20, 1
      %p80 = por %p78, %p79
      %p81 = scmp.ne.s32.totalorder %s72, %s73
      %p82 = scmp.eq.s32.totalorder %s20, 0
      %p83 = por %p81, %p82
      %p84 = scmp.ne.s32.totalorder %s72, %s73
      %p85 = scmp.eq.s32.totalorder %s21, 1
      %p86 = por %p84, %p85
      %p88 = scmp.ne.s32.totalorder %s73, %s87
      %p89 = scmp.eq.s32.totalorder %s21, 0
      %p90 = por %p88, %p89
      %s92 = sadd.s32 %s91, 1
      %p95 = scmp.eq.s32.totalorder %s15, 1
      %p96 = scmp.ne.s32.totalorder %s91, %s93
      %p97 = scmp.eq.s32.totalorder %s15, 0
      %p98 = por %p96, %p97
      %p99 = scmp.ne.s32.totalorder %s91, %s93
      %p100 = scmp.eq.s32.totalorder %s20, 1
      %p101 = por %p99, %p100
      %p102 = scmp.ne.s32.totalorder %s93, %s94
      %p103 = scmp.eq.s32.totalorder %s20, 0
      %p104 = por %p102, %p103
      %p105 = scmp.ne.s32.totalorder %s93, %s94
      %p106 = scmp.eq.s32.totalorder %s21, 1
      %p107 = por %p105, %p106
      %p109 = scmp.ne.s32.totalorder %s94, %s108
      %p110 = scmp.eq.s32.totalorder %s21, 0
      %p111 = por %p109, %p110
      %s113 = sadd.s32 %s112, 1
      %p116 = scmp.eq.s32.totalorder %s15, 1
      %p117 = scmp.ne.s32.totalorder %s112, %s114
      %p118 = scmp.eq.s32.totalorder %s15, 0
      %p119 = por %p117, %p118
      %p120 = scmp.ne.s32.totalorder %s112, %s114
      %p121 = scmp.eq.s32.totalorder %s20, 1
      %p122 = por %p120, %p121
      %p123 = scmp.ne.s32.totalorder %s114, %s115
      %p124 = scmp.eq.s32.totalorder %s20, 0
      %p125 = por %p123, %p124
      %p126 = scmp.ne.s32.totalorder %s114, %s115
      %p127 = scmp.eq.s32.totalorder %s21, 1
      %p128 = por %p126, %p127
      %p130 = scmp.ne.s32.totalorder %s115, %s129
      %p131 = scmp.eq.s32.totalorder %s21, 0
      %p132 = por %p130, %p131
      %s134 = sadd.s32 %s133, 1
      %p137 = scmp.eq.s32.totalorder %s15, 1
      %p138 = scmp.ne.s32.totalorder %s133, %s135
      %p139 = scmp.eq.s32.totalorder %s15, 0
      %p140 = por %p138, %p139
      %p141 = scmp.ne.s32.totalorder %s133, %s135
      %p142 = scmp.eq.s32.totalorder %s20, 1
      %p143 = por %p141, %p142
      %p144 = scmp.ne.s32.totalorder %s135, %s136
      %p145 = scmp.eq.s32.totalorder %s20, 0
      %p146 = por %p144, %p145
      %p147 = scmp.ne.s32.totalorder %s135, %s136
      %p148 = scmp.eq.s32.totalorder %s21, 1
      %p149 = por %p147, %p148
      %p151 = scmp.ne.s32.totalorder %s136, %s150
      %p152 = scmp.eq.s32.totalorder %s21, 0
      %p153 = por %p151, %p152
      %s154 = ssub.s32 %s15, %s22
      %p155 = scmp.eq.s32.totalorder %s154, 0
      %s157 = sadd.s32 %s156, 1
      %s158 = scalar_select %p155, %s156, %s157
      %p161 = pneg %p155
      %p162 = scmp.eq.s32.totalorder %s15, 1
      %p163 = por %p161, %p162
      %p164 = scmp.ne.s32.totalorder %s156, %s159
      %p165 = scmp.eq.s32.totalorder %s15, 0
      %p166 = por %p164, %p165
      %p167 = scmp.ne.s32.totalorder %s156, %s159
      %p168 = scmp.eq.s32.totalorder %s20, 1
      %p169 = por %p167, %p168
      %p170 = scmp.ne.s32.totalorder %s159, %s160
      %p171 = scmp.eq.s32.totalorder %s20, 0
      %p172 = por %p170, %p171
      %p173 = scmp.ne.s32.totalorder %s159, %s160
      %p174 = scmp.eq.s32.totalorder %s21, 1
      %p175 = por %p173, %p174
      %p177 = scmp.ne.s32.totalorder %s160, %s176
      %p178 = scmp.eq.s32.totalorder %s21, 0
      %p179 = por %p177, %p178
      %p180 = scmp.le.s32.totalorder 1, %s15
      %p181 = scmp.lt.s32.totalorder %s15, 3
      %p182 = pnand %p180, %p181
      %p183 = pneg %p182
      // Predicated region
      $region9: #{tpu_custom_call.1} parent=5 // pred_check
        _
      $region10: #{tpu_custom_call.1} parent=5 // pred_check_branch
        %185 = sbr.rel (%p182) target = $region12
      $region11: #{tpu_custom_call.1} parent=5 // pred_region
        %s186 = ssub.s32 %s15, 1
        // Predicated region
        $region13: #{tpu_custom_call.1} parent=11 // pred_check
          %p187 = pneg %p36
        $region14: #{tpu_custom_call.1} parent=11 // pred_check_branch
          %189 = sbr.rel (%p187) target = $region16
        $region15: #{tpu_custom_call.1} parent=11 // pred_region
          _
        $region16: #{tpu_custom_call.1} parent=11 // pred_fallthru
          _
        // Predicated region
        $region17: #{tpu_custom_call.1} parent=11 // pred_check
          %p190 = pneg %p83
        $region18: #{tpu_custom_call.1} parent=11 // pred_check_branch
          %192 = sbr.rel (%p190) target = $region20
        $region19: #{tpu_custom_call.1} parent=11 // pred_region
          _
        $region20: #{tpu_custom_call.1} parent=11 // pred_fallthru
          _
        // Predicated region
        $region21: #{tpu_custom_call.1} parent=11 // pred_check
          %p193 = pneg %p104
        $region22: #{tpu_custom_call.1} parent=11 // pred_check_branch
          %195 = sbr.rel (%p193) target = $region24
        $region23: #{tpu_custom_call.1} parent=11 // pred_region
          _
        $region24: #{tpu_custom_call.1} parent=11 // pred_fallthru
          _
        // Predicated region
        $region25: #{tpu_custom_call.1} parent=11 // pred_check
          %p196 = pneg %p125
        $region26: #{tpu_custom_call.1} parent=11 // pred_check_branch
          %198 = sbr.rel (%p196) target = $region28
        $region27: #{tpu_custom_call.1} parent=11 // pred_region
          _
        $region28: #{tpu_custom_call.1} parent=11 // pred_fallthru
          _
        // Predicated region
        $region29: #{tpu_custom_call.1} parent=11 // pred_check
          %p199 = pneg %p146
        $region30: #{tpu_custom_call.1} parent=11 // pred_check_branch
          %201 = sbr.rel (%p199) target = $region32
        $region31: #{tpu_custom_call.1} parent=11 // pred_region
          _
        $region32: #{tpu_custom_call.1} parent=11 // pred_fallthru
          _
      $region12: #{tpu_custom_call.1} parent=5 // pred_fallthru
        _
      %p202 = scmp.lt.s32.totalorder %s15, 2
      // Predicated region
      $region33: #{tpu_custom_call.1} parent=5 // pred_check
        %p203 = pneg %p202
      $region34: #{tpu_custom_call.1} parent=5 // pred_check_branch
        %205 = sbr.rel (%p203) target = $region36
      $region35: #{tpu_custom_call.1} parent=5 // pred_region
        // Predicated region
        $region37: #{tpu_custom_call.1} parent=35 // pred_check
          %p206 = pneg %p56
        $region38: #{tpu_custom_call.1} parent=35 // pred_check_branch
          %208 = sbr.rel (%p206) target = $region40
        $region39: #{tpu_custom_call.1} parent=35 // pred_region
          %p209 = scmp.lt.s32.totalorder %s15, 1
          %s210 = scalar_select %p209, %s15, 1
          %s211 = smul.addr %s210, 4
          %s212 = smul.addr %s211, 8
          %s213 = scalar_lea.vmem %s1, %s212
        $region40: #{tpu_custom_call.1} parent=35 // pred_fallthru
          _
      $region36: #{tpu_custom_call.1} parent=5 // pred_fallthru
        _
      %p214 = scmp.le.s32.totalorder 1, %s15
      %p215 = scmp.lt.s32.totalorder %s15, 3
      %p216 = pnand %p214, %p215
      %p217 = pneg %p216
      // Predicated region
      $region41: #{tpu_custom_call.1} parent=5 // pred_check
        _
      $region42: #{tpu_custom_call.1} parent=5 // pred_check_branch
        %219 = sbr.rel (%p216) target = $region44
      $region43: #{tpu_custom_call.1} parent=5 // pred_region
        %s220 = ssub.s32 %s15, 1
        %p221 = pneg %p36
        %p222 = pneg %p33
        %p223 = scmp.lt.s32.totalorder %s20, 1
        %s224 = scalar_select %p223, %s20, 1
        %s225 = smul.addr %s224, 4
        %s226 = smul.addr %s225, 8
        %s227 = scalar_lea.vmem %s1, %s226
        %p228 = pneg %p62
        %p229 = pneg %p59
        %p230 = pneg %p83
        %p231 = pneg %p80
        %p232 = pneg %p104
        %p233 = pneg %p101
        %p234 = pneg %p125
        %p235 = pneg %p122
        %p236 = pneg %p146
        %p237 = pneg %p143
        %p238 = pneg %p172
        %p239 = pneg %p169
        %s240 = sand.u32 %s159, 1
        %s241 = scalar_lea.sflag [#allocation5], %s240
        %s242 = sand.u32 %s159, 1
        %s243 = smul.addr %s242, 24
        %s244 = scalar_lea.vmem [#allocation4], %s243
        %p245 = scmp.lt.s32.totalorder %s20, 1
        %s246 = scalar_select %p245, %s20, 1
        %s247 = smul.addr %s246, 4
        %s248 = smul.addr %s247, 8
        %s249 = scalar_lea.vmem %s1, %s248
        %v251 = vld [vmem:[%s0] sm:$0xf]
        %v252 = vld [vmem:[%s249] sm:$0xff]
        %v253 = vld [vmem:[%s249 + $0x8] sm:$0xff]
        %v254 = vld [vmem:[%s249 + $0x10] sm:$0xff]
        %v255 = vld [vmem:[%s249 + $0x18] sm:$0xff]
        %v256 = vld [vmem:[%s2] sm:$0xf]
        %v257 = vpack.c.bf16 %v252, %v252
        %v258 = vpack.c.bf16 %v253, %v253
        %v259 = vpack.c.bf16 %v254, %v254
        %v260 = vpack.c.bf16 %v255, %v255
        %v261 = vld [vmem:[%s3] sm:$0xff]
        %263 = vset.pattern.permute.xlu0 0
        %264 = vperm.xlu0 %263, %v261
        %v265 = vpop.permute.xlu0 %264
        %vm267 = vcmask 64512
        %v269 = vsel %vm267, %v256, 0
        %vm271 = vcmask 1043456
        %v273 = vsel %vm271, %v257, 0
        %v276 = vsel %vm271, %v258, 0
        %v279 = vsel %vm271, %v259, 0
        %v282 = vsel %vm271, %v260, 0
        %284 = vmatprep.subr.bf16.mxu0 %v276
        %285 = vmatpush1.bf16.msra.mxu0 %v273
        %286 = vmatprep.subr.bf16.mxu0 0
        %287 = vmatpush1.bf16.msra.mxu0 0
        %288 = vmatprep.subr.bf16.mxu0 0
        %289 = vmatpush1.bf16.msra.mxu0 0
        %290 = vmatprep.subr.bf16.mxu0 0
        %291 = vmatpush1.bf16.msra.mxu0 0
        %292 = vmatprep.subr.bf16.mxu0 0
        %293 = vmatpush1.bf16.msra.mxu0 0
        %294 = vmatprep.subr.bf16.mxu0 0
        %295 = vmatpush1.bf16.msra.mxu0 0
        %296 = vmatprep.subr.bf16.mxu0 0
        %297 = vmatpush1.bf16.msra.mxu0 0
        %298 = vmatprep.subr.bf16.mxu0 0
        %299 = vmatpush1.bf16.msra.mxu0 0
        %300 = vmatprep.subr.bf16.mxu0 0
        %301 = vmatpush1.bf16.msra.mxu0 0
        %302 = vmatprep.subr.bf16.mxu0 0
        %303 = vmatpush1.bf16.msra.mxu0 0
        %304 = vmatprep.subr.bf16.mxu0 0
        %305 = vmatpush1.bf16.msra.mxu0 0
        %306 = vmatprep.subr.bf16.mxu0 0
        %307 = vmatpush1.bf16.msra.mxu0 0
        %308 = vmatprep.subr.bf16.mxu0 0
        %309 = vmatpush1.bf16.msra.mxu0 0
        %310 = vmatprep.subr.bf16.mxu0 0
        %311 = vmatpush1.bf16.msra.mxu0 0
        %312 = vmatprep.subr.bf16.mxu0 0
        %313 = vmatpush1.bf16.msra.mxu0 0
        %314 = vmatprep.subr.bf16.mxu0 0
        %315 = vmatpush1.bf16.msra.mxu0 0
        %316 = vmatprep.mubr.bf16.mxu0 0
        %317 = vmatmul.mubr.bf16.gmra.mrb[0].mxu0 %v269
        %v318 = vpop.f32.mrb[0].mxu0
        %v319 = vadd.f32 %v265, %v318
        %v320 = vpop.f32.mrb[0].mxu0
        %v321 = vadd.f32 %v265, %v320
        %v322 = vpop.f32.mrb[0].mxu0
        %v323 = vpop.f32.mrb[0].mxu0
        %324 = vdwg.mxu0
        %325 = vmatprep.subr.bf16.mxu0 %v282
        %326 = vmatpush1.bf16.msra.mxu0 %v279
        %327 = vmatprep.subr.bf16.mxu0 0
        %328 = vmatpush1.bf16.msra.mxu0 0
        %329 = vmatprep.subr.bf16.mxu0 0
        %330 = vmatpush1.bf16.msra.mxu0 0
        %331 = vmatprep.subr.bf16.mxu0 0
        %332 = vmatpush1.bf16.msra.mxu0 0
        %333 = vmatprep.subr.bf16.mxu0 0
        %334 = vmatpush1.bf16.msra.mxu0 0
        %335 = vmatprep.subr.bf16.mxu0 0
        %336 = vmatpush1.bf16.msra.mxu0 0
        %337 = vmatprep.subr.bf16.mxu0 0
        %338 = vmatpush1.bf16.msra.mxu0 0
        %339 = vmatprep.subr.bf16.mxu0 0
        %340 = vmatpush1.bf16.msra.mxu0 0
        %341 = vmatprep.subr.bf16.mxu0 0
        %342 = vmatpush1.bf16.msra.mxu0 0
        %343 = vmatprep.subr.bf16.mxu0 0
        %344 = vmatpush1.bf16.msra.mxu0 0
        %345 = vmatprep.subr.bf16.mxu0 0
        %346 = vmatpush1.bf16.msra.mxu0 0
        %347 = vmatprep.subr.bf16.mxu0 0
        %348 = vmatpush1.bf16.msra.mxu0 0
        %349 = vmatprep.subr.bf16.mxu0 0
        %350 = vmatpush1.bf16.msra.mxu0 0
        %351 = vmatprep.subr.bf16.mxu0 0
        %352 = vmatpush1.bf16.msra.mxu0 0
        %353 = vmatprep.subr.bf16.mxu0 0
        %354 = vmatpush1.bf16.msra.mxu0 0
        %355 = vmatprep.subr.bf16.mxu0 0
        %356 = vmatpush1.bf16.msra.mxu0 0
        %357 = vmatprep.mubr.bf16.mxu0 0
        %358 = vmatmul.mubr.bf16.gmra.mrb[0].mxu0 %v269
        %v359 = vpop.f32.mrb[0].mxu0
        %v360 = vadd.f32 %v265, %v359
        %v361 = vpop.f32.mrb[0].mxu0
        %v362 = vadd.f32 %v265, %v361
        %v363 = vpop.f32.mrb[0].mxu0
        %v364 = vpop.f32.mrb[0].mxu0
        %365 = vdwg.mxu0
        %v367 = vlaneseq
        %v368 = vshrl.u32 %v367, 7
        %v369 = vsub.s32 0, %v368
        %v370 = vrot.slane %v251, %v369
        %v371 = vlaneseq
        %v372 = vshrl.u32 %v371, 7
        %v373 = vsub.s32 1, %v372
        %v374 = vrot.slane %v251, %v373
        %v375 = vlaneseq
        %v376 = vshrl.u32 %v375, 7
        %v377 = vsub.s32 2, %v376
        %v378 = vrot.slane %v251, %v377
        %v379 = vlaneseq
        %v380 = vshrl.u32 %v379, 7
        %v381 = vsub.s32 3, %v380
        %v382 = vrot.slane %v251, %v381
        %v387 = vmul.f32 %v319, %v370
        %v388 = vmul.f32 %v321, %v374
        %v389 = vmul.f32 %v360, %v378
        %v390 = vmul.f32 %v362, %v382
        %v391 = vpack.c.bf16 %v387, %v387
        %v392 = vpack.c.bf16 %v388, %v388
        %v393 = vpack.c.bf16 %v389, %v389
        %v394 = vpack.c.bf16 %v390, %v390
        %v399 = vunpack.c.l.b16 %v391
        %v400 = vunpack.c.l.b16 %v392
        %v401 = vunpack.c.l.b16 %v393
        %v402 = vunpack.c.l.b16 %v394
        %v403 = vpack.c.b16 %v400, %v399
        %v404 = vpack.c.b16 %v402, %v401
        %407 = vst [vmem:[#allocation2] sm:$0xff] %v403
        %408 = vst [vmem:[#allocation2 + $0x8] sm:$0xff] %v404
        %vm409 = vcmp.gt.f32.partialorder %v251, 0.5
        %v410 = vsel %vm409, 1, 0
        %v411 = vlaneseq
        %v412 = vshrl.u32 %v411, 7
        %v413 = vsub.s32 0, %v412
        %v414 = vrot.slane %v410, %v413
        %v415 = vlaneseq
        %v416 = vshrl.u32 %v415, 7
        %v417 = vsub.s32 1, %v416
        %v418 = vrot.slane %v410, %v417
        %v419 = vlaneseq
        %v420 = vshrl.u32 %v419, 7
        %v421 = vsub.s32 2, %v420
        %v422 = vrot.slane %v410, %v421
        %v423 = vlaneseq
        %v424 = vshrl.u32 %v423, 7
        %v425 = vsub.s32 3, %v424
        %v426 = vrot.slane %v410, %v425
        %vm427 = vcmp.eq.s32.totalorder %v414, 1
        %vm428 = vcmp.eq.s32.totalorder %v418, 1
        %vm429 = vcmp.eq.s32.totalorder %v422, 1
        %vm430 = vcmp.eq.s32.totalorder %v426, 1
        %v431 = vsel %vm427, %v252, -1e+30
        %v432 = vsel %vm428, %v253, -1e+30
        %v433 = vsel %vm429, %v254, -1e+30
        %v434 = vsel %vm430, %v255, -1e+30
        %435 = vst [vmem:[#allocation3] sm:$0xff] %v431
        %436 = vst [vmem:[#allocation3 + $0x8] sm:$0xff] %v432
        %437 = vst [vmem:[#allocation3 + $0x10] sm:$0xff] %v433
        %438 = vst [vmem:[#allocation3 + $0x18] sm:$0xff] %v434
        %v439 = vld [vmem:[#allocation2] sm:$0xff]
        %v440 = vld [vmem:[#allocation2 + $0x8] sm:$0xff]
        %v441 = vunpack.c.l.bf16 %v439
        %v442 = vunpack.c.h.bf16 %v439
        %v443 = vunpack.c.l.bf16 %v440
        %v444 = vunpack.c.h.bf16 %v440
        %v445 = vmax.f32 %v441, 0.0
        %v446 = vmax.f32 %v442, 0.0
        %v447 = vmax.f32 %v443, 0.0
        %v448 = vmax.f32 %v444, 0.0
        %v449 = vld [vmem:[%s5] sm:$0xff]
        %v450 = vld [vmem:[%s5 + $0x8] sm:$0xff]
        %452 = vset.pattern.permute.xlu0 0
        %453 = vperm.xlu0 %452, %v449
        %v454 = vpop.permute.xlu0 %453
        %457 = vset.pattern.permute.xlu0 0
        %458 = vperm.xlu0 %457, %v450
        %v459 = vpop.permute.xlu0 %458
        %v461 = vld [vmem:[%s4] sm:$0xf]
        %v462 = vld [vmem:[%s4 + $0x4] sm:$0xf]
        %v463 = vld [vmem:[#allocation2] sm:$0xff]
        %v464 = vld [vmem:[#allocation2 + $0x8] sm:$0xf]
        %v467 = vunpack.c.l.b16 %v461
        %v468 = vunpack.c.l.b16 %v462
        %v469 = vpack.c.b16 %v468, %v467
        %v472 = vunpack.c.l.b16 %v463
        %v473 = vunpack.c.h.b16 %v463
        %v474 = vunpack.c.l.b16 %v464
        %v475 = vpack.c.b16 %v472, %v472
        %v476 = vpack.c.b16 %v473, %v473
        %v477 = vpack.c.b16 %v474, %v474
        %v479 = vsel %vm267, %v469, 0
        %v482 = vsel %vm271, %v475, 0
        %v485 = vsel %vm271, %v476, 0
        %v488 = vsel %vm271, %v477, 0
        %490 = vmatprep.subr.bf16.mxu0 %v485
        %491 = vmatpush1.bf16.msra.mxu0 %v482
        %492 = vmatprep.subr.bf16.mxu0 0
        %493 = vmatpush1.bf16.msra.mxu0 0
        %494 = vmatprep.subr.bf16.mxu0 0
        %495 = vmatpush1.bf16.msra.mxu0 0
        %496 = vmatprep.subr.bf16.mxu0 0
        %497 = vmatpush1.bf16.msra.mxu0 0
        %498 = vmatprep.subr.bf16.mxu0 0
        %499 = vmatpush1.bf16.msra.mxu0 0
        %500 = vmatprep.subr.bf16.mxu0 0
        %501 = vmatpush1.bf16.msra.mxu0 0
        %502 = vmatprep.subr.bf16.mxu0 0
        %503 = vmatpush1.bf16.msra.mxu0 0
        %504 = vmatprep.subr.bf16.mxu0 0
        %505 = vmatpush1.bf16.msra.mxu0 0
        %506 = vmatprep.subr.bf16.mxu0 0
        %507 = vmatpush1.bf16.msra.mxu0 0
        %508 = vmatprep.subr.bf16.mxu0 0
        %509 = vmatpush1.bf16.msra.mxu0 0
        %510 = vmatprep.subr.bf16.mxu0 0
        %511 = vmatpush1.bf16.msra.mxu0 0
        %512 = vmatprep.subr.bf16.mxu0 0
        %513 = vmatpush1.bf16.msra.mxu0 0
        %514 = vmatprep.subr.bf16.mxu0 0
        %515 = vmatpush1.bf16.msra.mxu0 0
        %516 = vmatprep.subr.bf16.mxu0 0
        %517 = vmatpush1.bf16.msra.mxu0 0
        %518 = vmatprep.subr.bf16.mxu0 0
        %519 = vmatpush1.bf16.msra.mxu0 0
        %520 = vmatprep.subr.bf16.mxu0 0
        %521 = vmatpush1.bf16.msra.mxu0 0
        %522 = vmatprep.mubr.bf16.mxu0 0
        %523 = vmatmul.mubr.bf16.gmra.mrb[0].mxu0 %v479
        %v524 = vpop.f32.mrb[0].mxu0
        %v525 = vadd.f32 0.0, %v524
        %v526 = vpop.f32.mrb[0].mxu0
        %v527 = vadd.f32 0.0, %v526
        %v528 = vpop.f32.mrb[0].mxu0
        %v529 = vadd.f32 0.0, %v528
        %v530 = vpop.f32.mrb[0].mxu0
        %v531 = vadd.f32 0.0, %v530
        %532 = vdwg.mxu0
        %533 = vmatprep.subr.bf16.mxu0 0
        %534 = vmatpush1.bf16.msra.mxu0 %v488
        %535 = vmatprep.subr.bf16.mxu0 0
        %536 = vmatpush1.bf16.msra.mxu0 0
        %537 = vmatprep.subr.bf16.mxu0 0
        %538 = vmatpush1.bf16.msra.mxu0 0
        %539 = vmatprep.subr.bf16.mxu0 0
        %540 = vmatpush1.bf16.msra.mxu0 0
        %541 = vmatprep.subr.bf16.mxu0 0
        %542 = vmatpush1.bf16.msra.mxu0 0
        %543 = vmatprep.subr.bf16.mxu0 0
        %544 = vmatpush1.bf16.msra.mxu0 0
        %545 = vmatprep.subr.bf16.mxu0 0
        %546 = vmatpush1.bf16.msra.mxu0 0
        %547 = vmatprep.subr.bf16.mxu0 0
        %548 = vmatpush1.bf16.msra.mxu0 0
        %549 = vmatprep.subr.bf16.mxu0 0
        %550 = vmatpush1.bf16.msra.mxu0 0
        %551 = vmatprep.subr.bf16.mxu0 0
        %552 = vmatpush1.bf16.msra.mxu0 0
        %553 = vmatprep.subr.bf16.mxu0 0
        %554 = vmatpush1.bf16.msra.mxu0 0
        %555 = vmatprep.subr.bf16.mxu0 0
        %556 = vmatpush1.bf16.msra.mxu0 0
        %557 = vmatprep.subr.bf16.mxu0 0
        %558 = vmatpush1.bf16.msra.mxu0 0
        %559 = vmatprep.subr.bf16.mxu0 0
        %560 = vmatpush1.bf16.msra.mxu0 0
        %561 = vmatprep.subr.bf16.mxu0 0
        %562 = vmatpush1.bf16.msra.mxu0 0
        %563 = vmatprep.subr.bf16.mxu0 0
        %564 = vmatpush1.bf16.msra.mxu0 0
        %565 = vmatprep.mubr.bf16.mxu0 0
        %566 = vmatmul.mubr.bf16.gmra.mrb[0].mxu0 %v479
        %v567 = vpop.f32.mrb[0].mxu0
        %v568 = vadd.f32 0.0, %v567
        %v569 = vpop.f32.mrb[0].mxu0
        %v570 = vpop.f32.mrb[0].mxu0
        %v571 = vadd.f32 0.0, %v570
        %v572 = vpop.f32.mrb[0].mxu0
        %573 = vdwg.mxu0
        %v574 = vadd.f32 %v454, %v525
        %v575 = vadd.f32 %v454, %v527
        %v576 = vadd.f32 %v454, %v568
        %v577 = vadd.f32 %v459, %v529
        %v578 = vadd.f32 %v459, %v531
        %v579 = vadd.f32 %v459, %v571
        %s580 = scalar_lea.vmem %s4, 8
        %v581 = vld [vmem:[%s580] sm:$0xf]
        %v582 = vld [vmem:[%s580 + $0x4] sm:$0xf]
        %v585 = vunpack.c.l.b16 %v581
        %v586 = vunpack.c.l.b16 %v582
        %v587 = vpack.c.b16 %v586, %v585
        %v590 = vunpack.c.l.b16 %v439
        %v591 = vunpack.c.h.b16 %v439
        %v592 = vunpack.c.l.b16 %v440
        %v593 = vunpack.c.h.b16 %v440
        %v594 = vpack.c.b16 %v590, %v590
        %v595 = vpack.c.b16 %v591, %v591
        %v596 = vpack.c.b16 %v592, %v592
        %v597 = vpack.c.b16 %v593, %v593
        %598 = vrot.lane.b32.xlu0 %v594, 127
        %v599 = vpop.permute.xlu0 %598
        %600 = vrot.lane.b32.xlu0 %v595, 127
        %v601 = vpop.permute.xlu0 %600
        %602 = vrot.lane.b32.xlu0 %v596, 127
        %v603 = vpop.permute.xlu0 %602
        %604 = vrot.lane.b32.xlu0 %v597, 127
        %v605 = vpop.permute.xlu0 %604
        %vm606 = vcmask 1039360
        %v607 = vsel %vm606, %v599, %v601
        %v608 = vsel %vm606, %v601, %v603
        %v609 = vsel %vm606, %v603, %v605
        %v611 = vsel %vm267, %v587, 0
        %v614 = vsel %vm271, %v607, 0
        %v617 = vsel %vm271, %v608, 0
        %v620 = vsel %vm271, %v609, 0
        %622 = vmatprep.subr.bf16.mxu0 %v617
        %623 = vmatpush1.bf16.msra.mxu0 %v614
        %624 = vmatprep.subr.bf16.mxu0 0
        %625 = vmatpush1.bf16.msra.mxu0 0
        %626 = vmatprep.subr.bf16.mxu0 0
        %627 = vmatpush1.bf16.msra.mxu0 0
        %628 = vmatprep.subr.bf16.mxu0 0
        %629 = vmatpush1.bf16.msra.mxu0 0
        %630 = vmatprep.subr.bf16.mxu0 0
        %631 = vmatpush1.bf16.msra.mxu0 0
        %632 = vmatprep.subr.bf16.mxu0 0
        %633 = vmatpush1.bf16.msra.mxu0 0
        %634 = vmatprep.subr.bf16.mxu0 0
        %635 = vmatpush1.bf16.msra.mxu0 0
        %636 = vmatprep.subr.bf16.mxu0 0
        %637 = vmatpush1.bf16.msra.mxu0 0
        %638 = vmatprep.subr.bf16.mxu0 0
        %639 = vmatpush1.bf16.msra.mxu0 0
        %640 = vmatprep.subr.bf16.mxu0 0
        %641 = vmatpush1.bf16.msra.mxu0 0
        %642 = vmatprep.subr.bf16.mxu0 0
        %643 = vmatpush1.bf16.msra.mxu0 0
        %644 = vmatprep.subr.bf16.mxu0 0
        %645 = vmatpush1.bf16.msra.mxu0 0
        %646 = vmatprep.subr.bf16.mxu0 0
        %647 = vmatpush1.bf16.msra.mxu0 0
        %648 = vmatprep.subr.bf16.mxu0 0
        %649 = vmatpush1.bf16.msra.mxu0 0
        %650 = vmatprep.subr.bf16.mxu0 0
        %651 = vmatpush1.bf16.msra.mxu0 0
        %652 = vmatprep.subr.bf16.mxu0 0
        %653 = vmatpush1.bf16.msra.mxu0 0
        %654 = vmatprep.mubr.bf16.mxu0 0
        %655 = vmatmul.mubr.bf16.gmra.mrb[0].mxu0 %v611
        %v656 = vpop.f32.mrb[0].mxu0
        %v657 = vadd.f32 0.0, %v656
        %v658 = vpop.f32.mrb[0].mxu0
        %v659 = vadd.f32 0.0, %v658
        %v660 = vpop.f32.mrb[0].mxu0
        %v661 = vadd.f32 0.0, %v660
        %v662 = vpop.f32.mrb[0].mxu0
        %v663 = vadd.f32 0.0, %v662
        %664 = vdwg.mxu0
        %665 = vmatprep.subr.bf16.mxu0 0
        %666 = vmatpush1.bf16.msra.mxu0 %v620
        %667 = vmatprep.subr.bf16.mxu0 0
        %668 = vmatpush1.bf16.msra.mxu0 0
        %669 = vmatprep.subr.bf16.mxu0 0
        %670 = vmatpush1.bf16.msra.mxu0 0
        %671 = vmatprep.subr.bf16.mxu0 0
        %672 = vmatpush1.bf16.msra.mxu0 0
        %673 = vmatprep.subr.bf16.mxu0 0
        %674 = vmatpush1.bf16.msra.mxu0 0
        %675 = vmatprep.subr.bf16.mxu0 0
        %676 = vmatpush1.bf16.msra.mxu0 0
        %677 = vmatprep.subr.bf16.mxu0 0
        %678 = vmatpush1.bf16.msra.mxu0 0
        %679 = vmatprep.subr.bf16.mxu0 0
        %680 = vmatpush1.bf16.msra.mxu0 0
        %681 = vmatprep.subr.bf16.mxu0 0
        %682 = vmatpush1.bf16.msra.mxu0 0
        %683 = vmatprep.subr.bf16.mxu0 0
        %684 = vmatpush1.bf16.msra.mxu0 0
        %685 = vmatprep.subr.bf16.mxu0 0
        %686 = vmatpush1.bf16.msra.mxu0 0
        %687 = vmatprep.subr.bf16.mxu0 0
        %688 = vmatpush1.bf16.msra.mxu0 0
        %689 = vmatprep.subr.bf16.mxu0 0
        %690 = vmatpush1.bf16.msra.mxu0 0
        %691 = vmatprep.subr.bf16.mxu0 0
        %692 = vmatpush1.bf16.msra.mxu0 0
        %693 = vmatprep.subr.bf16.mxu0 0
        %694 = vmatpush1.bf16.msra.mxu0 0
        %695 = vmatprep.subr.bf16.mxu0 0
        %696 = vmatpush1.bf16.msra.mxu0 0
        %697 = vmatprep.mubr.bf16.mxu0 0
        %698 = vmatmul.mubr.bf16.gmra.mrb[0].mxu0 %v611
        %v699 = vpop.f32.mrb[0].mxu0
        %v700 = vadd.f32 0.0, %v699
        %v701 = vpop.f32.mrb[0].mxu0
        %v702 = vpop.f32.mrb[0].mxu0
        %v703 = vadd.f32 0.0, %v702
        %v704 = vpop.f32.mrb[0].mxu0
        %705 = vdwg.mxu0
        %v706 = vadd.f32 %v574, %v657
        %v707 = vadd.f32 %v575, %v659
        %v708 = vadd.f32 %v576, %v700
        %v709 = vadd.f32 %v577, %v661
        %v710 = vadd.f32 %v578, %v663
        %v711 = vadd.f32 %v579, %v703
        %s712 = scalar_lea.vmem %s4, 16
        %v713 = vld [vmem:[%s712] sm:$0xf]
        %v714 = vld [vmem:[%s712 + $0x4] sm:$0xf]
        %v717 = vunpack.c.l.b16 %v713
        %v718 = vunpack.c.l.b16 %v714
        %v719 = vpack.c.b16 %v718, %v717
        %720 = vrot.lane.b32.xlu0 %v594, 126
        %v721 = vpop.permute.xlu0 %720
        %722 = vrot.lane.b32.xlu0 %v595, 126
        %v723 = vpop.permute.xlu0 %722
        %724 = vrot.lane.b32.xlu0 %v596, 126
        %v725 = vpop.permute.xlu0 %724
        %726 = vrot.lane.b32.xlu0 %v597, 126
        %v727 = vpop.permute.xlu0 %726
        %vm728 = vcmask 1031168
        %v729 = vsel %vm728, %v721, %v723
        %v730 = vsel %vm728, %v723, %v725
        %v731 = vsel %vm728, %v725, %v727
        %v733 = vsel %vm267, %v719, 0
        %v736 = vsel %vm271, %v729, 0
        %v739 = vsel %vm271, %v730, 0
        %v742 = vsel %vm271, %v731, 0
        %744 = vmatprep.subr.bf16.mxu0 %v739
        %745 = vmatpush1.bf16.msra.mxu0 %v736
        %746 = vmatprep.subr.bf16.mxu0 0
        %747 = vmatpush1.bf16.msra.mxu0 0
        %748 = vmatprep.subr.bf16.mxu0 0
        %749 = vmatpush1.bf16.msra.mxu0 0
        %750 = vmatprep.subr.bf16.mxu0 0
        %751 = vmatpush1.bf16.msra.mxu0 0
        %752 = vmatprep.subr.bf16.mxu0 0
        %753 = vmatpush1.bf16.msra.mxu0 0
        %754 = vmatprep.subr.bf16.mxu0 0
        %755 = vmatpush1.bf16.msra.mxu0 0
        %756 = vmatprep.subr.bf16.mxu0 0
        %757 = vmatpush1.bf16.msra.mxu0 0
        %758 = vmatprep.subr.bf16.mxu0 0
        %759 = vmatpush1.bf16.msra.mxu0 0
        %760 = vmatprep.subr.bf16.mxu0 0
        %761 = vmatpush1.bf16.msra.mxu0 0
        %762 = vmatprep.subr.bf16.mxu0 0
        %763 = vmatpush1.bf16.msra.mxu0 0
        %764 = vmatprep.subr.bf16.mxu0 0
        %765 = vmatpush1.bf16.msra.mxu0 0
        %766 = vmatprep.subr.bf16.mxu0 0
        %767 = vmatpush1.bf16.msra.mxu0 0
        %768 = vmatprep.subr.bf16.mxu0 0
        %769 = vmatpush1.bf16.msra.mxu0 0
        %770 = vmatprep.subr.bf16.mxu0 0
        %771 = vmatpush1.bf16.msra.mxu0 0
        %772 = vmatprep.subr.bf16.mxu0 0
        %773 = vmatpush1.bf16.msra.mxu0 0
        %774 = vmatprep.subr.bf16.mxu0 0
        %775 = vmatpush1.bf16.msra.mxu0 0
        %776 = vmatprep.mubr.bf16.mxu0 0
        %777 = vmatmul.mubr.bf16.gmra.mrb[0].mxu0 %v733
        %v778 = vpop.f32.mrb[0].mxu0
        %v779 = vadd.f32 0.0, %v778
        %v780 = vpop.f32.mrb[0].mxu0
        %v781 = vadd.f32 0.0, %v780
        %v782 = vpop.f32.mrb[0].mxu0
        %v783 = vadd.f32 0.0, %v782
        %v784 = vpop.f32.mrb[0].mxu0
        %v785 = vadd.f32 0.0, %v784
        %786 = vdwg.mxu0
        %787 = vmatprep.subr.bf16.mxu0 0
        %788 = vmatpush1.bf16.msra.mxu0 %v742
        %789 = vmatprep.subr.bf16.mxu0 0
        %790 = vmatpush1.bf16.msra.mxu0 0
        %791 = vmatprep.subr.bf16.mxu0 0
        %792 = vmatpush1.bf16.msra.mxu0 0
        %793 = vmatprep.subr.bf16.mxu0 0
        %794 = vmatpush1.bf16.msra.mxu0 0
        %795 = vmatprep.subr.bf16.mxu0 0
        %796 = vmatpush1.bf16.msra.mxu0 0
        %797 = vmatprep.subr.bf16.mxu0 0
        %798 = vmatpush1.bf16.msra.mxu0 0
        %799 = vmatprep.subr.bf16.mxu0 0
        %800 = vmatpush1.bf16.msra.mxu0 0
        %801 = vmatprep.subr.bf16.mxu0 0
        %802 = vmatpush1.bf16.msra.mxu0 0
        %803 = vmatprep.subr.bf16.mxu0 0
        %804 = vmatpush1.bf16.msra.mxu0 0
        %805 = vmatprep.subr.bf16.mxu0 0
        %806 = vmatpush1.bf16.msra.mxu0 0
        %807 = vmatprep.subr.bf16.mxu0 0
        %808 = vmatpush1.bf16.msra.mxu0 0
        %809 = vmatprep.subr.bf16.mxu0 0
        %810 = vmatpush1.bf16.msra.mxu0 0
        %811 = vmatprep.subr.bf16.mxu0 0
        %812 = vmatpush1.bf16.msra.mxu0 0
        %813 = vmatprep.subr.bf16.mxu0 0
        %814 = vmatpush1.bf16.msra.mxu0 0
        %815 = vmatprep.subr.bf16.mxu0 0
        %816 = vmatpush1.bf16.msra.mxu0 0
        %817 = vmatprep.subr.bf16.mxu0 0
        %818 = vmatpush1.bf16.msra.mxu0 0
        %819 = vmatprep.mubr.bf16.mxu0 0
        %820 = vmatmul.mubr.bf16.gmra.mrb[0].mxu0 %v733
        %v821 = vpop.f32.mrb[0].mxu0
        %v822 = vadd.f32 0.0, %v821
        %v823 = vpop.f32.mrb[0].mxu0
        %v824 = vpop.f32.mrb[0].mxu0
        %v825 = vadd.f32 0.0, %v824
        %v826 = vpop.f32.mrb[0].mxu0
        %827 = vdwg.mxu0
        %v828 = vadd.f32 %v706, %v779
        %v829 = vadd.f32 %v707, %v781
        %v830 = vadd.f32 %v708, %v822
        %v831 = vadd.f32 %v709, %v783
        %v832 = vadd.f32 %v710, %v785
        %v833 = vadd.f32 %v711, %v825
        %s834 = scalar_lea.vmem %s4, 24
        %v835 = vld [vmem:[%s834] sm:$0xf]
        %v836 = vld [vmem:[%s834 + $0x4] sm:$0xf]
        %v839 = vunpack.c.l.b16 %v835
        %v840 = vunpack.c.l.b16 %v836
        %v841 = vpack.c.b16 %v840, %v839
        %842 = vrot.lane.b32.xlu0 %v594, 125
        %v843 = vpop.permute.xlu0 %842
        %844 = vrot.lane.b32.xlu0 %v595, 125
        %v845 = vpop.permute.xlu0 %844
        %846 = vrot.lane.b32.xlu0 %v596, 125
        %v847 = vpop.permute.xlu0 %846
        %848 = vrot.lane.b32.xlu0 %v597, 125
        %v849 = vpop.permute.xlu0 %848
        %vm850 = vcmask 1022976
        %v851 = vsel %vm850, %v843, %v845
        %v852 = vsel %vm850, %v845, %v847
        %v853 = vsel %vm850, %v847, %v849
        %v855 = vsel %vm267, %v841, 0
        %v858 = vsel %vm271, %v851, 0
        %v861 = vsel %vm271, %v852, 0
        %v864 = vsel %vm271, %v853, 0
        %866 = vmatprep.subr.bf16.mxu0 %v861
        %867 = vmatpush1.bf16.msra.mxu0 %v858
        %868 = vmatprep.subr.bf16.mxu0 0
        %869 = vmatpush1.bf16.msra.mxu0 0
        %870 = vmatprep.subr.bf16.mxu0 0
        %871 = vmatpush1.bf16.msra.mxu0 0
        %872 = vmatprep.subr.bf16.mxu0 0
        %873 = vmatpush1.bf16.msra.mxu0 0
        %874 = vmatprep.subr.bf16.mxu0 0
        %875 = vmatpush1.bf16.msra.mxu0 0
        %876 = vmatprep.subr.bf16.mxu0 0
        %877 = vmatpush1.bf16.msra.mxu0 0
        %878 = vmatprep.subr.bf16.mxu0 0
        %879 = vmatpush1.bf16.msra.mxu0 0
        %880 = vmatprep.subr.bf16.mxu0 0
        %881 = vmatpush1.bf16.msra.mxu0 0
        %882 = vmatprep.subr.bf16.mxu0 0
        %883 = vmatpush1.bf16.msra.mxu0 0
        %884 = vmatprep.subr.bf16.mxu0 0
        %885 = vmatpush1.bf16.msra.mxu0 0
        %886 = vmatprep.subr.bf16.mxu0 0
        %887 = vmatpush1.bf16.msra.mxu0 0
        %888 = vmatprep.subr.bf16.mxu0 0
        %889 = vmatpush1.bf16.msra.mxu0 0
        %890 = vmatprep.subr.bf16.mxu0 0
        %891 = vmatpush1.bf16.msra.mxu0 0
        %892 = vmatprep.subr.bf16.mxu0 0
        %893 = vmatpush1.bf16.msra.mxu0 0
        %894 = vmatprep.subr.bf16.mxu0 0
        %895 = vmatpush1.bf16.msra.mxu0 0
        %896 = vmatprep.subr.bf16.mxu0 0
        %897 = vmatpush1.bf16.msra.mxu0 0
        %898 = vmatprep.mubr.bf16.mxu0 0
        %899 = vmatmul.mubr.bf16.gmra.mrb[0].mxu0 %v855
        %v900 = vpop.f32.mrb[0].mxu0
        %v901 = vadd.f32 0.0, %v900
        %v902 = vpop.f32.mrb[0].mxu0
        %v903 = vadd.f32 0.0, %v902
        %v904 = vpop.f32.mrb[0].mxu0
        %v905 = vadd.f32 0.0, %v904
        %v906 = vpop.f32.mrb[0].mxu0
        %v907 = vadd.f32 0.0, %v906
        %908 = vdwg.mxu0
        %909 = vmatprep.subr.bf16.mxu0 0
        %910 = vmatpush1.bf16.msra.mxu0 %v864
        %911 = vmatprep.subr.bf16.mxu0 0
        %912 = vmatpush1.bf16.msra.mxu0 0
        %913 = vmatprep.subr.bf16.mxu0 0
        %914 = vmatpush1.bf16.msra.mxu0 0
        %915 = vmatprep.subr.bf16.mxu0 0
        %916 = vmatpush1.bf16.msra.mxu0 0
        %917 = vmatprep.subr.bf16.mxu0 0
        %918 = vmatpush1.bf16.msra.mxu0 0
        %919 = vmatprep.subr.bf16.mxu0 0
        %920 = vmatpush1.bf16.msra.mxu0 0
        %921 = vmatprep.subr.bf16.mxu0 0
        %922 = vmatpush1.bf16.msra.mxu0 0
        %923 = vmatprep.subr.bf16.mxu0 0
        %924 = vmatpush1.bf16.msra.mxu0 0
        %925 = vmatprep.subr.bf16.mxu0 0
        %926 = vmatpush1.bf16.msra.mxu0 0
        %927 = vmatprep.subr.bf16.mxu0 0
        %928 = vmatpush1.bf16.msra.mxu0 0
        %929 = vmatprep.subr.bf16.mxu0 0
        %930 = vmatpush1.bf16.msra.mxu0 0
        %931 = vmatprep.subr.bf16.mxu0 0
        %932 = vmatpush1.bf16.msra.mxu0 0
        %933 = vmatprep.subr.bf16.mxu0 0
        %934 = vmatpush1.bf16.msra.mxu0 0
        %935 = vmatprep.subr.bf16.mxu0 0
        %936 = vmatpush1.bf16.msra.mxu0 0
        %937 = vmatprep.subr.bf16.mxu0 0
        %938 = vmatpush1.bf16.msra.mxu0 0
        %939 = vmatprep.subr.bf16.mxu0 0
        %940 = vmatpush1.bf16.msra.mxu0 0
        %941 = vmatprep.mubr.bf16.mxu0 0
        %942 = vmatmul.mubr.bf16.gmra.mrb[0].mxu0 %v855
        %v943 = vpop.f32.mrb[0].mxu0
        %v944 = vadd.f32 0.0, %v943
        %v945 = vpop.f32.mrb[0].mxu0
        %v946 = vpop.f32.mrb[0].mxu0
        %v947 = vadd.f32 0.0, %v946
        %v948 = vpop.f32.mrb[0].mxu0
        %949 = vdwg.mxu0
        %v950 = vadd.f32 %v828, %v901
        %v951 = vadd.f32 %v829, %v903
        %v952 = vadd.f32 %v830, %v944
        %v953 = vadd.f32 %v831, %v905
        %v954 = vadd.f32 %v832, %v907
        %v955 = vadd.f32 %v833, %v947
        %s956 = scalar_lea.vmem %s4, 32
        %v957 = vld [vmem:[%s956] sm:$0xf]
        %v958 = vld [vmem:[%s956 + $0x4] sm:$0xf]
        %v961 = vunpack.c.l.b16 %v957
        %v962 = vunpack.c.l.b16 %v958
        %v963 = vpack.c.b16 %v962, %v961
        %964 = vrot.lane.b32.xlu0 %v594, 124
        %v965 = vpop.permute.xlu0 %964
        %966 = vrot.lane.b32.xlu0 %v595, 124
        %v967 = vpop.permute.xlu0 %966
        %968 = vrot.lane.b32.xlu0 %v596, 124
        %v969 = vpop.permute.xlu0 %968
        %970 = vrot.lane.b32.xlu0 %v597, 124
        %v971 = vpop.permute.xlu0 %970
        %vm972 = vcmask 1014784
        %v973 = vsel %vm972, %v965, %v967
        %v974 = vsel %vm972, %v967, %v969
        %v975 = vsel %vm972, %v969, %v971
        %v977 = vsel %vm267, %v963, 0
        %v980 = vsel %vm271, %v973, 0
        %v983 = vsel %vm271, %v974, 0
        %v986 = vsel %vm271, %v975, 0
        %988 = vmatprep.subr.bf16.mxu0 %v983
        %989 = vmatpush1.bf16.msra.mxu0 %v980
        %990 = vmatprep.subr.bf16.mxu0 0
        %991 = vmatpush1.bf16.msra.mxu0 0
        %992 = vmatprep.subr.bf16.mxu0 0
        %993 = vmatpush1.bf16.msra.mxu0 0
        %994 = vmatprep.subr.bf16.mxu0 0
        %995 = vmatpush1.bf16.msra.mxu0 0
        %996 = vmatprep.subr.bf16.mxu0 0
        %997 = vmatpush1.bf16.msra.mxu0 0
        %998 = vmatprep.subr.bf16.mxu0 0
        %999 = vmatpush1.bf16.msra.mxu0 0
        %1000 = vmatprep.subr.bf16.mxu0 0
        %1001 = vmatpush1.bf16.msra.mxu0 0
        %1002 = vmatprep.subr.bf16.mxu0 0
        %1003 = vmatpush1.bf16.msra.mxu0 0
        %1004 = vmatprep.subr.bf16.mxu0 0
        %1005 = vmatpush1.bf16.msra.mxu0 0
        %1006 = vmatprep.subr.bf16.mxu0 0
        %1007 = vmatpush1.bf16.msra.mxu0 0
        %1008 = vmatprep.subr.bf16.mxu0 0
        %1009 = vmatpush1.bf16.msra.mxu0 0
        %1010 = vmatprep.subr.bf16.mxu0 0
        %1011 = vmatpush1.bf16.msra.mxu0 0
        %1012 = vmatprep.subr.bf16.mxu0 0
        %1013 = vmatpush1.bf16.msra.mxu0 0
        %1014 = vmatprep.subr.bf16.mxu0 0
        %1015 = vmatpush1.bf16.msra.mxu0 0
        %1016 = vmatprep.subr.bf16.mxu0 0
        %1017 = vmatpush1.bf16.msra.mxu0 0
        %1018 = vmatprep.subr.bf16.mxu0 0
        %1019 = vmatpush1.bf16.msra.mxu0 0
        %1020 = vmatprep.mubr.bf16.mxu0 0
        %1021 = vmatmul.mubr.bf16.gmra.mrb[0].mxu0 %v977
        %v1022 = vpop.f32.mrb[0].mxu0
        %v1023 = vadd.f32 0.0, %v1022
        %v1024 = vpop.f32.mrb[0].mxu0
        %v1025 = vadd.f32 0.0, %v1024
        %v1026 = vpop.f32.mrb[0].mxu0
        %v1027 = vadd.f32 0.0, %v1026
        %v1028 = vpop.f32.mrb[0].mxu0
        %v1029 = vadd.f32 0.0, %v1028
        %1030 = vdwg.mxu0
        %1031 = vmatprep.subr.bf16.mxu0 0
        %1032 = vmatpush1.bf16.msra.mxu0 %v986
        %1033 = vmatprep.subr.bf16.mxu0 0
        %1034 = vmatpush1.bf16.msra.mxu0 0
        %1035 = vmatprep.subr.bf16.mxu0 0
        %1036 = vmatpush1.bf16.msra.mxu0 0
        %1037 = vmatprep.subr.bf16.mxu0 0
        %1038 = vmatpush1.bf16.msra.mxu0 0
        %1039 = vmatprep.subr.bf16.mxu0 0
        %1040 = vmatpush1.bf16.msra.mxu0 0
        %1041 = vmatprep.subr.bf16.mxu0 0
        %1042 = vmatpush1.bf16.msra.mxu0 0
        %1043 = vmatprep.subr.bf16.mxu0 0
        %1044 = vmatpush1.bf16.msra.mxu0 0
        %1045 = vmatprep.subr.bf16.mxu0 0
        %1046 = vmatpush1.bf16.msra.mxu0 0
        %1047 = vmatprep.subr.bf16.mxu0 0
        %1048 = vmatpush1.bf16.msra.mxu0 0
        %1049 = vmatprep.subr.bf16.mxu0 0
        %1050 = vmatpush1.bf16.msra.mxu0 0
        %1051 = vmatprep.subr.bf16.mxu0 0
        %1052 = vmatpush1.bf16.msra.mxu0 0
        %1053 = vmatprep.subr.bf16.mxu0 0
        %1054 = vmatpush1.bf16.msra.mxu0 0
        %1055 = vmatprep.subr.bf16.mxu0 0
        %1056 = vmatpush1.bf16.msra.mxu0 0
        %1057 = vmatprep.subr.bf16.mxu0 0
        %1058 = vmatpush1.bf16.msra.mxu0 0
        %1059 = vmatprep.subr.bf16.mxu0 0
        %1060 = vmatpush1.bf16.msra.mxu0 0
        %1061 = vmatprep.subr.bf16.mxu0 0
        %1062 = vmatpush1.bf16.msra.mxu0 0
        %1063 = vmatprep.mubr.bf16.mxu0 0
        %1064 = vmatmul.mubr.bf16.gmra.mrb[0].mxu0 %v977
        %v1065 = vpop.f32.mrb[0].mxu0
        %v1066 = vadd.f32 0.0, %v1065
        %v1067 = vpop.f32.mrb[0].mxu0
        %v1068 = vpop.f32.mrb[0].mxu0
        %v1069 = vadd.f32 0.0, %v1068
        %v1070 = vpop.f32.mrb[0].mxu0
        %1071 = vdwg.mxu0
        %v1072 = vadd.f32 %v950, %v1023
        %v1073 = vadd.f32 %v951, %v1025
        %v1074 = vadd.f32 %v952, %v1066
        %v1075 = vadd.f32 %v953, %v1027
        %v1076 = vadd.f32 %v954, %v1029
        %v1077 = vadd.f32 %v955, %v1069
        %s1078 = scalar_lea.vmem %s4, 40
        %v1079 = vld [vmem:[%s1078] sm:$0xf]
        %v1080 = vld [vmem:[%s1078 + $0x4] sm:$0xf]
        %v1083 = vunpack.c.l.b16 %v1079
        %v1084 = vunpack.c.l.b16 %v1080
        %v1085 = vpack.c.b16 %v1084, %v1083
        %1086 = vrot.lane.b32.xlu0 %v594, 104
        %v1087 = vpop.permute.xlu0 %1086
        %1088 = vrot.lane.b32.xlu0 %v595, 104
        %v1089 = vpop.permute.xlu0 %1088
        %1090 = vrot.lane.b32.xlu0 %v596, 104
        %v1091 = vpop.permute.xlu0 %1090
        %1092 = vrot.lane.b32.xlu0 %v597, 104
        %v1093 = vpop.permute.xlu0 %1092
        %vm1094 = vcmask 850944
        %v1095 = vsel %vm1094, %v1087, %v1089
        %v1096 = vsel %vm1094, %v1089, %v1091
        %v1097 = vsel %vm1094, %v1091, %v1093
        %v1099 = vsel %vm267, %v1085, 0
        %v1102 = vsel %vm271, %v1095, 0
        %v1105 = vsel %vm271, %v1096, 0
        %v1108 = vsel %vm271, %v1097, 0
        %1110 = vmatprep.subr.bf16.mxu0 %v1105
        %1111 = vmatpush1.bf16.msra.mxu0 %v1102
        %1112 = vmatprep.subr.bf16.mxu0 0
        %1113 = vmatpush1.bf16.msra.mxu0 0
        %1114 = vmatprep.subr.bf16.mxu0 0
        %1115 = vmatpush1.bf16.msra.mxu0 0
        %1116 = vmatprep.subr.bf16.mxu0 0
        %1117 = vmatpush1.bf16.msra.mxu0 0
        %1118 = vmatprep.subr.bf16.mxu0 0
        %1119 = vmatpush1.bf16.msra.mxu0 0
        %1120 = vmatprep.subr.bf16.mxu0 0
        %1121 = vmatpush1.bf16.msra.mxu0 0
        %1122 = vmatprep.subr.bf16.mxu0 0
        %1123 = vmatpush1.bf16.msra.mxu0 0
        %1124 = vmatprep.subr.bf16.mxu0 0
        %1125 = vmatpush1.bf16.msra.mxu0 0
        %1126 = vmatprep.subr.bf16.mxu0 0
        %1127 = vmatpush1.bf16.msra.mxu0 0
        %1128 = vmatprep.subr.bf16.mxu0 0
        %1129 = vmatpush1.bf16.msra.mxu0 0
        %1130 = vmatprep.subr.bf16.mxu0 0
        %1131 = vmatpush1.bf16.msra.mxu0 0
        %1132 = vmatprep.subr.bf16.mxu0 0
        %1133 = vmatpush1.bf16.msra.mxu0 0
        %1134 = vmatprep.subr.bf16.mxu0 0
        %1135 = vmatpush1.bf16.msra.mxu0 0
        %1136 = vmatprep.subr.bf16.mxu0 0
        %1137 = vmatpush1.bf16.msra.mxu0 0
        %1138 = vmatprep.subr.bf16.mxu0 0
        %1139 = vmatpush1.bf16.msra.mxu0 0
        %1140 = vmatprep.subr.bf16.mxu0 0
        %1141 = vmatpush1.bf16.msra.mxu0 0
        %1142 = vmatprep.mubr.bf16.mxu0 0
        %1143 = vmatmul.mubr.bf16.gmra.mrb[0].mxu0 %v1099
        %v1144 = vpop.f32.mrb[0].mxu0
        %v1145 = vadd.f32 0.0, %v1144
        %v1146 = vpop.f32.mrb[0].mxu0
        %v1147 = vadd.f32 0.0, %v1146
        %v1148 = vpop.f32.mrb[0].mxu0
        %v1149 = vadd.f32 0.0, %v1148
        %v1150 = vpop.f32.mrb[0].mxu0
        %v1151 = vadd.f32 0.0, %v1150
        %1152 = vdwg.mxu0
        %1153 = vmatprep.subr.bf16.mxu0 0
        %1154 = vmatpush1.bf16.msra.mxu0 %v1108
        %1155 = vmatprep.subr.bf16.mxu0 0
        %1156 = vmatpush1.bf16.msra.mxu0 0
        %1157 = vmatprep.subr.bf16.mxu0 0
        %1158 = vmatpush1.bf16.msra.mxu0 0
        %1159 = vmatprep.subr.bf16.mxu0 0
        %1160 = vmatpush1.bf16.msra.mxu0 0
        %1161 = vmatprep.subr.bf16.mxu0 0
        %1162 = vmatpush1.bf16.msra.mxu0 0
        %1163 = vmatprep.subr.bf16.mxu0 0
        %1164 = vmatpush1.bf16.msra.mxu0 0
        %1165 = vmatprep.subr.bf16.mxu0 0
        %1166 = vmatpush1.bf16.msra.mxu0 0
        %1167 = vmatprep.subr.bf16.mxu0 0
        %1168 = vmatpush1.bf16.msra.mxu0 0
        %1169 = vmatprep.subr.bf16.mxu0 0
        %1170 = vmatpush1.bf16.msra.mxu0 0
        %1171 = vmatprep.subr.bf16.mxu0 0
        %1172 = vmatpush1.bf16.msra.mxu0 0
        %1173 = vmatprep.subr.bf16.mxu0 0
        %1174 = vmatpush1.bf16.msra.mxu0 0
        %1175 = vmatprep.subr.bf16.mxu0 0
        %1176 = vmatpush1.bf16.msra.mxu0 0
        %1177 = vmatprep.subr.bf16.mxu0 0
        %1178 = vmatpush1.bf16.msra.mxu0 0
        %1179 = vmatprep.subr.bf16.mxu0 0
        %1180 = vmatpush1.bf16.msra.mxu0 0
        %1181 = vmatprep.subr.bf16.mxu0 0
        %1182 = vmatpush1.bf16.msra.mxu0 0
        %1183 = vmatprep.subr.bf16.mxu0 0
        %1184 = vmatpush1.bf16.msra.mxu0 0
        %1185 = vmatprep.mubr.bf16.mxu0 0
        %1186 = vmatmul.mubr.bf16.gmra.mrb[0].mxu0 %v1099
        %v1187 = vpop.f32.mrb[0].mxu0
        %v1188 = vadd.f32 0.0, %v1187
        %v1189 = vpop.f32.mrb[0].mxu0
        %v1190 = vpop.f32.mrb[0].mxu0
        %v1191 = vadd.f32 0.0, %v1190
        %v1192 = vpop.f32.mrb[0].mxu0
        %1193 = vdwg.mxu0
        %v1194 = vadd.f32 %v1072, %v1145
        %v1195 = vadd.f32 %v1073, %v1147
        %v1196 = vadd.f32 %v1074, %v1188
        %v1197 = vadd.f32 %v1075, %v1149
        %v1198 = vadd.f32 %v1076, %v1151
        %v1199 = vadd.f32 %v1077, %v1191
        %s1200 = scalar_lea.vmem %s4, 48
        %v1201 = vld [vmem:[%s1200] sm:$0xf]
        %v1202 = vld [vmem:[%s1200 + $0x4] sm:$0xf]
        %v1205 = vunpack.c.l.b16 %v1201
        %v1206 = vunpack.c.l.b16 %v1202
        %v1207 = vpack.c.b16 %v1206, %v1205
        %1208 = vrot.lane.b32.xlu0 %v594, 103
        %v1209 = vpop.permute.xlu0 %1208
        %1210 = vrot.lane.b32.xlu0 %v595, 103
        %v1211 = vpop.permute.xlu0 %1210
        %1212 = vrot.lane.b32.xlu0 %v596, 103
        %v1213 = vpop.permute.xlu0 %1212
        %1214 = vrot.lane.b32.xlu0 %v597, 103
        %v1215 = vpop.permute.xlu0 %1214
        %vm1216 = vcmask 842752
        %v1217 = vsel %vm1216, %v1209, %v1211
        %v1218 = vsel %vm1216, %v1211, %v1213
        %v1219 = vsel %vm1216, %v1213, %v1215
        %v1221 = vsel %vm267, %v1207, 0
        %v1224 = vsel %vm271, %v1217, 0
        %v1227 = vsel %vm271, %v1218, 0
        %v1230 = vsel %vm271, %v1219, 0
        %1232 = vmatprep.subr.bf16.mxu0 %v1227
        %1233 = vmatpush1.bf16.msra.mxu0 %v1224
        %1234 = vmatprep.subr.bf16.mxu0 0
        %1235 = vmatpush1.bf16.msra.mxu0 0
        %1236 = vmatprep.subr.bf16.mxu0 0
        %1237 = vmatpush1.bf16.msra.mxu0 0
        %1238 = vmatprep.subr.bf16.mxu0 0
        %1239 = vmatpush1.bf16.msra.mxu0 0
        %1240 = vmatprep.subr.bf16.mxu0 0
        %1241 = vmatpush1.bf16.msra.mxu0 0
        %1242 = vmatprep.subr.bf16.mxu0 0
        %1243 = vmatpush1.bf16.msra.mxu0 0
        %1244 = vmatprep.subr.bf16.mxu0 0
        %1245 = vmatpush1.bf16.msra.mxu0 0
        %1246 = vmatprep.subr.bf16.mxu0 0
        %1247 = vmatpush1.bf16.msra.mxu0 0
        %1248 = vmatprep.subr.bf16.mxu0 0
        %1249 = vmatpush1.bf16.msra.mxu0 0
        %1250 = vmatprep.subr.bf16.mxu0 0
        %1251 = vmatpush1.bf16.msra.mxu0 0
        %1252 = vmatprep.subr.bf16.mxu0 0
        %1253 = vmatpush1.bf16.msra.mxu0 0
        %1254 = vmatprep.subr.bf16.mxu0 0
        %1255 = vmatpush1.bf16.msra.mxu0 0
        %1256 = vmatprep.subr.bf16.mxu0 0
        %1257 = vmatpush1.bf16.msra.mxu0 0
        %1258 = vmatprep.subr.bf16.mxu0 0
        %1259 = vmatpush1.bf16.msra.mxu0 0
        %1260 = vmatprep.subr.bf16.mxu0 0
        %1261 = vmatpush1.bf16.msra.mxu0 0
        %1262 = vmatprep.subr.bf16.mxu0 0
        %1263 = vmatpush1.bf16.msra.mxu0 0
        %1264 = vmatprep.mubr.bf16.mxu0 0
        %1265 = vmatmul.mubr.bf16.gmra.mrb[0].mxu0 %v1221
        %v1266 = vpop.f32.mrb[0].mxu0
        %v1267 = vadd.f32 0.0, %v1266
        %v1268 = vpop.f32.mrb[0].mxu0
        %v1269 = vadd.f32 0.0, %v1268
        %v1270 = vpop.f32.mrb[0].mxu0
        %v1271 = vadd.f32 0.0, %v1270
        %v1272 = vpop.f32.mrb[0].mxu0
        %v1273 = vadd.f32 0.0, %v1272
        %1274 = vdwg.mxu0
        %1275 = vmatprep.subr.bf16.mxu0 0
        %1276 = vmatpush1.bf16.msra.mxu0 %v1230
        %1277 = vmatprep.subr.bf16.mxu0 0
        %1278 = vmatpush1.bf16.msra.mxu0 0
        %1279 = vmatprep.subr.bf16.mxu0 0
        %1280 = vmatpush1.bf16.msra.mxu0 0
        %1281 = vmatprep.subr.bf16.mxu0 0
        %1282 = vmatpush1.bf16.msra.mxu0 0
        %1283 = vmatprep.subr.bf16.mxu0 0
        %1284 = vmatpush1.bf16.msra.mxu0 0
        %1285 = vmatprep.subr.bf16.mxu0 0
        %1286 = vmatpush1.bf16.msra.mxu0 0
        %1287 = vmatprep.subr.bf16.mxu0 0
        %1288 = vmatpush1.bf16.msra.mxu0 0
        %1289 = vmatprep.subr.bf16.mxu0 0
        %1290 = vmatpush1.bf16.msra.mxu0 0
        %1291 = vmatprep.subr.bf16.mxu0 0
        %1292 = vmatpush1.bf16.msra.mxu0 0
        %1293 = vmatprep.subr.bf16.mxu0 0
        %1294 = vmatpush1.bf16.msra.mxu0 0
        %1295 = vmatprep.subr.bf16.mxu0 0
        %1296 = vmatpush1.bf16.msra.mxu0 0
        %1297 = vmatprep.subr.bf16.mxu0 0
        %1298 = vmatpush1.bf16.msra.mxu0 0
        %1299 = vmatprep.subr.bf16.mxu0 0
        %1300 = vmatpush1.bf16.msra.mxu0 0
        %1301 = vmatprep.subr.bf16.mxu0 0
        %1302 = vmatpush1.bf16.msra.mxu0 0
        %1303 = vmatprep.subr.bf16.mxu0 0
        %1304 = vmatpush1.bf16.msra.mxu0 0
        %1305 = vmatprep.subr.bf16.mxu0 0
        %1306 = vmatpush1.bf16.msra.mxu0 0
        %1307 = vmatprep.mubr.bf16.mxu0 0
        %1308 = vmatmul.mubr.bf16.gmra.mrb[0].mxu0 %v1221
        %v1309 = vpop.f32.mrb[0].mxu0
        %v1310 = vadd.f32 0.0, %v1309
        %v1311 = vpop.f32.mrb[0].mxu0
        %v1312 = vpop.f32.mrb[0].mxu0
        %v1313 = vadd.f32 0.0, %v1312
        %v1314 = vpop.f32.mrb[0].mxu0
        %1315 = vdwg.mxu0
        %v1316 = vadd.f32 %v1194, %v1267
        %v1317 = vadd.f32 %v1195, %v1269
        %v1318 = vadd.f32 %v1196, %v1310
        %v1319 = vadd.f32 %v1197, %v1271
        %v1320 = vadd.f32 %v1198, %v1273
        %v1321 = vadd.f32 %v1199, %v1313
        %s1322 = scalar_lea.vmem %s4, 56
        %v1323 = vld [vmem:[%s1322] sm:$0xf]
        %v1324 = vld [vmem:[%s1322 + $0x4] sm:$0xf]
        %v1327 = vunpack.c.l.b16 %v1323
        %v1328 = vunpack.c.l.b16 %v1324
        %v1329 = vpack.c.b16 %v1328, %v1327
        %1330 = vrot.lane.b32.xlu0 %v594, 102
        %v1331 = vpop.permute.xlu0 %1330
        %1332 = vrot.lane.b32.xlu0 %v595, 102
        %v1333 = vpop.permute.xlu0 %1332
        %1334 = vrot.lane.b32.xlu0 %v596, 102
        %v1335 = vpop.permute.xlu0 %1334
        %1336 = vrot.lane.b32.xlu0 %v597, 102
        %v1337 = vpop.permute.xlu0 %1336
        %vm1338 = vcmask 834560
        %v1339 = vsel %vm1338, %v1331, %v1333
        %v1340 = vsel %vm1338, %v1333, %v1335
        %v1341 = vsel %vm1338, %v1335, %v1337
        %v1343 = vsel %vm267, %v1329, 0
        %v1346 = vsel %vm271, %v1339, 0
        %v1349 = vsel %vm271, %v1340, 0
        %v1352 = vsel %vm271, %v1341, 0
        %1354 = vmatprep.subr.bf16.mxu0 %v1349
        %1355 = vmatpush1.bf16.msra.mxu0 %v1346
        %1356 = vmatprep.subr.bf16.mxu0 0
        %1357 = vmatpush1.bf16.msra.mxu0 0
        %1358 = vmatprep.subr.bf16.mxu0 0
        %1359 = vmatpush1.bf16.msra.mxu0 0
        %1360 = vmatprep.subr.bf16.mxu0 0
        %1361 = vmatpush1.bf16.msra.mxu0 0
        %1362 = vmatprep.subr.bf16.mxu0 0
        %1363 = vmatpush1.bf16.msra.mxu0 0
        %1364 = vmatprep.subr.bf16.mxu0 0
        %1365 = vmatpush1.bf16.msra.mxu0 0
        %1366 = vmatprep.subr.bf16.mxu0 0
        %1367 = vmatpush1.bf16.msra.mxu0 0
        %1368 = vmatprep.subr.bf16.mxu0 0
        %1369 = vmatpush1.bf16.msra.mxu0 0
        %1370 = vmatprep.subr.bf16.mxu0 0
        %1371 = vmatpush1.bf16.msra.mxu0 0
        %1372 = vmatprep.subr.bf16.mxu0 0
        %1373 = vmatpush1.bf16.msra.mxu0 0
        %1374 = vmatprep.subr.bf16.mxu0 0
        %1375 = vmatpush1.bf16.msra.mxu0 0
        %1376 = vmatprep.subr.bf16.mxu0 0
        %1377 = vmatpush1.bf16.msra.mxu0 0
        %1378 = vmatprep.subr.bf16.mxu0 0
        %1379 = vmatpush1.bf16.msra.mxu0 0
        %1380 = vmatprep.subr.bf16.mxu0 0
        %1381 = vmatpush1.bf16.msra.mxu0 0
        %1382 = vmatprep.subr.bf16.mxu0 0
        %1383 = vmatpush1.bf16.msra.mxu0 0
        %1384 = vmatprep.subr.bf16.mxu0 0
        %1385 = vmatpush1.bf16.msra.mxu0 0
        %1386 = vmatprep.mubr.bf16.mxu0 0
        %1387 = vmatmul.mubr.bf16.gmra.mrb[0].mxu0 %v1343
        %v1388 = vpop.f32.mrb[0].mxu0
        %v1389 = vadd.f32 0.0, %v1388
        %v1390 = vpop.f32.mrb[0].mxu0
        %v1391 = vadd.f32 0.0, %v1390
        %v1392 = vpop.f32.mrb[0].mxu0
        %v1393 = vadd.f32 0.0, %v1392
        %v1394 = vpop.f32.mrb[0].mxu0
        %v1395 = vadd.f32 0.0, %v1394
        %1396 = vdwg.mxu0
        %1397 = vmatprep.subr.bf16.mxu0 0
        %1398 = vmatpush1.bf16.msra.mxu0 %v1352
        %1399 = vmatprep.subr.bf16.mxu0 0
        %1400 = vmatpush1.bf16.msra.mxu0 0
        %1401 = vmatprep.subr.bf16.mxu0 0
        %1402 = vmatpush1.bf16.msra.mxu0 0
        %1403 = vmatprep.subr.bf16.mxu0 0
        %1404 = vmatpush1.bf16.msra.mxu0 0
        %1405 = vmatprep.subr.bf16.mxu0 0
        %1406 = vmatpush1.bf16.msra.mxu0 0
        %1407 = vmatprep.subr.bf16.mxu0 0
        %1408 = vmatpush1.bf16.msra.mxu0 0
        %1409 = vmatprep.subr.bf16.mxu0 0
        %1410 = vmatpush1.bf16.msra.mxu0 0
        %1411 = vmatprep.subr.bf16.mxu0 0
        %1412 = vmatpush1.bf16.msra.mxu0 0
        %1413 = vmatprep.subr.bf16.mxu0 0
        %1414 = vmatpush1.bf16.msra.mxu0 0
        %1415 = vmatprep.subr.bf16.mxu0 0
        %1416 = vmatpush1.bf16.msra.mxu0 0
        %1417 = vmatprep.subr.bf16.mxu0 0
        %1418 = vmatpush1.bf16.msra.mxu0 0
        %1419 = vmatprep.subr.bf16.mxu0 0
        %1420 = vmatpush1.bf16.msra.mxu0 0
        %1421 = vmatprep.subr.bf16.mxu0 0
        %1422 = vmatpush1.bf16.msra.mxu0 0
        %1423 = vmatprep.subr.bf16.mxu0 0
        %1424 = vmatpush1.bf16.msra.mxu0 0
        %1425 = vmatprep.subr.bf16.mxu0 0
        %1426 = vmatpush1.bf16.msra.mxu0 0
        %1427 = vmatprep.subr.bf16.mxu0 0
        %1428 = vmatpush1.bf16.msra.mxu0 0
        %1429 = vmatprep.mubr.bf16.mxu0 0
        %1430 = vmatmul.mubr.bf16.gmra.mrb[0].mxu0 %v1343
        %v1431 = vpop.f32.mrb[0].mxu0
        %v1432 = vadd.f32 0.0, %v1431
        %v1433 = vpop.f32.mrb[0].mxu0
        %v1434 = vpop.f32.mrb[0].mxu0
        %v1435 = vadd.f32 0.0, %v1434
        %v1436 = vpop.f32.mrb[0].mxu0
        %1437 = vdwg.mxu0
        %v1438 = vadd.f32 %v1316, %v1389
        %v1439 = vadd.f32 %v1317, %v1391
        %v1440 = vadd.f32 %v1318, %v1432
        %v1441 = vadd.f32 %v1319, %v1393
        %v1442 = vadd.f32 %v1320, %v1395
        %v1443 = vadd.f32 %v1321, %v1435
        %s1444 = scalar_lea.vmem %s4, 64
        %v1445 = vld [vmem:[%s1444] sm:$0xf]
        %v1446 = vld [vmem:[%s1444 + $0x4] sm:$0xf]
        %v1449 = vunpack.c.l.b16 %v1445
        %v1450 = vunpack.c.l.b16 %v1446
        %v1451 = vpack.c.b16 %v1450, %v1449
        %1452 = vrot.lane.b32.xlu0 %v594, 101
        %v1453 = vpop.permute.xlu0 %1452
        %1454 = vrot.lane.b32.xlu0 %v595, 101
        %v1455 = vpop.permute.xlu0 %1454
        %1456 = vrot.lane.b32.xlu0 %v596, 101
        %v1457 = vpop.permute.xlu0 %1456
        %1458 = vrot.lane.b32.xlu0 %v597, 101
        %v1459 = vpop.permute.xlu0 %1458
        %vm1460 = vcmask 826368
        %v1461 = vsel %vm1460, %v1453, %v1455
        %v1462 = vsel %vm1460, %v1455, %v1457
        %v1463 = vsel %vm1460, %v1457, %v1459
        %v1465 = vsel %vm267, %v1451, 0
        %v1468 = vsel %vm271, %v1461, 0
        %v1471 = vsel %vm271, %v1462, 0
        %v1474 = vsel %vm271, %v1463, 0
        %1476 = vmatprep.subr.bf16.mxu0 %v1471
        %1477 = vmatpush1.bf16.msra.mxu0 %v1468
        %1478 = vmatprep.subr.bf16.mxu0 0
        %1479 = vmatpush1.bf16.msra.mxu0 0
        %1480 = vmatprep.subr.bf16.mxu0 0
        %1481 = vmatpush1.bf16.msra.mxu0 0
        %1482 = vmatprep.subr.bf16.mxu0 0
        %1483 = vmatpush1.bf16.msra.mxu0 0
        %1484 = vmatprep.subr.bf16.mxu0 0
        %1485 = vmatpush1.bf16.msra.mxu0 0
        %1486 = vmatprep.subr.bf16.mxu0 0
        %1487 = vmatpush1.bf16.msra.mxu0 0
        %1488 = vmatprep.subr.bf16.mxu0 0
        %1489 = vmatpush1.bf16.msra.mxu0 0
        %1490 = vmatprep.subr.bf16.mxu0 0
        %1491 = vmatpush1.bf16.msra.mxu0 0
        %1492 = vmatprep.subr.bf16.mxu0 0
        %1493 = vmatpush1.bf16.msra.mxu0 0
        %1494 = vmatprep.subr.bf16.mxu0 0
        %1495 = vmatpush1.bf16.msra.mxu0 0
        %1496 = vmatprep.subr.bf16.mxu0 0
        %1497 = vmatpush1.bf16.msra.mxu0 0
        %1498 = vmatprep.subr.bf16.mxu0 0
        %1499 = vmatpush1.bf16.msra.mxu0 0
        %1500 = vmatprep.subr.bf16.mxu0 0
        %1501 = vmatpush1.bf16.msra.mxu0 0
        %1502 = vmatprep.subr.bf16.mxu0 0
        %1503 = vmatpush1.bf16.msra.mxu0 0
        %1504 = vmatprep.subr.bf16.mxu0 0
        %1505 = vmatpush1.bf16.msra.mxu0 0
        %1506 = vmatprep.subr.bf16.mxu0 0
        %1507 = vmatpush1.bf16.msra.mxu0 0
        %1508 = vmatprep.mubr.bf16.mxu0 0
        %1509 = vmatmul.mubr.bf16.gmra.mrb[0].mxu0 %v1465
        %v1510 = vpop.f32.mrb[0].mxu0
        %v1511 = vadd.f32 0.0, %v1510
        %v1512 = vpop.f32.mrb[0].mxu0
        %v1513 = vadd.f32 0.0, %v1512
        %v1514 = vpop.f32.mrb[0].mxu0
        %v1515 = vadd.f32 0.0, %v1514
        %v1516 = vpop.f32.mrb[0].mxu0
        %v1517 = vadd.f32 0.0, %v1516
        %1518 = vdwg.mxu0
        %1519 = vmatprep.subr.bf16.mxu0 0
        %1520 = vmatpush1.bf16.msra.mxu0 %v1474
        %1521 = vmatprep.subr.bf16.mxu0 0
        %1522 = vmatpush1.bf16.msra.mxu0 0
        %1523 = vmatprep.subr.bf16.mxu0 0
        %1524 = vmatpush1.bf16.msra.mxu0 0
        %1525 = vmatprep.subr.bf16.mxu0 0
        %1526 = vmatpush1.bf16.msra.mxu0 0
        %1527 = vmatprep.subr.bf16.mxu0 0
        %1528 = vmatpush1.bf16.msra.mxu0 0
        %1529 = vmatprep.subr.bf16.mxu0 0
        %1530 = vmatpush1.bf16.msra.mxu0 0
        %1531 = vmatprep.subr.bf16.mxu0 0
        %1532 = vmatpush1.bf16.msra.mxu0 0
        %1533 = vmatprep.subr.bf16.mxu0 0
        %1534 = vmatpush1.bf16.msra.mxu0 0
        %1535 = vmatprep.subr.bf16.mxu0 0
        %1536 = vmatpush1.bf16.msra.mxu0 0
        %1537 = vmatprep.subr.bf16.mxu0 0
        %1538 = vmatpush1.bf16.msra.mxu0 0
        %1539 = vmatprep.subr.bf16.mxu0 0
        %1540 = vmatpush1.bf16.msra.mxu0 0
        %1541 = vmatprep.subr.bf16.mxu0 0
        %1542 = vmatpush1.bf16.msra.mxu0 0
        %1543 = vmatprep.subr.bf16.mxu0 0
        %1544 = vmatpush1.bf16.msra.mxu0 0
        %1545 = vmatprep.subr.bf16.mxu0 0
        %1546 = vmatpush1.bf16.msra.mxu0 0
        %1547 = vmatprep.subr.bf16.mxu0 0
        %1548 = vmatpush1.bf16.msra.mxu0 0
        %1549 = vmatprep.subr.bf16.mxu0 0
        %1550 = vmatpush1.bf16.msra.mxu0 0
        %1551 = vmatprep.mubr.bf16.mxu0 0
        %1552 = vmatmul.mubr.bf16.gmra.mrb[0].mxu0 %v1465
        %v1553 = vpop.f32.mrb[0].mxu0
        %v1554 = vadd.f32 0.0, %v1553
        %v1555 = vpop.f32.mrb[0].mxu0
        %v1556 = vpop.f32.mrb[0].mxu0
        %v1557 = vadd.f32 0.0, %v1556
        %v1558 = vpop.f32.mrb[0].mxu0
        %1559 = vdwg.mxu0
        %v1560 = vadd.f32 %v1438, %v1511
        %v1561 = vadd.f32 %v1439, %v1513
        %v1562 = vadd.f32 %v1440, %v1554
        %v1563 = vadd.f32 %v1441, %v1515
        %v1564 = vadd.f32 %v1442, %v1517
        %v1565 = vadd.f32 %v1443, %v1557
        %s1566 = scalar_lea.vmem %s4, 72
        %v1567 = vld [vmem:[%s1566] sm:$0xf]
        %v1568 = vld [vmem:[%s1566 + $0x4] sm:$0xf]
        %v1571 = vunpack.c.l.b16 %v1567
        %v1572 = vunpack.c.l.b16 %v1568
        %v1573 = vpack.c.b16 %v1572, %v1571
        %1574 = vrot.lane.b32.xlu0 %v594, 100
        %v1575 = vpop.permute.xlu0 %1574
        %1576 = vrot.lane.b32.xlu0 %v595, 100
        %v1577 = vpop.permute.xlu0 %1576
        %1578 = vrot.lane.b32.xlu0 %v596, 100
        %v1579 = vpop.permute.xlu0 %1578
        %1580 = vrot.lane.b32.xlu0 %v597, 100
        %v1581 = vpop.permute.xlu0 %1580
        %vm1582 = vcmask 818176
        %v1583 = vsel %vm1582, %v1575, %v1577
        %v1584 = vsel %vm1582, %v1577, %v1579
        %v1585 = vsel %vm1582, %v1579, %v1581
        %v1587 = vsel %vm267, %v1573, 0
        %v1590 = vsel %vm271, %v1583, 0
        %v1593 = vsel %vm271, %v1584, 0
        %v1596 = vsel %vm271, %v1585, 0
        %1598 = vmatprep.subr.bf16.mxu0 %v1593
        %1599 = vmatpush1.bf16.msra.mxu0 %v1590
        %1600 = vmatprep.subr.bf16.mxu0 0
        %1601 = vmatpush1.bf16.msra.mxu0 0
        %1602 = vmatprep.subr.bf16.mxu0 0
        %1603 = vmatpush1.bf16.msra.mxu0 0
        %1604 = vmatprep.subr.bf16.mxu0 0
        %1605 = vmatpush1.bf16.msra.mxu0 0
        %1606 = vmatprep.subr.bf16.mxu0 0
        %1607 = vmatpush1.bf16.msra.mxu0 0
        %1608 = vmatprep.subr.bf16.mxu0 0
        %1609 = vmatpush1.bf16.msra.mxu0 0
        %1610 = vmatprep.subr.bf16.mxu0 0
        %1611 = vmatpush1.bf16.msra.mxu0 0
        %1612 = vmatprep.subr.bf16.mxu0 0
        %1613 = vmatpush1.bf16.msra.mxu0 0
        %1614 = vmatprep.subr.bf16.mxu0 0
        %1615 = vmatpush1.bf16.msra.mxu0 0
        %1616 = vmatprep.subr.bf16.mxu0 0
        %1617 = vmatpush1.bf16.msra.mxu0 0
        %1618 = vmatprep.subr.bf16.mxu0 0
        %1619 = vmatpush1.bf16.msra.mxu0 0
        %1620 = vmatprep.subr.bf16.mxu0 0
        %1621 = vmatpush1.bf16.msra.mxu0 0
        %1622 = vmatprep.subr.bf16.mxu0 0
        %1623 = vmatpush1.bf16.msra.mxu0 0
        %1624 = vmatprep.subr.bf16.mxu0 0
        %1625 = vmatpush1.bf16.msra.mxu0 0
        %1626 = vmatprep.subr.bf16.mxu0 0
        %1627 = vmatpush1.bf16.msra.mxu0 0
        %1628 = vmatprep.subr.bf16.mxu0 0
        %1629 = vmatpush1.bf16.msra.mxu0 0
        %1630 = vmatprep.mubr.bf16.mxu0 0
        %1631 = vmatmul.mubr.bf16.gmra.mrb[0].mxu0 %v1587
        %v1632 = vpop.f32.mrb[0].mxu0
        %v1633 = vadd.f32 0.0, %v1632
        %v1634 = vpop.f32.mrb[0].mxu0
        %v1635 = vadd.f32 0.0, %v1634
        %v1636 = vpop.f32.mrb[0].mxu0
        %v1637 = vadd.f32 0.0, %v1636
        %v1638 = vpop.f32.mrb[0].mxu0
        %v1639 = vadd.f32 0.0, %v1638
        %1640 = vdwg.mxu0
        %1641 = vmatprep.subr.bf16.mxu0 0
        %1642 = vmatpush1.bf16.msra.mxu0 %v1596
        %1643 = vmatprep.subr.bf16.mxu0 0
        %1644 = vmatpush1.bf16.msra.mxu0 0
        %1645 = vmatprep.subr.bf16.mxu0 0
        %1646 = vmatpush1.bf16.msra.mxu0 0
        %1647 = vmatprep.subr.bf16.mxu0 0
        %1648 = vmatpush1.bf16.msra.mxu0 0
        %1649 = vmatprep.subr.bf16.mxu0 0
        %1650 = vmatpush1.bf16.msra.mxu0 0
        %1651 = vmatprep.subr.bf16.mxu0 0
        %1652 = vmatpush1.bf16.msra.mxu0 0
        %1653 = vmatprep.subr.bf16.mxu0 0
        %1654 = vmatpush1.bf16.msra.mxu0 0
        %1655 = vmatprep.subr.bf16.mxu0 0
        %1656 = vmatpush1.bf16.msra.mxu0 0
        %1657 = vmatprep.subr.bf16.mxu0 0
        %1658 = vmatpush1.bf16.msra.mxu0 0
        %1659 = vmatprep.subr.bf16.mxu0 0
        %1660 = vmatpush1.bf16.msra.mxu0 0
        %1661 = vmatprep.subr.bf16.mxu0 0
        %1662 = vmatpush1.bf16.msra.mxu0 0
        %1663 = vmatprep.subr.bf16.mxu0 0
        %1664 = vmatpush1.bf16.msra.mxu0 0
        %1665 = vmatprep.subr.bf16.mxu0 0
        %1666 = vmatpush1.bf16.msra.mxu0 0
        %1667 = vmatprep.subr.bf16.mxu0 0
        %1668 = vmatpush1.bf16.msra.mxu0 0
        %1669 = vmatprep.subr.bf16.mxu0 0
        %1670 = vmatpush1.bf16.msra.mxu0 0
        %1671 = vmatprep.subr.bf16.mxu0 0
        %1672 = vmatpush1.bf16.msra.mxu0 0
        %1673 = vmatprep.mubr.bf16.mxu0 0
        %1674 = vmatmul.mubr.bf16.gmra.mrb[0].mxu0 %v1587
        %v1675 = vpop.f32.mrb[0].mxu0
        %v1676 = vadd.f32 0.0, %v1675
        %v1677 = vpop.f32.mrb[0].mxu0
        %v1678 = vpop.f32.mrb[0].mxu0
        %v1679 = vadd.f32 0.0, %v1678
        %v1680 = vpop.f32.mrb[0].mxu0
        %1681 = vdwg.mxu0
        %v1682 = vadd.f32 %v1560, %v1633
        %v1683 = vadd.f32 %v1561, %v1635
        %v1684 = vadd.f32 %v1562, %v1676
        %v1685 = vadd.f32 %v1563, %v1637
        %v1686 = vadd.f32 %v1564, %v1639
        %v1687 = vadd.f32 %v1565, %v1679
        %s1688 = scalar_lea.vmem %s4, 80
        %v1689 = vld [vmem:[%s1688] sm:$0xf]
        %v1690 = vld [vmem:[%s1688 + $0x4] sm:$0xf]
        %v1693 = vunpack.c.l.b16 %v1689
        %v1694 = vunpack.c.l.b16 %v1690
        %v1695 = vpack.c.b16 %v1694, %v1693
        %1696 = vrot.lane.b32.xlu0 %v594, 80
        %v1697 = vpop.permute.xlu0 %1696
        %1698 = vrot.lane.b32.xlu0 %v595, 80
        %v1699 = vpop.permute.xlu0 %1698
        %1700 = vrot.lane.b32.xlu0 %v596, 80
        %v1701 = vpop.permute.xlu0 %1700
        %1702 = vrot.lane.b32.xlu0 %v597, 80
        %v1703 = vpop.permute.xlu0 %1702
        %vm1704 = vcmask 654336
        %v1705 = vsel %vm1704, %v1697, %v1699
        %v1706 = vsel %vm1704, %v1699, %v1701
        %v1707 = vsel %vm1704, %v1701, %v1703
        %v1709 = vsel %vm267, %v1695, 0
        %v1712 = vsel %vm271, %v1705, 0
        %v1715 = vsel %vm271, %v1706, 0
        %v1718 = vsel %vm271, %v1707, 0
        %1720 = vmatprep.subr.bf16.mxu0 %v1715
        %1721 = vmatpush1.bf16.msra.mxu0 %v1712
        %1722 = vmatprep.subr.bf16.mxu0 0
        %1723 = vmatpush1.bf16.msra.mxu0 0
        %1724 = vmatprep.subr.bf16.mxu0 0
        %1725 = vmatpush1.bf16.msra.mxu0 0
        %1726 = vmatprep.subr.bf16.mxu0 0
        %1727 = vmatpush1.bf16.msra.mxu0 0
        %1728 = vmatprep.subr.bf16.mxu0 0
        %1729 = vmatpush1.bf16.msra.mxu0 0
        %1730 = vmatprep.subr.bf16.mxu0 0
        %1731 = vmatpush1.bf16.msra.mxu0 0
        %1732 = vmatprep.subr.bf16.mxu0 0
        %1733 = vmatpush1.bf16.msra.mxu0 0
        %1734 = vmatprep.subr.bf16.mxu0 0
        %1735 = vmatpush1.bf16.msra.mxu0 0
        %1736 = vmatprep.subr.bf16.mxu0 0
        %1737 = vmatpush1.bf16.msra.mxu0 0
        %1738 = vmatprep.subr.bf16.mxu0 0
        %1739 = vmatpush1.bf16.msra.mxu0 0
        %1740 = vmatprep.subr.bf16.mxu0 0
        %1741 = vmatpush1.bf16.msra.mxu0 0
        %1742 = vmatprep.subr.bf16.mxu0 0
        %1743 = vmatpush1.bf16.msra.mxu0 0
        %1744 = vmatprep.subr.bf16.mxu0 0
        %1745 = vmatpush1.bf16.msra.mxu0 0
        %1746 = vmatprep.subr.bf16.mxu0 0
        %1747 = vmatpush1.bf16.msra.mxu0 0
        %1748 = vmatprep.subr.bf16.mxu0 0
        %1749 = vmatpush1.bf16.msra.mxu0 0
        %1750 = vmatprep.subr.bf16.mxu0 0
        %1751 = vmatpush1.bf16.msra.mxu0 0
        %1752 = vmatprep.mubr.bf16.mxu0 0
        %1753 = vmatmul.mubr.bf16.gmra.mrb[0].mxu0 %v1709
        %v1754 = vpop.f32.mrb[0].mxu0
        %v1755 = vadd.f32 0.0, %v1754
        %v1756 = vpop.f32.mrb[0].mxu0
        %v1757 = vadd.f32 0.0, %v1756
        %v1758 = vpop.f32.mrb[0].mxu0
        %v1759 = vadd.f32 0.0, %v1758
        %v1760 = vpop.f32.mrb[0].mxu0
        %v1761 = vadd.f32 0.0, %v1760
        %1762 = vdwg.mxu0
        %1763 = vmatprep.subr.bf16.mxu0 0
        %1764 = vmatpush1.bf16.msra.mxu0 %v1718
        %1765 = vmatprep.subr.bf16.mxu0 0
        %1766 = vmatpush1.bf16.msra.mxu0 0
        %1767 = vmatprep.subr.bf16.mxu0 0
        %1768 = vmatpush1.bf16.msra.mxu0 0
        %1769 = vmatprep.subr.bf16.mxu0 0
        %1770 = vmatpush1.bf16.msra.mxu0 0
        %1771 = vmatprep.subr.bf16.mxu0 0
        %1772 = vmatpush1.bf16.msra.mxu0 0
        %1773 = vmatprep.subr.bf16.mxu0 0
        %1774 = vmatpush1.bf16.msra.mxu0 0
        %1775 = vmatprep.subr.bf16.mxu0 0
        %1776 = vmatpush1.bf16.msra.mxu0 0
        %1777 = vmatprep.subr.bf16.mxu0 0
        %1778 = vmatpush1.bf16.msra.mxu0 0
        %1779 = vmatprep.subr.bf16.mxu0 0
        %1780 = vmatpush1.bf16.msra.mxu0 0
        %1781 = vmatprep.subr.bf16.mxu0 0
        %1782 = vmatpush1.bf16.msra.mxu0 0
        %1783 = vmatprep.subr.bf16.mxu0 0
        %1784 = vmatpush1.bf16.msra.mxu0 0
        %1785 = vmatprep.subr.bf16.mxu0 0
        %1786 = vmatpush1.bf16.msra.mxu0 0
        %1787 = vmatprep.subr.bf16.mxu0 0
        %1788 = vmatpush1.bf16.msra.mxu0 0
        %1789 = vmatprep.subr.bf16.mxu0 0
        %1790 = vmatpush1.bf16.msra.mxu0 0
        %1791 = vmatprep.subr.bf16.mxu0 0
        %1792 = vmatpush1.bf16.msra.mxu0 0
        %1793 = vmatprep.subr.bf16.mxu0 0
        %1794 = vmatpush1.bf16.msra.mxu0 0
        %1795 = vmatprep.mubr.bf16.mxu0 0
        %1796 = vmatmul.mubr.bf16.gmra.mrb[0].mxu0 %v1709
        %v1797 = vpop.f32.mrb[0].mxu0
        %v1798 = vadd.f32 0.0, %v1797
        %v1799 = vpop.f32.mrb[0].mxu0
        %v1800 = vpop.f32.mrb[0].mxu0
        %v1801 = vadd.f32 0.0, %v1800
        %v1802 = vpop.f32.mrb[0].mxu0
        %1803 = vdwg.mxu0
        %v1804 = vadd.f32 %v1682, %v1755
        %v1805 = vadd.f32 %v1683, %v1757
        %v1806 = vadd.f32 %v1684, %v1798
        %v1807 = vadd.f32 %v1685, %v1759
        %v1808 = vadd.f32 %v1686, %v1761
        %v1809 = vadd.f32 %v1687, %v1801
        %s1810 = scalar_lea.vmem %s4, 88
        %v1811 = vld [vmem:[%s1810] sm:$0xf]
        %v1812 = vld [vmem:[%s1810 + $0x4] sm:$0xf]
        %v1815 = vunpack.c.l.b16 %v1811
        %v1816 = vunpack.c.l.b16 %v1812
        %v1817 = vpack.c.b16 %v1816, %v1815
        %1818 = vrot.lane.b32.xlu0 %v594, 79
        %v1819 = vpop.permute.xlu0 %1818
        %1820 = vrot.lane.b32.xlu0 %v595, 79
        %v1821 = vpop.permute.xlu0 %1820
        %1822 = vrot.lane.b32.xlu0 %v596, 79
        %v1823 = vpop.permute.xlu0 %1822
        %1824 = vrot.lane.b32.xlu0 %v597, 79
        %v1825 = vpop.permute.xlu0 %1824
        %vm1826 = vcmask 646144
        %v1827 = vsel %vm1826, %v1819, %v1821
        %v1828 = vsel %vm1826, %v1821, %v1823
        %v1829 = vsel %vm1826, %v1823, %v1825
        %v1831 = vsel %vm267, %v1817, 0
        %v1834 = vsel %vm271, %v1827, 0
        %v1837 = vsel %vm271, %v1828, 0
        %v1840 = vsel %vm271, %v1829, 0
        %1842 = vmatprep.subr.bf16.mxu0 %v1837
        %1843 = vmatpush1.bf16.msra.mxu0 %v1834
        %1844 = vmatprep.subr.bf16.mxu0 0
        %1845 = vmatpush1.bf16.msra.mxu0 0
        %1846 = vmatprep.subr.bf16.mxu0 0
        %1847 = vmatpush1.bf16.msra.mxu0 0
        %1848 = vmatprep.subr.bf16.mxu0 0
        %1849 = vmatpush1.bf16.msra.mxu0 0
        %1850 = vmatprep.subr.bf16.mxu0 0
        %1851 = vmatpush1.bf16.msra.mxu0 0
        %1852 = vmatprep.subr.bf16.mxu0 0
        %1853 = vmatpush1.bf16.msra.mxu0 0
        %1854 = vmatprep.subr.bf16.mxu0 0
        %1855 = vmatpush1.bf16.msra.mxu0 0
        %1856 = vmatprep.subr.bf16.mxu0 0
        %1857 = vmatpush1.bf16.msra.mxu0 0
        %1858 = vmatprep.subr.bf16.mxu0 0
        %1859 = vmatpush1.bf16.msra.mxu0 0
        %1860 = vmatprep.subr.bf16.mxu0 0
        %1861 = vmatpush1.bf16.msra.mxu0 0
        %1862 = vmatprep.subr.bf16.mxu0 0
        %1863 = vmatpush1.bf16.msra.mxu0 0
        %1864 = vmatprep.subr.bf16.mxu0 0
        %1865 = vmatpush1.bf16.msra.mxu0 0
        %1866 = vmatprep.subr.bf16.mxu0 0
        %1867 = vmatpush1.bf16.msra.mxu0 0
        %1868 = vmatprep.subr.bf16.mxu0 0
        %1869 = vmatpush1.bf16.msra.mxu0 0
        %1870 = vmatprep.subr.bf16.mxu0 0
        %1871 = vmatpush1.bf16.msra.mxu0 0
        %1872 = vmatprep.subr.bf16.mxu0 0
        %1873 = vmatpush1.bf16.msra.mxu0 0
        %1874 = vmatprep.mubr.bf16.mxu0 0
        %1875 = vmatmul.mubr.bf16.gmra.mrb[0].mxu0 %v1831
        %v1876 = vpop.f32.mrb[0].mxu0
        %v1877 = vadd.f32 0.0, %v1876
        %v1878 = vpop.f32.mrb[0].mxu0
        %v1879 = vadd.f32 0.0, %v1878
        %v1880 = vpop.f32.mrb[0].mxu0
        %v1881 = vadd.f32 0.0, %v1880
        %v1882 = vpop.f32.mrb[0].mxu0
        %v1883 = vadd.f32 0.0, %v1882
        %1884 = vdwg.mxu0
        %1885 = vmatprep.subr.bf16.mxu0 0
        %1886 = vmatpush1.bf16.msra.mxu0 %v1840
        %1887 = vmatprep.subr.bf16.mxu0 0
        %1888 = vmatpush1.bf16.msra.mxu0 0
        %1889 = vmatprep.subr.bf16.mxu0 0
        %1890 = vmatpush1.bf16.msra.mxu0 0
        %1891 = vmatprep.subr.bf16.mxu0 0
        %1892 = vmatpush1.bf16.msra.mxu0 0
        %1893 = vmatprep.subr.bf16.mxu0 0
        %1894 = vmatpush1.bf16.msra.mxu0 0
        %1895 = vmatprep.subr.bf16.mxu0 0
        %1896 = vmatpush1.bf16.msra.mxu0 0
        %1897 = vmatprep.subr.bf16.mxu0 0
        %1898 = vmatpush1.bf16.msra.mxu0 0
        %1899 = vmatprep.subr.bf16.mxu0 0
        %1900 = vmatpush1.bf16.msra.mxu0 0
        %1901 = vmatprep.subr.bf16.mxu0 0
        %1902 = vmatpush1.bf16.msra.mxu0 0
        %1903 = vmatprep.subr.bf16.mxu0 0
        %1904 = vmatpush1.bf16.msra.mxu0 0
        %1905 = vmatprep.subr.bf16.mxu0 0
        %1906 = vmatpush1.bf16.msra.mxu0 0
        %1907 = vmatprep.subr.bf16.mxu0 0
        %1908 = vmatpush1.bf16.msra.mxu0 0
        %1909 = vmatprep.subr.bf16.mxu0 0
        %1910 = vmatpush1.bf16.msra.mxu0 0
        %1911 = vmatprep.subr.bf16.mxu0 0
        %1912 = vmatpush1.bf16.msra.mxu0 0
        %1913 = vmatprep.subr.bf16.mxu0 0
        %1914 = vmatpush1.bf16.msra.mxu0 0
        %1915 = vmatprep.subr.bf16.mxu0 0
        %1916 = vmatpush1.bf16.msra.mxu0 0
        %1917 = vmatprep.mubr.bf16.mxu0 0
        %1918 = vmatmul.mubr.bf16.gmra.mrb[0].mxu0 %v1831
        %v1919 = vpop.f32.mrb[0].mxu0
        %v1920 = vadd.f32 0.0, %v1919
        %v1921 = vpop.f32.mrb[0].mxu0
        %v1922 = vpop.f32.mrb[0].mxu0
        %v1923 = vadd.f32 0.0, %v1922
        %v1924 = vpop.f32.mrb[0].mxu0
        %1925 = vdwg.mxu0
        %v1926 = vadd.f32 %v1804, %v1877
        %v1927 = vadd.f32 %v1805, %v1879
        %v1928 = vadd.f32 %v1806, %v1920
        %v1929 = vadd.f32 %v1807, %v1881
        %v1930 = vadd.f32 %v1808, %v1883
        %v1931 = vadd.f32 %v1809, %v1923
        %s1932 = scalar_lea.vmem %s4, 96
        %v1933 = vld [vmem:[%s1932] sm:$0xf]
        %v1934 = vld [vmem:[%s1932 + $0x4] sm:$0xf]
        %v1937 = vunpack.c.l.b16 %v1933
        %v1938 = vunpack.c.l.b16 %v1934
        %v1939 = vpack.c.b16 %v1938, %v1937
        %1940 = vrot.lane.b32.xlu0 %v594, 78
        %v1941 = vpop.permute.xlu0 %1940
        %1942 = vrot.lane.b32.xlu0 %v595, 78
        %v1943 = vpop.permute.xlu0 %1942
        %1944 = vrot.lane.b32.xlu0 %v596, 78
        %v1945 = vpop.permute.xlu0 %1944
        %1946 = vrot.lane.b32.xlu0 %v597, 78
        %v1947 = vpop.permute.xlu0 %1946
        %vm1948 = vcmask 637952
        %v1949 = vsel %vm1948, %v1941, %v1943
        %v1950 = vsel %vm1948, %v1943, %v1945
        %v1951 = vsel %vm1948, %v1945, %v1947
        %v1953 = vsel %vm267, %v1939, 0
        %v1956 = vsel %vm271, %v1949, 0
        %v1959 = vsel %vm271, %v1950, 0
        %v1962 = vsel %vm271, %v1951, 0
        %1964 = vmatprep.subr.bf16.mxu0 %v1959
        %1965 = vmatpush1.bf16.msra.mxu0 %v1956
        %1966 = vmatprep.subr.bf16.mxu0 0
        %1967 = vmatpush1.bf16.msra.mxu0 0
        %1968 = vmatprep.subr.bf16.mxu0 0
        %1969 = vmatpush1.bf16.msra.mxu0 0
        %1970 = vmatprep.subr.bf16.mxu0 0
        %1971 = vmatpush1.bf16.msra.mxu0 0
        %1972 = vmatprep.subr.bf16.mxu0 0
        %1973 = vmatpush1.bf16.msra.mxu0 0
        %1974 = vmatprep.subr.bf16.mxu0 0
        %1975 = vmatpush1.bf16.msra.mxu0 0
        %1976 = vmatprep.subr.bf16.mxu0 0
        %1977 = vmatpush1.bf16.msra.mxu0 0
        %1978 = vmatprep.subr.bf16.mxu0 0
        %1979 = vmatpush1.bf16.msra.mxu0 0
        %1980 = vmatprep.subr.bf16.mxu0 0
        %1981 = vmatpush1.bf16.msra.mxu0 0
        %1982 = vmatprep.subr.bf16.mxu0 0
        %1983 = vmatpush1.bf16.msra.mxu0 0
        %1984 = vmatprep.subr.bf16.mxu0 0
        %1985 = vmatpush1.bf16.msra.mxu0 0
        %1986 = vmatprep.subr.bf16.mxu0 0
        %1987 = vmatpush1.bf16.msra.mxu0 0
        %1988 = vmatprep.subr.bf16.mxu0 0
        %1989 = vmatpush1.bf16.msra.mxu0 0
        %1990 = vmatprep.subr.bf16.mxu0 0
        %1991 = vmatpush1.bf16.msra.mxu0 0
        %1992 = vmatprep.subr.bf16.mxu0 0
        %1993 = vmatpush1.bf16.msra.mxu0 0
        %1994 = vmatprep.subr.bf16.mxu0 0
        %1995 = vmatpush1.bf16.msra.mxu0 0
        %1996 = vmatprep.mubr.bf16.mxu0 0
        %1997 = vmatmul.mubr.bf16.gmra.mrb[0].mxu0 %v1953
        %v1998 = vpop.f32.mrb[0].mxu0
        %v1999 = vadd.f32 0.0, %v1998
        %v2000 = vpop.f32.mrb[0].mxu0
        %v2001 = vadd.f32 0.0, %v2000
        %v2002 = vpop.f32.mrb[0].mxu0
        %v2003 = vadd.f32 0.0, %v2002
        %v2004 = vpop.f32.mrb[0].mxu0
        %v2005 = vadd.f32 0.0, %v2004
        %2006 = vdwg.mxu0
        %2007 = vmatprep.subr.bf16.mxu0 0
        %2008 = vmatpush1.bf16.msra.mxu0 %v1962
        %2009 = vmatprep.subr.bf16.mxu0 0
        %2010 = vmatpush1.bf16.msra.mxu0 0
        %2011 = vmatprep.subr.bf16.mxu0 0
        %2012 = vmatpush1.bf16.msra.mxu0 0
        %2013 = vmatprep.subr.bf16.mxu0 0
        %2014 = vmatpush1.bf16.msra.mxu0 0
        %2015 = vmatprep.subr.bf16.mxu0 0
        %2016 = vmatpush1.bf16.msra.mxu0 0
        %2017 = vmatprep.subr.bf16.mxu0 0
        %2018 = vmatpush1.bf16.msra.mxu0 0
        %2019 = vmatprep.subr.bf16.mxu0 0
        %2020 = vmatpush1.bf16.msra.mxu0 0
        %2021 = vmatprep.subr.bf16.mxu0 0
        %2022 = vmatpush1.bf16.msra.mxu0 0
        %2023 = vmatprep.subr.bf16.mxu0 0
        %2024 = vmatpush1.bf16.msra.mxu0 0
        %2025 = vmatprep.subr.bf16.mxu0 0
        %2026 = vmatpush1.bf16.msra.mxu0 0
        %2027 = vmatprep.subr.bf16.mxu0 0
        %2028 = vmatpush1.bf16.msra.mxu0 0
        %2029 = vmatprep.subr.bf16.mxu0 0
        %2030 = vmatpush1.bf16.msra.mxu0 0
        %2031 = vmatprep.subr.bf16.mxu0 0
        %2032 = vmatpush1.bf16.msra.mxu0 0
        %2033 = vmatprep.subr.bf16.mxu0 0
        %2034 = vmatpush1.bf16.msra.mxu0 0
        %2035 = vmatprep.subr.bf16.mxu0 0
        %2036 = vmatpush1.bf16.msra.mxu0 0
        %2037 = vmatprep.subr.bf16.mxu0 0
        %2038 = vmatpush1.bf16.msra.mxu0 0
        %2039 = vmatprep.mubr.bf16.mxu0 0
        %2040 = vmatmul.mubr.bf16.gmra.mrb[0].mxu0 %v1953
        %v2041 = vpop.f32.mrb[0].mxu0
        %v2042 = vadd.f32 0.0, %v2041
        %v2043 = vpop.f32.mrb[0].mxu0
        %v2044 = vpop.f32.mrb[0].mxu0
        %v2045 = vadd.f32 0.0, %v2044
        %v2046 = vpop.f32.mrb[0].mxu0
        %2047 = vdwg.mxu0
        %v2048 = vadd.f32 %v1926, %v1999
        %v2049 = vadd.f32 %v1927, %v2001
        %v2050 = vadd.f32 %v1928, %v2042
        %v2051 = vadd.f32 %v1929, %v2003
        %v2052 = vadd.f32 %v1930, %v2005
        %v2053 = vadd.f32 %v1931, %v2045
        %s2054 = scalar_lea.vmem %s4, 104
        %v2055 = vld [vmem:[%s2054] sm:$0xf]
        %v2056 = vld [vmem:[%s2054 + $0x4] sm:$0xf]
        %v2059 = vunpack.c.l.b16 %v2055
        %v2060 = vunpack.c.l.b16 %v2056
        %v2061 = vpack.c.b16 %v2060, %v2059
        %2062 = vrot.lane.b32.xlu0 %v594, 77
        %v2063 = vpop.permute.xlu0 %2062
        %2064 = vrot.lane.b32.xlu0 %v595, 77
        %v2065 = vpop.permute.xlu0 %2064
        %2066 = vrot.lane.b32.xlu0 %v596, 77
        %v2067 = vpop.permute.xlu0 %2066
        %2068 = vrot.lane.b32.xlu0 %v597, 77
        %v2069 = vpop.permute.xlu0 %2068
        %vm2070 = vcmask 629760
        %v2071 = vsel %vm2070, %v2063, %v2065
        %v2072 = vsel %vm2070, %v2065, %v2067
        %v2073 = vsel %vm2070, %v2067, %v2069
        %v2075 = vsel %vm267, %v2061, 0
        %v2078 = vsel %vm271, %v2071, 0
        %v2081 = vsel %vm271, %v2072, 0
        %v2084 = vsel %vm271, %v2073, 0
        %2086 = vmatprep.subr.bf16.mxu0 %v2081
        %2087 = vmatpush1.bf16.msra.mxu0 %v2078
        %2088 = vmatprep.subr.bf16.mxu0 0
        %2089 = vmatpush1.bf16.msra.mxu0 0
        %2090 = vmatprep.subr.bf16.mxu0 0
        %2091 = vmatpush1.bf16.msra.mxu0 0
        %2092 = vmatprep.subr.bf16.mxu0 0
        %2093 = vmatpush1.bf16.msra.mxu0 0
        %2094 = vmatprep.subr.bf16.mxu0 0
        %2095 = vmatpush1.bf16.msra.mxu0 0
        %2096 = vmatprep.subr.bf16.mxu0 0
        %2097 = vmatpush1.bf16.msra.mxu0 0
        %2098 = vmatprep.subr.bf16.mxu0 0
        %2099 = vmatpush1.bf16.msra.mxu0 0
        %2100 = vmatprep.subr.bf16.mxu0 0
        %2101 = vmatpush1.bf16.msra.mxu0 0
        %2102 = vmatprep.subr.bf16.mxu0 0
        %2103 = vmatpush1.bf16.msra.mxu0 0
        %2104 = vmatprep.subr.bf16.mxu0 0
        %2105 = vmatpush1.bf16.msra.mxu0 0
        %2106 = vmatprep.subr.bf16.mxu0 0
        %2107 = vmatpush1.bf16.msra.mxu0 0
        %2108 = vmatprep.subr.bf16.mxu0 0
        %2109 = vmatpush1.bf16.msra.mxu0 0
        %2110 = vmatprep.subr.bf16.mxu0 0
        %2111 = vmatpush1.bf16.msra.mxu0 0
        %2112 = vmatprep.subr.bf16.mxu0 0
        %2113 = vmatpush1.bf16.msra.mxu0 0
        %2114 = vmatprep.subr.bf16.mxu0 0
        %2115 = vmatpush1.bf16.msra.mxu0 0
        %2116 = vmatprep.subr.bf16.mxu0 0
        %2117 = vmatpush1.bf16.msra.mxu0 0
        %2118 = vmatprep.mubr.bf16.mxu0 0
        %2119 = vmatmul.mubr.bf16.gmra.mrb[0].mxu0 %v2075
        %v2120 = vpop.f32.mrb[0].mxu0
        %v2121 = vadd.f32 0.0, %v2120
        %v2122 = vpop.f32.mrb[0].mxu0
        %v2123 = vadd.f32 0.0, %v2122
        %v2124 = vpop.f32.mrb[0].mxu0
        %v2125 = vadd.f32 0.0, %v2124
        %v2126 = vpop.f32.mrb[0].mxu0
        %v2127 = vadd.f32 0.0, %v2126
        %2128 = vdwg.mxu0
        %2129 = vmatprep.subr.bf16.mxu0 0
        %2130 = vmatpush1.bf16.msra.mxu0 %v2084
        %2131 = vmatprep.subr.bf16.mxu0 0
        %2132 = vmatpush1.bf16.msra.mxu0 0
        %2133 = vmatprep.subr.bf16.mxu0 0
        %2134 = vmatpush1.bf16.msra.mxu0 0
        %2135 = vmatprep.subr.bf16.mxu0 0
        %2136 = vmatpush1.bf16.msra.mxu0 0
        %2137 = vmatprep.subr.bf16.mxu0 0
        %2138 = vmatpush1.bf16.msra.mxu0 0
        %2139 = vmatprep.subr.bf16.mxu0 0
        %2140 = vmatpush1.bf16.msra.mxu0 0
        %2141 = vmatprep.subr.bf16.mxu0 0
        %2142 = vmatpush1.bf16.msra.mxu0 0
        %2143 = vmatprep.subr.bf16.mxu0 0
        %2144 = vmatpush1.bf16.msra.mxu0 0
        %2145 = vmatprep.subr.bf16.mxu0 0
        %2146 = vmatpush1.bf16.msra.mxu0 0
        %2147 = vmatprep.subr.bf16.mxu0 0
        %2148 = vmatpush1.bf16.msra.mxu0 0
        %2149 = vmatprep.subr.bf16.mxu0 0
        %2150 = vmatpush1.bf16.msra.mxu0 0
        %2151 = vmatprep.subr.bf16.mxu0 0
        %2152 = vmatpush1.bf16.msra.mxu0 0
        %2153 = vmatprep.subr.bf16.mxu0 0
        %2154 = vmatpush1.bf16.msra.mxu0 0
        %2155 = vmatprep.subr.bf16.mxu0 0
        %2156 = vmatpush1.bf16.msra.mxu0 0
        %2157 = vmatprep.subr.bf16.mxu0 0
        %2158 = vmatpush1.bf16.msra.mxu0 0
        %2159 = vmatprep.subr.bf16.mxu0 0
        %2160 = vmatpush1.bf16.msra.mxu0 0
        %2161 = vmatprep.mubr.bf16.mxu0 0
        %2162 = vmatmul.mubr.bf16.gmra.mrb[0].mxu0 %v2075
        %v2163 = vpop.f32.mrb[0].mxu0
        %v2164 = vadd.f32 0.0, %v2163
        %v2165 = vpop.f32.mrb[0].mxu0
        %v2166 = vpop.f32.mrb[0].mxu0
        %v2167 = vadd.f32 0.0, %v2166
        %v2168 = vpop.f32.mrb[0].mxu0
        %2169 = vdwg.mxu0
        %v2170 = vadd.f32 %v2048, %v2121
        %v2171 = vadd.f32 %v2049, %v2123
        %v2172 = vadd.f32 %v2050, %v2164
        %v2173 = vadd.f32 %v2051, %v2125
        %v2174 = vadd.f32 %v2052, %v2127
        %v2175 = vadd.f32 %v2053, %v2167
        %s2176 = scalar_lea.vmem %s4, 112
        %v2177 = vld [vmem:[%s2176] sm:$0xf]
        %v2178 = vld [vmem:[%s2176 + $0x4] sm:$0xf]
        %v2181 = vunpack.c.l.b16 %v2177
        %v2182 = vunpack.c.l.b16 %v2178
        %v2183 = vpack.c.b16 %v2182, %v2181
        %2184 = vrot.lane.b32.xlu0 %v594, 76
        %v2185 = vpop.permute.xlu0 %2184
        %2186 = vrot.lane.b32.xlu0 %v595, 76
        %v2187 = vpop.permute.xlu0 %2186
        %2188 = vrot.lane.b32.xlu0 %v596, 76
        %v2189 = vpop.permute.xlu0 %2188
        %2190 = vrot.lane.b32.xlu0 %v597, 76
        %v2191 = vpop.permute.xlu0 %2190
        %vm2192 = vcmask 621568
        %v2193 = vsel %vm2192, %v2185, %v2187
        %v2194 = vsel %vm2192, %v2187, %v2189
        %v2195 = vsel %vm2192, %v2189, %v2191
        %v2197 = vsel %vm267, %v2183, 0
        %v2200 = vsel %vm271, %v2193, 0
        %v2203 = vsel %vm271, %v2194, 0
        %v2206 = vsel %vm271, %v2195, 0
        %2208 = vmatprep.subr.bf16.mxu0 %v2203
        %2209 = vmatpush1.bf16.msra.mxu0 %v2200
        %2210 = vmatprep.subr.bf16.mxu0 0
        %2211 = vmatpush1.bf16.msra.mxu0 0
        %2212 = vmatprep.subr.bf16.mxu0 0
        %2213 = vmatpush1.bf16.msra.mxu0 0
        %2214 = vmatprep.subr.bf16.mxu0 0
        %2215 = vmatpush1.bf16.msra.mxu0 0
        %2216 = vmatprep.subr.bf16.mxu0 0
        %2217 = vmatpush1.bf16.msra.mxu0 0
        %2218 = vmatprep.subr.bf16.mxu0 0
        %2219 = vmatpush1.bf16.msra.mxu0 0
        %2220 = vmatprep.subr.bf16.mxu0 0
        %2221 = vmatpush1.bf16.msra.mxu0 0
        %2222 = vmatprep.subr.bf16.mxu0 0
        %2223 = vmatpush1.bf16.msra.mxu0 0
        %2224 = vmatprep.subr.bf16.mxu0 0
        %2225 = vmatpush1.bf16.msra.mxu0 0
        %2226 = vmatprep.subr.bf16.mxu0 0
        %2227 = vmatpush1.bf16.msra.mxu0 0
        %2228 = vmatprep.subr.bf16.mxu0 0
        %2229 = vmatpush1.bf16.msra.mxu0 0
        %2230 = vmatprep.subr.bf16.mxu0 0
        %2231 = vmatpush1.bf16.msra.mxu0 0
        %2232 = vmatprep.subr.bf16.mxu0 0
        %2233 = vmatpush1.bf16.msra.mxu0 0
        %2234 = vmatprep.subr.bf16.mxu0 0
        %2235 = vmatpush1.bf16.msra.mxu0 0
        %2236 = vmatprep.subr.bf16.mxu0 0
        %2237 = vmatpush1.bf16.msra.mxu0 0
        %2238 = vmatprep.subr.bf16.mxu0 0
        %2239 = vmatpush1.bf16.msra.mxu0 0
        %2240 = vmatprep.mubr.bf16.mxu0 0
        %2241 = vmatmul.mubr.bf16.gmra.mrb[0].mxu0 %v2197
        %v2242 = vpop.f32.mrb[0].mxu0
        %v2243 = vadd.f32 0.0, %v2242
        %v2244 = vpop.f32.mrb[0].mxu0
        %v2245 = vadd.f32 0.0, %v2244
        %v2246 = vpop.f32.mrb[0].mxu0
        %v2247 = vadd.f32 0.0, %v2246
        %v2248 = vpop.f32.mrb[0].mxu0
        %v2249 = vadd.f32 0.0, %v2248
        %2250 = vdwg.mxu0
        %2251 = vmatprep.subr.bf16.mxu0 0
        %2252 = vmatpush1.bf16.msra.mxu0 %v2206
        %2253 = vmatprep.subr.bf16.mxu0 0
        %2254 = vmatpush1.bf16.msra.mxu0 0
        %2255 = vmatprep.subr.bf16.mxu0 0
        %2256 = vmatpush1.bf16.msra.mxu0 0
        %2257 = vmatprep.subr.bf16.mxu0 0
        %2258 = vmatpush1.bf16.msra.mxu0 0
        %2259 = vmatprep.subr.bf16.mxu0 0
        %2260 = vmatpush1.bf16.msra.mxu0 0
        %2261 = vmatprep.subr.bf16.mxu0 0
        %2262 = vmatpush1.bf16.msra.mxu0 0
        %2263 = vmatprep.subr.bf16.mxu0 0
        %2264 = vmatpush1.bf16.msra.mxu0 0
        %2265 = vmatprep.subr.bf16.mxu0 0
        %2266 = vmatpush1.bf16.msra.mxu0 0
        %2267 = vmatprep.subr.bf16.mxu0 0
        %2268 = vmatpush1.bf16.msra.mxu0 0
        %2269 = vmatprep.subr.bf16.mxu0 0
        %2270 = vmatpush1.bf16.msra.mxu0 0
        %2271 = vmatprep.subr.bf16.mxu0 0
        %2272 = vmatpush1.bf16.msra.mxu0 0
        %2273 = vmatprep.subr.bf16.mxu0 0
        %2274 = vmatpush1.bf16.msra.mxu0 0
        %2275 = vmatprep.subr.bf16.mxu0 0
        %2276 = vmatpush1.bf16.msra.mxu0 0
        %2277 = vmatprep.subr.bf16.mxu0 0
        %2278 = vmatpush1.bf16.msra.mxu0 0
        %2279 = vmatprep.subr.bf16.mxu0 0
        %2280 = vmatpush1.bf16.msra.mxu0 0
        %2281 = vmatprep.subr.bf16.mxu0 0
        %2282 = vmatpush1.bf16.msra.mxu0 0
        %2283 = vmatprep.mubr.bf16.mxu0 0
        %2284 = vmatmul.mubr.bf16.gmra.mrb[0].mxu0 %v2197
        %v2285 = vpop.f32.mrb[0].mxu0
        %v2286 = vadd.f32 0.0, %v2285
        %v2287 = vpop.f32.mrb[0].mxu0
        %v2288 = vpop.f32.mrb[0].mxu0
        %v2289 = vadd.f32 0.0, %v2288
        %v2290 = vpop.f32.mrb[0].mxu0
        %2291 = vdwg.mxu0
        %v2292 = vadd.f32 %v2170, %v2243
        %v2293 = vadd.f32 %v2171, %v2245
        %v2294 = vadd.f32 %v2172, %v2286
        %v2295 = vadd.f32 %v2173, %v2247
        %v2296 = vadd.f32 %v2174, %v2249
        %v2297 = vadd.f32 %v2175, %v2289
        %s2298 = scalar_lea.vmem %s4, 120
        %v2299 = vld [vmem:[%s2298] sm:$0xf]
        %v2300 = vld [vmem:[%s2298 + $0x4] sm:$0xf]
        %v2303 = vunpack.c.l.b16 %v2299
        %v2304 = vunpack.c.l.b16 %v2300
        %v2305 = vpack.c.b16 %v2304, %v2303
        %2306 = vrot.lane.b32.xlu0 %v594, 56
        %v2307 = vpop.permute.xlu0 %2306
        %2308 = vrot.lane.b32.xlu0 %v595, 56
        %v2309 = vpop.permute.xlu0 %2308
        %2310 = vrot.lane.b32.xlu0 %v596, 56
        %v2311 = vpop.permute.xlu0 %2310
        %2312 = vrot.lane.b32.xlu0 %v597, 56
        %v2313 = vpop.permute.xlu0 %2312
        %vm2314 = vcmask 457728
        %v2315 = vsel %vm2314, %v2307, %v2309
        %v2316 = vsel %vm2314, %v2309, %v2311
        %v2317 = vsel %vm2314, %v2311, %v2313
        %v2319 = vsel %vm267, %v2305, 0
        %v2322 = vsel %vm271, %v2315, 0
        %v2325 = vsel %vm271, %v2316, 0
        %v2328 = vsel %vm271, %v2317, 0
        %2330 = vmatprep.subr.bf16.mxu0 %v2325
        %2331 = vmatpush1.bf16.msra.mxu0 %v2322
        %2332 = vmatprep.subr.bf16.mxu0 0
        %2333 = vmatpush1.bf16.msra.mxu0 0
        %2334 = vmatprep.subr.bf16.mxu0 0
        %2335 = vmatpush1.bf16.msra.mxu0 0
        %2336 = vmatprep.subr.bf16.mxu0 0
        %2337 = vmatpush1.bf16.msra.mxu0 0
        %2338 = vmatprep.subr.bf16.mxu0 0
        %2339 = vmatpush1.bf16.msra.mxu0 0
        %2340 = vmatprep.subr.bf16.mxu0 0
        %2341 = vmatpush1.bf16.msra.mxu0 0
        %2342 = vmatprep.subr.bf16.mxu0 0
        %2343 = vmatpush1.bf16.msra.mxu0 0
        %2344 = vmatprep.subr.bf16.mxu0 0
        %2345 = vmatpush1.bf16.msra.mxu0 0
        %2346 = vmatprep.subr.bf16.mxu0 0
        %2347 = vmatpush1.bf16.msra.mxu0 0
        %2348 = vmatprep.subr.bf16.mxu0 0
        %2349 = vmatpush1.bf16.msra.mxu0 0
        %2350 = vmatprep.subr.bf16.mxu0 0
        %2351 = vmatpush1.bf16.msra.mxu0 0
        %2352 = vmatprep.subr.bf16.mxu0 0
        %2353 = vmatpush1.bf16.msra.mxu0 0
        %2354 = vmatprep.subr.bf16.mxu0 0
        %2355 = vmatpush1.bf16.msra.mxu0 0
        %2356 = vmatprep.subr.bf16.mxu0 0
        %2357 = vmatpush1.bf16.msra.mxu0 0
        %2358 = vmatprep.subr.bf16.mxu0 0
        %2359 = vmatpush1.bf16.msra.mxu0 0
        %2360 = vmatprep.subr.bf16.mxu0 0
        %2361 = vmatpush1.bf16.msra.mxu0 0
        %2362 = vmatprep.mubr.bf16.mxu0 0
        %2363 = vmatmul.mubr.bf16.gmra.mrb[0].mxu0 %v2319
        %v2364 = vpop.f32.mrb[0].mxu0
        %v2365 = vadd.f32 0.0, %v2364
        %v2366 = vpop.f32.mrb[0].mxu0
        %v2367 = vadd.f32 0.0, %v2366
        %v2368 = vpop.f32.mrb[0].mxu0
        %v2369 = vadd.f32 0.0, %v2368
        %v2370 = vpop.f32.mrb[0].mxu0
        %v2371 = vadd.f32 0.0, %v2370
        %2372 = vdwg.mxu0
        %2373 = vmatprep.subr.bf16.mxu0 0
        %2374 = vmatpush1.bf16.msra.mxu0 %v2328
        %2375 = vmatprep.subr.bf16.mxu0 0
        %2376 = vmatpush1.bf16.msra.mxu0 0
        %2377 = vmatprep.subr.bf16.mxu0 0
        %2378 = vmatpush1.bf16.msra.mxu0 0
        %2379 = vmatprep.subr.bf16.mxu0 0
        %2380 = vmatpush1.bf16.msra.mxu0 0
        %2381 = vmatprep.subr.bf16.mxu0 0
        %2382 = vmatpush1.bf16.msra.mxu0 0
        %2383 = vmatprep.subr.bf16.mxu0 0
        %2384 = vmatpush1.bf16.msra.mxu0 0
        %2385 = vmatprep.subr.bf16.mxu0 0
        %2386 = vmatpush1.bf16.msra.mxu0 0
        %2387 = vmatprep.subr.bf16.mxu0 0
        %2388 = vmatpush1.bf16.msra.mxu0 0
        %2389 = vmatprep.subr.bf16.mxu0 0
        %2390 = vmatpush1.bf16.msra.mxu0 0
        %2391 = vmatprep.subr.bf16.mxu0 0
        %2392 = vmatpush1.bf16.msra.mxu0 0
        %2393 = vmatprep.subr.bf16.mxu0 0
        %2394 = vmatpush1.bf16.msra.mxu0 0
        %2395 = vmatprep.subr.bf16.mxu0 0
        %2396 = vmatpush1.bf16.msra.mxu0 0
        %2397 = vmatprep.subr.bf16.mxu0 0
        %2398 = vmatpush1.bf16.msra.mxu0 0
        %2399 = vmatprep.subr.bf16.mxu0 0
        %2400 = vmatpush1.bf16.msra.mxu0 0
        %2401 = vmatprep.subr.bf16.mxu0 0
        %2402 = vmatpush1.bf16.msra.mxu0 0
        %2403 = vmatprep.subr.bf16.mxu0 0
        %2404 = vmatpush1.bf16.msra.mxu0 0
        %2405 = vmatprep.mubr.bf16.mxu0 0
        %2406 = vmatmul.mubr.bf16.gmra.mrb[0].mxu0 %v2319
        %v2407 = vpop.f32.mrb[0].mxu0
        %v2408 = vadd.f32 0.0, %v2407
        %v2409 = vpop.f32.mrb[0].mxu0
        %v2410 = vpop.f32.mrb[0].mxu0
        %v2411 = vadd.f32 0.0, %v2410
        %v2412 = vpop.f32.mrb[0].mxu0
        %2413 = vdwg.mxu0
        %v2414 = vadd.f32 %v2292, %v2365
        %v2415 = vadd.f32 %v2293, %v2367
        %v2416 = vadd.f32 %v2294, %v2408
        %v2417 = vadd.f32 %v2295, %v2369
        %v2418 = vadd.f32 %v2296, %v2371
        %v2419 = vadd.f32 %v2297, %v2411
        %s2420 = scalar_lea.vmem %s4, 128
        %v2421 = vld [vmem:[%s2420] sm:$0xf]
        %v2422 = vld [vmem:[%s2420 + $0x4] sm:$0xf]
        %v2425 = vunpack.c.l.b16 %v2421
        %v2426 = vunpack.c.l.b16 %v2422
        %v2427 = vpack.c.b16 %v2426, %v2425
        %2428 = vrot.lane.b32.xlu0 %v594, 55
        %v2429 = vpop.permute.xlu0 %2428
        %2430 = vrot.lane.b32.xlu0 %v595, 55
        %v2431 = vpop.permute.xlu0 %2430
        %2432 = vrot.lane.b32.xlu0 %v596, 55
        %v2433 = vpop.permute.xlu0 %2432
        %2434 = vrot.lane.b32.xlu0 %v597, 55
        %v2435 = vpop.permute.xlu0 %2434
        %vm2436 = vcmask 449536
        %v2437 = vsel %vm2436, %v2429, %v2431
        %v2438 = vsel %vm2436, %v2431, %v2433
        %v2439 = vsel %vm2436, %v2433, %v2435
        %v2441 = vsel %vm267, %v2427, 0
        %v2444 = vsel %vm271, %v2437, 0
        %v2447 = vsel %vm271, %v2438, 0
        %v2450 = vsel %vm271, %v2439, 0
        %2452 = vmatprep.subr.bf16.mxu0 %v2447
        %2453 = vmatpush1.bf16.msra.mxu0 %v2444
        %2454 = vmatprep.subr.bf16.mxu0 0
        %2455 = vmatpush1.bf16.msra.mxu0 0
        %2456 = vmatprep.subr.bf16.mxu0 0
        %2457 = vmatpush1.bf16.msra.mxu0 0
        %2458 = vmatprep.subr.bf16.mxu0 0
        %2459 = vmatpush1.bf16.msra.mxu0 0
        %2460 = vmatprep.subr.bf16.mxu0 0
        %2461 = vmatpush1.bf16.msra.mxu0 0
        %2462 = vmatprep.subr.bf16.mxu0 0
        %2463 = vmatpush1.bf16.msra.mxu0 0
        %2464 = vmatprep.subr.bf16.mxu0 0
        %2465 = vmatpush1.bf16.msra.mxu0 0
        %2466 = vmatprep.subr.bf16.mxu0 0
        %2467 = vmatpush1.bf16.msra.mxu0 0
        %2468 = vmatprep.subr.bf16.mxu0 0
        %2469 = vmatpush1.bf16.msra.mxu0 0
        %2470 = vmatprep.subr.bf16.mxu0 0
        %2471 = vmatpush1.bf16.msra.mxu0 0
        %2472 = vmatprep.subr.bf16.mxu0 0
        %2473 = vmatpush1.bf16.msra.mxu0 0
        %2474 = vmatprep.subr.bf16.mxu0 0
        %2475 = vmatpush1.bf16.msra.mxu0 0
        %2476 = vmatprep.subr.bf16.mxu0 0
        %2477 = vmatpush1.bf16.msra.mxu0 0
        %2478 = vmatprep.subr.bf16.mxu0 0
        %2479 = vmatpush1.bf16.msra.mxu0 0
        %2480 = vmatprep.subr.bf16.mxu0 0
        %2481 = vmatpush1.bf16.msra.mxu0 0
        %2482 = vmatprep.subr.bf16.mxu0 0
        %2483 = vmatpush1.bf16.msra.mxu0 0
        %2484 = vmatprep.mubr.bf16.mxu0 0
        %2485 = vmatmul.mubr.bf16.gmra.mrb[0].mxu0 %v2441
        %v2486 = vpop.f32.mrb[0].mxu0
        %v2487 = vadd.f32 0.0, %v2486
        %v2488 = vpop.f32.mrb[0].mxu0
        %v2489 = vadd.f32 0.0, %v2488
        %v2490 = vpop.f32.mrb[0].mxu0
        %v2491 = vadd.f32 0.0, %v2490
        %v2492 = vpop.f32.mrb[0].mxu0
        %v2493 = vadd.f32 0.0, %v2492
        %2494 = vdwg.mxu0
        %2495 = vmatprep.subr.bf16.mxu0 0
        %2496 = vmatpush1.bf16.msra.mxu0 %v2450
        %2497 = vmatprep.subr.bf16.mxu0 0
        %2498 = vmatpush1.bf16.msra.mxu0 0
        %2499 = vmatprep.subr.bf16.mxu0 0
        %2500 = vmatpush1.bf16.msra.mxu0 0
        %2501 = vmatprep.subr.bf16.mxu0 0
        %2502 = vmatpush1.bf16.msra.mxu0 0
        %2503 = vmatprep.subr.bf16.mxu0 0
        %2504 = vmatpush1.bf16.msra.mxu0 0
        %2505 = vmatprep.subr.bf16.mxu0 0
        %2506 = vmatpush1.bf16.msra.mxu0 0
        %2507 = vmatprep.subr.bf16.mxu0 0
        %2508 = vmatpush1.bf16.msra.mxu0 0
        %2509 = vmatprep.subr.bf16.mxu0 0
        %2510 = vmatpush1.bf16.msra.mxu0 0
        %2511 = vmatprep.subr.bf16.mxu0 0
        %2512 = vmatpush1.bf16.msra.mxu0 0
        %2513 = vmatprep.subr.bf16.mxu0 0
        %2514 = vmatpush1.bf16.msra.mxu0 0
        %2515 = vmatprep.subr.bf16.mxu0 0
        %2516 = vmatpush1.bf16.msra.mxu0 0
        %2517 = vmatprep.subr.bf16.mxu0 0
        %2518 = vmatpush1.bf16.msra.mxu0 0
        %2519 = vmatprep.subr.bf16.mxu0 0
        %2520 = vmatpush1.bf16.msra.mxu0 0
        %2521 = vmatprep.subr.bf16.mxu0 0
        %2522 = vmatpush1.bf16.msra.mxu0 0
        %2523 = vmatprep.subr.bf16.mxu0 0
        %2524 = vmatpush1.bf16.msra.mxu0 0
        %2525 = vmatprep.subr.bf16.mxu0 0
        %2526 = vmatpush1.bf16.msra.mxu0 0
        %2527 = vmatprep.mubr.bf16.mxu0 0
        %2528 = vmatmul.mubr.bf16.gmra.mrb[0].mxu0 %v2441
        %v2529 = vpop.f32.mrb[0].mxu0
        %v2530 = vadd.f32 0.0, %v2529
        %v2531 = vpop.f32.mrb[0].mxu0
        %v2532 = vpop.f32.mrb[0].mxu0
        %v2533 = vadd.f32 0.0, %v2532
        %v2534 = vpop.f32.mrb[0].mxu0
        %2535 = vdwg.mxu0
        %v2536 = vadd.f32 %v2414, %v2487
        %v2537 = vadd.f32 %v2415, %v2489
        %v2538 = vadd.f32 %v2416, %v2530
        %v2539 = vadd.f32 %v2417, %v2491
        %v2540 = vadd.f32 %v2418, %v2493
        %v2541 = vadd.f32 %v2419, %v2533
        %s2542 = scalar_lea.vmem %s4, 136
        %v2543 = vld [vmem:[%s2542] sm:$0xf]
        %v2544 = vld [vmem:[%s2542 + $0x4] sm:$0xf]
        %v2547 = vunpack.c.l.b16 %v2543
        %v2548 = vunpack.c.l.b16 %v2544
        %v2549 = vpack.c.b16 %v2548, %v2547
        %2550 = vrot.lane.b32.xlu0 %v594, 54
        %v2551 = vpop.permute.xlu0 %2550
        %2552 = vrot.lane.b32.xlu0 %v595, 54
        %v2553 = vpop.permute.xlu0 %2552
        %2554 = vrot.lane.b32.xlu0 %v596, 54
        %v2555 = vpop.permute.xlu0 %2554
        %2556 = vrot.lane.b32.xlu0 %v597, 54
        %v2557 = vpop.permute.xlu0 %2556
        %vm2558 = vcmask 441344
        %v2559 = vsel %vm2558, %v2551, %v2553
        %v2560 = vsel %vm2558, %v2553, %v2555
        %v2561 = vsel %vm2558, %v2555, %v2557
        %v2563 = vsel %vm267, %v2549, 0
        %v2566 = vsel %vm271, %v2559, 0
        %v2569 = vsel %vm271, %v2560, 0
        %v2572 = vsel %vm271, %v2561, 0
        %2574 = vmatprep.subr.bf16.mxu0 %v2569
        %2575 = vmatpush1.bf16.msra.mxu0 %v2566
        %2576 = vmatprep.subr.bf16.mxu0 0
        %2577 = vmatpush1.bf16.msra.mxu0 0
        %2578 = vmatprep.subr.bf16.mxu0 0
        %2579 = vmatpush1.bf16.msra.mxu0 0
        %2580 = vmatprep.subr.bf16.mxu0 0
        %2581 = vmatpush1.bf16.msra.mxu0 0
        %2582 = vmatprep.subr.bf16.mxu0 0
        %2583 = vmatpush1.bf16.msra.mxu0 0
        %2584 = vmatprep.subr.bf16.mxu0 0
        %2585 = vmatpush1.bf16.msra.mxu0 0
        %2586 = vmatprep.subr.bf16.mxu0 0
        %2587 = vmatpush1.bf16.msra.mxu0 0
        %2588 = vmatprep.subr.bf16.mxu0 0
        %2589 = vmatpush1.bf16.msra.mxu0 0
        %2590 = vmatprep.subr.bf16.mxu0 0
        %2591 = vmatpush1.bf16.msra.mxu0 0
        %2592 = vmatprep.subr.bf16.mxu0 0
        %2593 = vmatpush1.bf16.msra.mxu0 0
        %2594 = vmatprep.subr.bf16.mxu0 0
        %2595 = vmatpush1.bf16.msra.mxu0 0
        %2596 = vmatprep.subr.bf16.mxu0 0
        %2597 = vmatpush1.bf16.msra.mxu0 0
        %2598 = vmatprep.subr.bf16.mxu0 0
        %2599 = vmatpush1.bf16.msra.mxu0 0
        %2600 = vmatprep.subr.bf16.mxu0 0
        %2601 = vmatpush1.bf16.msra.mxu0 0
        %2602 = vmatprep.subr.bf16.mxu0 0
        %2603 = vmatpush1.bf16.msra.mxu0 0
        %2604 = vmatprep.subr.bf16.mxu0 0
        %2605 = vmatpush1.bf16.msra.mxu0 0
        %2606 = vmatprep.mubr.bf16.mxu0 0
        %2607 = vmatmul.mubr.bf16.gmra.mrb[0].mxu0 %v2563
        %v2608 = vpop.f32.mrb[0].mxu0
        %v2609 = vadd.f32 0.0, %v2608
        %v2610 = vpop.f32.mrb[0].mxu0
        %v2611 = vadd.f32 0.0, %v2610
        %v2612 = vpop.f32.mrb[0].mxu0
        %v2613 = vadd.f32 0.0, %v2612
        %v2614 = vpop.f32.mrb[0].mxu0
        %v2615 = vadd.f32 0.0, %v2614
        %2616 = vdwg.mxu0
        %2617 = vmatprep.subr.bf16.mxu0 0
        %2618 = vmatpush1.bf16.msra.mxu0 %v2572
        %2619 = vmatprep.subr.bf16.mxu0 0
        %2620 = vmatpush1.bf16.msra.mxu0 0
        %2621 = vmatprep.subr.bf16.mxu0 0
        %2622 = vmatpush1.bf16.msra.mxu0 0
        %2623 = vmatprep.subr.bf16.mxu0 0
        %2624 = vmatpush1.bf16.msra.mxu0 0
        %2625 = vmatprep.subr.bf16.mxu0 0
        %2626 = vmatpush1.bf16.msra.mxu0 0
        %2627 = vmatprep.subr.bf16.mxu0 0
        %2628 = vmatpush1.bf16.msra.mxu0 0
        %2629 = vmatprep.subr.bf16.mxu0 0
        %2630 = vmatpush1.bf16.msra.mxu0 0
        %2631 = vmatprep.subr.bf16.mxu0 0
        %2632 = vmatpush1.bf16.msra.mxu0 0
        %2633 = vmatprep.subr.bf16.mxu0 0
        %2634 = vmatpush1.bf16.msra.mxu0 0
        %2635 = vmatprep.subr.bf16.mxu0 0
        %2636 = vmatpush1.bf16.msra.mxu0 0
        %2637 = vmatprep.subr.bf16.mxu0 0
        %2638 = vmatpush1.bf16.msra.mxu0 0
        %2639 = vmatprep.subr.bf16.mxu0 0
        %2640 = vmatpush1.bf16.msra.mxu0 0
        %2641 = vmatprep.subr.bf16.mxu0 0
        %2642 = vmatpush1.bf16.msra.mxu0 0
        %2643 = vmatprep.subr.bf16.mxu0 0
        %2644 = vmatpush1.bf16.msra.mxu0 0
        %2645 = vmatprep.subr.bf16.mxu0 0
        %2646 = vmatpush1.bf16.msra.mxu0 0
        %2647 = vmatprep.subr.bf16.mxu0 0
        %2648 = vmatpush1.bf16.msra.mxu0 0
        %2649 = vmatprep.mubr.bf16.mxu0 0
        %2650 = vmatmul.mubr.bf16.gmra.mrb[0].mxu0 %v2563
        %v2651 = vpop.f32.mrb[0].mxu0
        %v2652 = vadd.f32 0.0, %v2651
        %v2653 = vpop.f32.mrb[0].mxu0
        %v2654 = vpop.f32.mrb[0].mxu0
        %v2655 = vadd.f32 0.0, %v2654
        %v2656 = vpop.f32.mrb[0].mxu0
        %2657 = vdwg.mxu0
        %v2658 = vadd.f32 %v2536, %v2609
        %v2659 = vadd.f32 %v2537, %v2611
        %v2660 = vadd.f32 %v2538, %v2652
        %v2661 = vadd.f32 %v2539, %v2613
        %v2662 = vadd.f32 %v2540, %v2615
        %v2663 = vadd.f32 %v2541, %v2655
        %s2664 = scalar_lea.vmem %s4, 144
        %v2665 = vld [vmem:[%s2664] sm:$0xf]
        %v2666 = vld [vmem:[%s2664 + $0x4] sm:$0xf]
        %v2669 = vunpack.c.l.b16 %v2665
        %v2670 = vunpack.c.l.b16 %v2666
        %v2671 = vpack.c.b16 %v2670, %v2669
        %2672 = vrot.lane.b32.xlu0 %v594, 53
        %v2673 = vpop.permute.xlu0 %2672
        %2674 = vrot.lane.b32.xlu0 %v595, 53
        %v2675 = vpop.permute.xlu0 %2674
        %2676 = vrot.lane.b32.xlu0 %v596, 53
        %v2677 = vpop.permute.xlu0 %2676
        %2678 = vrot.lane.b32.xlu0 %v597, 53
        %v2679 = vpop.permute.xlu0 %2678
        %vm2680 = vcmask 433152
        %v2681 = vsel %vm2680, %v2673, %v2675
        %v2682 = vsel %vm2680, %v2675, %v2677
        %v2683 = vsel %vm2680, %v2677, %v2679
        %v2685 = vsel %vm267, %v2671, 0
        %v2688 = vsel %vm271, %v2681, 0
        %v2691 = vsel %vm271, %v2682, 0
        %v2694 = vsel %vm271, %v2683, 0
        %2696 = vmatprep.subr.bf16.mxu0 %v2691
        %2697 = vmatpush1.bf16.msra.mxu0 %v2688
        %2698 = vmatprep.subr.bf16.mxu0 0
        %2699 = vmatpush1.bf16.msra.mxu0 0
        %2700 = vmatprep.subr.bf16.mxu0 0
        %2701 = vmatpush1.bf16.msra.mxu0 0
        %2702 = vmatprep.subr.bf16.mxu0 0
        %2703 = vmatpush1.bf16.msra.mxu0 0
        %2704 = vmatprep.subr.bf16.mxu0 0
        %2705 = vmatpush1.bf16.msra.mxu0 0
        %2706 = vmatprep.subr.bf16.mxu0 0
        %2707 = vmatpush1.bf16.msra.mxu0 0
        %2708 = vmatprep.subr.bf16.mxu0 0
        %2709 = vmatpush1.bf16.msra.mxu0 0
        %2710 = vmatprep.subr.bf16.mxu0 0
        %2711 = vmatpush1.bf16.msra.mxu0 0
        %2712 = vmatprep.subr.bf16.mxu0 0
        %2713 = vmatpush1.bf16.msra.mxu0 0
        %2714 = vmatprep.subr.bf16.mxu0 0
        %2715 = vmatpush1.bf16.msra.mxu0 0
        %2716 = vmatprep.subr.bf16.mxu0 0
        %2717 = vmatpush1.bf16.msra.mxu0 0
        %2718 = vmatprep.subr.bf16.mxu0 0
        %2719 = vmatpush1.bf16.msra.mxu0 0
        %2720 = vmatprep.subr.bf16.mxu0 0
        %2721 = vmatpush1.bf16.msra.mxu0 0
        %2722 = vmatprep.subr.bf16.mxu0 0
        %2723 = vmatpush1.bf16.msra.mxu0 0
        %2724 = vmatprep.subr.bf16.mxu0 0
        %2725 = vmatpush1.bf16.msra.mxu0 0
        %2726 = vmatprep.subr.bf16.mxu0 0
        %2727 = vmatpush1.bf16.msra.mxu0 0
        %2728 = vmatprep.mubr.bf16.mxu0 0
        %2729 = vmatmul.mubr.bf16.gmra.mrb[0].mxu0 %v2685
        %v2730 = vpop.f32.mrb[0].mxu0
        %v2731 = vadd.f32 0.0, %v2730
        %v2732 = vpop.f32.mrb[0].mxu0
        %v2733 = vadd.f32 0.0, %v2732
        %v2734 = vpop.f32.mrb[0].mxu0
        %v2735 = vadd.f32 0.0, %v2734
        %v2736 = vpop.f32.mrb[0].mxu0
        %v2737 = vadd.f32 0.0, %v2736
        %2738 = vdwg.mxu0
        %2739 = vmatprep.subr.bf16.mxu0 0
        %2740 = vmatpush1.bf16.msra.mxu0 %v2694
        %2741 = vmatprep.subr.bf16.mxu0 0
        %2742 = vmatpush1.bf16.msra.mxu0 0
        %2743 = vmatprep.subr.bf16.mxu0 0
        %2744 = vmatpush1.bf16.msra.mxu0 0
        %2745 = vmatprep.subr.bf16.mxu0 0
        %2746 = vmatpush1.bf16.msra.mxu0 0
        %2747 = vmatprep.subr.bf16.mxu0 0
        %2748 = vmatpush1.bf16.msra.mxu0 0
        %2749 = vmatprep.subr.bf16.mxu0 0
        %2750 = vmatpush1.bf16.msra.mxu0 0
        %2751 = vmatprep.subr.bf16.mxu0 0
        %2752 = vmatpush1.bf16.msra.mxu0 0
        %2753 = vmatprep.subr.bf16.mxu0 0
        %2754 = vmatpush1.bf16.msra.mxu0 0
        %2755 = vmatprep.subr.bf16.mxu0 0
        %2756 = vmatpush1.bf16.msra.mxu0 0
        %2757 = vmatprep.subr.bf16.mxu0 0
        %2758 = vmatpush1.bf16.msra.mxu0 0
        %2759 = vmatprep.subr.bf16.mxu0 0
        %2760 = vmatpush1.bf16.msra.mxu0 0
        %2761 = vmatprep.subr.bf16.mxu0 0
        %2762 = vmatpush1.bf16.msra.mxu0 0
        %2763 = vmatprep.subr.bf16.mxu0 0
        %2764 = vmatpush1.bf16.msra.mxu0 0
        %2765 = vmatprep.subr.bf16.mxu0 0
        %2766 = vmatpush1.bf16.msra.mxu0 0
        %2767 = vmatprep.subr.bf16.mxu0 0
        %2768 = vmatpush1.bf16.msra.mxu0 0
        %2769 = vmatprep.subr.bf16.mxu0 0
        %2770 = vmatpush1.bf16.msra.mxu0 0
        %2771 = vmatprep.mubr.bf16.mxu0 0
        %2772 = vmatmul.mubr.bf16.gmra.mrb[0].mxu0 %v2685
        %v2773 = vpop.f32.mrb[0].mxu0
        %v2774 = vadd.f32 0.0, %v2773
        %v2775 = vpop.f32.mrb[0].mxu0
        %v2776 = vpop.f32.mrb[0].mxu0
        %v2777 = vadd.f32 0.0, %v2776
        %v2778 = vpop.f32.mrb[0].mxu0
        %2779 = vdwg.mxu0
        %v2780 = vadd.f32 %v2658, %v2731
        %v2781 = vadd.f32 %v2659, %v2733
        %v2782 = vadd.f32 %v2660, %v2774
        %v2783 = vadd.f32 %v2661, %v2735
        %v2784 = vadd.f32 %v2662, %v2737
        %v2785 = vadd.f32 %v2663, %v2777
        %s2786 = scalar_lea.vmem %s4, 152
        %v2787 = vld [vmem:[%s2786] sm:$0xf]
        %v2788 = vld [vmem:[%s2786 + $0x4] sm:$0xf]
        %v2791 = vunpack.c.l.b16 %v2787
        %v2792 = vunpack.c.l.b16 %v2788
        %v2793 = vpack.c.b16 %v2792, %v2791
        %2794 = vrot.lane.b32.xlu0 %v594, 52
        %v2795 = vpop.permute.xlu0 %2794
        %2796 = vrot.lane.b32.xlu0 %v595, 52
        %v2797 = vpop.permute.xlu0 %2796
        %2798 = vrot.lane.b32.xlu0 %v596, 52
        %v2799 = vpop.permute.xlu0 %2798
        %2800 = vrot.lane.b32.xlu0 %v597, 52
        %v2801 = vpop.permute.xlu0 %2800
        %vm2802 = vcmask 424960
        %v2803 = vsel %vm2802, %v2795, %v2797
        %v2804 = vsel %vm2802, %v2797, %v2799
        %v2805 = vsel %vm2802, %v2799, %v2801
        %v2807 = vsel %vm267, %v2793, 0
        %v2810 = vsel %vm271, %v2803, 0
        %v2813 = vsel %vm271, %v2804, 0
        %v2816 = vsel %vm271, %v2805, 0
        %2818 = vmatprep.subr.bf16.mxu0 %v2813
        %2819 = vmatpush1.bf16.msra.mxu0 %v2810
        %2820 = vmatprep.subr.bf16.mxu0 0
        %2821 = vmatpush1.bf16.msra.mxu0 0
        %2822 = vmatprep.subr.bf16.mxu0 0
        %2823 = vmatpush1.bf16.msra.mxu0 0
        %2824 = vmatprep.subr.bf16.mxu0 0
        %2825 = vmatpush1.bf16.msra.mxu0 0
        %2826 = vmatprep.subr.bf16.mxu0 0
        %2827 = vmatpush1.bf16.msra.mxu0 0
        %2828 = vmatprep.subr.bf16.mxu0 0
        %2829 = vmatpush1.bf16.msra.mxu0 0
        %2830 = vmatprep.subr.bf16.mxu0 0
        %2831 = vmatpush1.bf16.msra.mxu0 0
        %2832 = vmatprep.subr.bf16.mxu0 0
        %2833 = vmatpush1.bf16.msra.mxu0 0
        %2834 = vmatprep.subr.bf16.mxu0 0
        %2835 = vmatpush1.bf16.msra.mxu0 0
        %2836 = vmatprep.subr.bf16.mxu0 0
        %2837 = vmatpush1.bf16.msra.mxu0 0
        %2838 = vmatprep.subr.bf16.mxu0 0
        %2839 = vmatpush1.bf16.msra.mxu0 0
        %2840 = vmatprep.subr.bf16.mxu0 0
        %2841 = vmatpush1.bf16.msra.mxu0 0
        %2842 = vmatprep.subr.bf16.mxu0 0
        %2843 = vmatpush1.bf16.msra.mxu0 0
        %2844 = vmatprep.subr.bf16.mxu0 0
        %2845 = vmatpush1.bf16.msra.mxu0 0
        %2846 = vmatprep.subr.bf16.mxu0 0
        %2847 = vmatpush1.bf16.msra.mxu0 0
        %2848 = vmatprep.subr.bf16.mxu0 0
        %2849 = vmatpush1.bf16.msra.mxu0 0
        %2850 = vmatprep.mubr.bf16.mxu0 0
        %2851 = vmatmul.mubr.bf16.gmra.mrb[0].mxu0 %v2807
        %v2852 = vpop.f32.mrb[0].mxu0
        %v2853 = vadd.f32 0.0, %v2852
        %v2854 = vpop.f32.mrb[0].mxu0
        %v2855 = vadd.f32 0.0, %v2854
        %v2856 = vpop.f32.mrb[0].mxu0
        %v2857 = vadd.f32 0.0, %v2856
        %v2858 = vpop.f32.mrb[0].mxu0
        %v2859 = vadd.f32 0.0, %v2858
        %2860 = vdwg.mxu0
        %2861 = vmatprep.subr.bf16.mxu0 0
        %2862 = vmatpush1.bf16.msra.mxu0 %v2816
        %2863 = vmatprep.subr.bf16.mxu0 0
        %2864 = vmatpush1.bf16.msra.mxu0 0
        %2865 = vmatprep.subr.bf16.mxu0 0
        %2866 = vmatpush1.bf16.msra.mxu0 0
        %2867 = vmatprep.subr.bf16.mxu0 0
        %2868 = vmatpush1.bf16.msra.mxu0 0
        %2869 = vmatprep.subr.bf16.mxu0 0
        %2870 = vmatpush1.bf16.msra.mxu0 0
        %2871 = vmatprep.subr.bf16.mxu0 0
        %2872 = vmatpush1.bf16.msra.mxu0 0
        %2873 = vmatprep.subr.bf16.mxu0 0
        %2874 = vmatpush1.bf16.msra.mxu0 0
        %2875 = vmatprep.subr.bf16.mxu0 0
        %2876 = vmatpush1.bf16.msra.mxu0 0
        %2877 = vmatprep.subr.bf16.mxu0 0
        %2878 = vmatpush1.bf16.msra.mxu0 0
        %2879 = vmatprep.subr.bf16.mxu0 0
        %2880 = vmatpush1.bf16.msra.mxu0 0
        %2881 = vmatprep.subr.bf16.mxu0 0
        %2882 = vmatpush1.bf16.msra.mxu0 0
        %2883 = vmatprep.subr.bf16.mxu0 0
        %2884 = vmatpush1.bf16.msra.mxu0 0
        %2885 = vmatprep.subr.bf16.mxu0 0
        %2886 = vmatpush1.bf16.msra.mxu0 0
        %2887 = vmatprep.subr.bf16.mxu0 0
        %2888 = vmatpush1.bf16.msra.mxu0 0
        %2889 = vmatprep.subr.bf16.mxu0 0
        %2890 = vmatpush1.bf16.msra.mxu0 0
        %2891 = vmatprep.subr.bf16.mxu0 0
        %2892 = vmatpush1.bf16.msra.mxu0 0
        %2893 = vmatprep.mubr.bf16.mxu0 0
        %2894 = vmatmul.mubr.bf16.gmra.mrb[0].mxu0 %v2807
        %v2895 = vpop.f32.mrb[0].mxu0
        %v2896 = vadd.f32 0.0, %v2895
        %v2897 = vpop.f32.mrb[0].mxu0
        %v2898 = vpop.f32.mrb[0].mxu0
        %v2899 = vadd.f32 0.0, %v2898
        %v2900 = vpop.f32.mrb[0].mxu0
        %2901 = vdwg.mxu0
        %v2902 = vadd.f32 %v2780, %v2853
        %v2903 = vadd.f32 %v2781, %v2855
        %v2904 = vadd.f32 %v2782, %v2896
        %v2905 = vadd.f32 %v2783, %v2857
        %v2906 = vadd.f32 %v2784, %v2859
        %v2907 = vadd.f32 %v2785, %v2899
        %s2908 = scalar_lea.vmem %s4, 160
        %v2909 = vld [vmem:[%s2908] sm:$0xf]
        %v2910 = vld [vmem:[%s2908 + $0x4] sm:$0xf]
        %v2913 = vunpack.c.l.b16 %v2909
        %v2914 = vunpack.c.l.b16 %v2910
        %v2915 = vpack.c.b16 %v2914, %v2913
        %2916 = vrot.lane.b32.xlu0 %v594, 32
        %v2917 = vpop.permute.xlu0 %2916
        %2918 = vrot.lane.b32.xlu0 %v595, 32
        %v2919 = vpop.permute.xlu0 %2918
        %2920 = vrot.lane.b32.xlu0 %v596, 32
        %v2921 = vpop.permute.xlu0 %2920
        %2922 = vrot.lane.b32.xlu0 %v597, 32
        %v2923 = vpop.permute.xlu0 %2922
        %vm2924 = vcmask 261120
        %v2925 = vsel %vm2924, %v2917, %v2919
        %v2926 = vsel %vm2924, %v2919, %v2921
        %v2927 = vsel %vm2924, %v2921, %v2923
        %v2929 = vsel %vm267, %v2915, 0
        %v2932 = vsel %vm271, %v2925, 0
        %v2935 = vsel %vm271, %v2926, 0
        %v2938 = vsel %vm271, %v2927, 0
        %2940 = vmatprep.subr.bf16.mxu0 %v2935
        %2941 = vmatpush1.bf16.msra.mxu0 %v2932
        %2942 = vmatprep.subr.bf16.mxu0 0
        %2943 = vmatpush1.bf16.msra.mxu0 0
        %2944 = vmatprep.subr.bf16.mxu0 0
        %2945 = vmatpush1.bf16.msra.mxu0 0
        %2946 = vmatprep.subr.bf16.mxu0 0
        %2947 = vmatpush1.bf16.msra.mxu0 0
        %2948 = vmatprep.subr.bf16.mxu0 0
        %2949 = vmatpush1.bf16.msra.mxu0 0
        %2950 = vmatprep.subr.bf16.mxu0 0
        %2951 = vmatpush1.bf16.msra.mxu0 0
        %2952 = vmatprep.subr.bf16.mxu0 0
        %2953 = vmatpush1.bf16.msra.mxu0 0
        %2954 = vmatprep.subr.bf16.mxu0 0
        %2955 = vmatpush1.bf16.msra.mxu0 0
        %2956 = vmatprep.subr.bf16.mxu0 0
        %2957 = vmatpush1.bf16.msra.mxu0 0
        %2958 = vmatprep.subr.bf16.mxu0 0
        %2959 = vmatpush1.bf16.msra.mxu0 0
        %2960 = vmatprep.subr.bf16.mxu0 0
        %2961 = vmatpush1.bf16.msra.mxu0 0
        %2962 = vmatprep.subr.bf16.mxu0 0
        %2963 = vmatpush1.bf16.msra.mxu0 0
        %2964 = vmatprep.subr.bf16.mxu0 0
        %2965 = vmatpush1.bf16.msra.mxu0 0
        %2966 = vmatprep.subr.bf16.mxu0 0
        %2967 = vmatpush1.bf16.msra.mxu0 0
        %2968 = vmatprep.subr.bf16.mxu0 0
        %2969 = vmatpush1.bf16.msra.mxu0 0
        %2970 = vmatprep.subr.bf16.mxu0 0
        %2971 = vmatpush1.bf16.msra.mxu0 0
        %2972 = vmatprep.mubr.bf16.mxu0 0
        %2973 = vmatmul.mubr.bf16.gmra.mrb[0].mxu0 %v2929
        %v2974 = vpop.f32.mrb[0].mxu0
        %v2975 = vadd.f32 0.0, %v2974
        %v2976 = vpop.f32.mrb[0].mxu0
        %v2977 = vadd.f32 0.0, %v2976
        %v2978 = vpop.f32.mrb[0].mxu0
        %v2979 = vadd.f32 0.0, %v2978
        %v2980 = vpop.f32.mrb[0].mxu0
        %v2981 = vadd.f32 0.0, %v2980
        %2982 = vdwg.mxu0
        %2983 = vmatprep.subr.bf16.mxu0 0
        %2984 = vmatpush1.bf16.msra.mxu0 %v2938
        %2985 = vmatprep.subr.bf16.mxu0 0
        %2986 = vmatpush1.bf16.msra.mxu0 0
        %2987 = vmatprep.subr.bf16.mxu0 0
        %2988 = vmatpush1.bf16.msra.mxu0 0
        %2989 = vmatprep.subr.bf16.mxu0 0
        %2990 = vmatpush1.bf16.msra.mxu0 0
        %2991 = vmatprep.subr.bf16.mxu0 0
        %2992 = vmatpush1.bf16.msra.mxu0 0
        %2993 = vmatprep.subr.bf16.mxu0 0
        %2994 = vmatpush1.bf16.msra.mxu0 0
        %2995 = vmatprep.subr.bf16.mxu0 0
        %2996 = vmatpush1.bf16.msra.mxu0 0
        %2997 = vmatprep.subr.bf16.mxu0 0
        %2998 = vmatpush1.bf16.msra.mxu0 0
        %2999 = vmatprep.subr.bf16.mxu0 0
        %3000 = vmatpush1.bf16.msra.mxu0 0
        %3001 = vmatprep.subr.bf16.mxu0 0
        %3002 = vmatpush1.bf16.msra.mxu0 0
        %3003 = vmatprep.subr.bf16.mxu0 0
        %3004 = vmatpush1.bf16.msra.mxu0 0
        %3005 = vmatprep.subr.bf16.mxu0 0
        %3006 = vmatpush1.bf16.msra.mxu0 0
        %3007 = vmatprep.subr.bf16.mxu0 0
        %3008 = vmatpush1.bf16.msra.mxu0 0
        %3009 = vmatprep.subr.bf16.mxu0 0
        %3010 = vmatpush1.bf16.msra.mxu0 0
        %3011 = vmatprep.subr.bf16.mxu0 0
        %3012 = vmatpush1.bf16.msra.mxu0 0
        %3013 = vmatprep.subr.bf16.mxu0 0
        %3014 = vmatpush1.bf16.msra.mxu0 0
        %3015 = vmatprep.mubr.bf16.mxu0 0
        %3016 = vmatmul.mubr.bf16.gmra.mrb[0].mxu0 %v2929
        %v3017 = vpop.f32.mrb[0].mxu0
        %v3018 = vadd.f32 0.0, %v3017
        %v3019 = vpop.f32.mrb[0].mxu0
        %v3020 = vpop.f32.mrb[0].mxu0
        %v3021 = vadd.f32 0.0, %v3020
        %v3022 = vpop.f32.mrb[0].mxu0
        %3023 = vdwg.mxu0
        %v3024 = vadd.f32 %v2902, %v2975
        %v3025 = vadd.f32 %v2903, %v2977
        %v3026 = vadd.f32 %v2904, %v3018
        %v3027 = vadd.f32 %v2905, %v2979
        %v3028 = vadd.f32 %v2906, %v2981
        %v3029 = vadd.f32 %v2907, %v3021
        %s3030 = scalar_lea.vmem %s4, 168
        %v3031 = vld [vmem:[%s3030] sm:$0xf]
        %v3032 = vld [vmem:[%s3030 + $0x4] sm:$0xf]
        %v3035 = vunpack.c.l.b16 %v3031
        %v3036 = vunpack.c.l.b16 %v3032
        %v3037 = vpack.c.b16 %v3036, %v3035
        %3038 = vrot.lane.b32.xlu0 %v594, 31
        %v3039 = vpop.permute.xlu0 %3038
        %3040 = vrot.lane.b32.xlu0 %v595, 31
        %v3041 = vpop.permute.xlu0 %3040
        %3042 = vrot.lane.b32.xlu0 %v596, 31
        %v3043 = vpop.permute.xlu0 %3042
        %3044 = vrot.lane.b32.xlu0 %v597, 31
        %v3045 = vpop.permute.xlu0 %3044
        %vm3046 = vcmask 252928
        %v3047 = vsel %vm3046, %v3039, %v3041
        %v3048 = vsel %vm3046, %v3041, %v3043
        %v3049 = vsel %vm3046, %v3043, %v3045
        %v3051 = vsel %vm267, %v3037, 0
        %v3054 = vsel %vm271, %v3047, 0
        %v3057 = vsel %vm271, %v3048, 0
        %v3060 = vsel %vm271, %v3049, 0
        %3062 = vmatprep.subr.bf16.mxu0 %v3057
        %3063 = vmatpush1.bf16.msra.mxu0 %v3054
        %3064 = vmatprep.subr.bf16.mxu0 0
        %3065 = vmatpush1.bf16.msra.mxu0 0
        %3066 = vmatprep.subr.bf16.mxu0 0
        %3067 = vmatpush1.bf16.msra.mxu0 0
        %3068 = vmatprep.subr.bf16.mxu0 0
        %3069 = vmatpush1.bf16.msra.mxu0 0
        %3070 = vmatprep.subr.bf16.mxu0 0
        %3071 = vmatpush1.bf16.msra.mxu0 0
        %3072 = vmatprep.subr.bf16.mxu0 0
        %3073 = vmatpush1.bf16.msra.mxu0 0
        %3074 = vmatprep.subr.bf16.mxu0 0
        %3075 = vmatpush1.bf16.msra.mxu0 0
        %3076 = vmatprep.subr.bf16.mxu0 0
        %3077 = vmatpush1.bf16.msra.mxu0 0
        %3078 = vmatprep.subr.bf16.mxu0 0
        %3079 = vmatpush1.bf16.msra.mxu0 0
        %3080 = vmatprep.subr.bf16.mxu0 0
        %3081 = vmatpush1.bf16.msra.mxu0 0
        %3082 = vmatprep.subr.bf16.mxu0 0
        %3083 = vmatpush1.bf16.msra.mxu0 0
        %3084 = vmatprep.subr.bf16.mxu0 0
        %3085 = vmatpush1.bf16.msra.mxu0 0
        %3086 = vmatprep.subr.bf16.mxu0 0
        %3087 = vmatpush1.bf16.msra.mxu0 0
        %3088 = vmatprep.subr.bf16.mxu0 0
        %3089 = vmatpush1.bf16.msra.mxu0 0
        %3090 = vmatprep.subr.bf16.mxu0 0
        %3091 = vmatpush1.bf16.msra.mxu0 0
        %3092 = vmatprep.subr.bf16.mxu0 0
        %3093 = vmatpush1.bf16.msra.mxu0 0
        %3094 = vmatprep.mubr.bf16.mxu0 0
        %3095 = vmatmul.mubr.bf16.gmra.mrb[0].mxu0 %v3051
        %v3096 = vpop.f32.mrb[0].mxu0
        %v3097 = vadd.f32 0.0, %v3096
        %v3098 = vpop.f32.mrb[0].mxu0
        %v3099 = vadd.f32 0.0, %v3098
        %v3100 = vpop.f32.mrb[0].mxu0
        %v3101 = vadd.f32 0.0, %v3100
        %v3102 = vpop.f32.mrb[0].mxu0
        %v3103 = vadd.f32 0.0, %v3102
        %3104 = vdwg.mxu0
        %3105 = vmatprep.subr.bf16.mxu0 0
        %3106 = vmatpush1.bf16.msra.mxu0 %v3060
        %3107 = vmatprep.subr.bf16.mxu0 0
        %3108 = vmatpush1.bf16.msra.mxu0 0
        %3109 = vmatprep.subr.bf16.mxu0 0
        %3110 = vmatpush1.bf16.msra.mxu0 0
        %3111 = vmatprep.subr.bf16.mxu0 0
        %3112 = vmatpush1.bf16.msra.mxu0 0
        %3113 = vmatprep.subr.bf16.mxu0 0
        %3114 = vmatpush1.bf16.msra.mxu0 0
        %3115 = vmatprep.subr.bf16.mxu0 0
        %3116 = vmatpush1.bf16.msra.mxu0 0
        %3117 = vmatprep.subr.bf16.mxu0 0
        %3118 = vmatpush1.bf16.msra.mxu0 0
        %3119 = vmatprep.subr.bf16.mxu0 0
        %3120 = vmatpush1.bf16.msra.mxu0 0
        %3121 = vmatprep.subr.bf16.mxu0 0
        %3122 = vmatpush1.bf16.msra.mxu0 0
        %3123 = vmatprep.subr.bf16.mxu0 0
        %3124 = vmatpush1.bf16.msra.mxu0 0
        %3125 = vmatprep.subr.bf16.mxu0 0
        %3126 = vmatpush1.bf16.msra.mxu0 0
        %3127 = vmatprep.subr.bf16.mxu0 0
        %3128 = vmatpush1.bf16.msra.mxu0 0
        %3129 = vmatprep.subr.bf16.mxu0 0
        %3130 = vmatpush1.bf16.msra.mxu0 0
        %3131 = vmatprep.subr.bf16.mxu0 0
        %3132 = vmatpush1.bf16.msra.mxu0 0
        %3133 = vmatprep.subr.bf16.mxu0 0
        %3134 = vmatpush1.bf16.msra.mxu0 0
        %3135 = vmatprep.subr.bf16.mxu0 0
        %3136 = vmatpush1.bf16.msra.mxu0 0
        %3137 = vmatprep.mubr.bf16.mxu0 0
        %3138 = vmatmul.mubr.bf16.gmra.mrb[0].mxu0 %v3051
        %v3139 = vpop.f32.mrb[0].mxu0
        %v3140 = vadd.f32 0.0, %v3139
        %v3141 = vpop.f32.mrb[0].mxu0
        %v3142 = vpop.f32.mrb[0].mxu0
        %v3143 = vadd.f32 0.0, %v3142
        %v3144 = vpop.f32.mrb[0].mxu0
        %3145 = vdwg.mxu0
        %v3146 = vadd.f32 %v3024, %v3097
        %v3147 = vadd.f32 %v3025, %v3099
        %v3148 = vadd.f32 %v3026, %v3140
        %v3149 = vadd.f32 %v3027, %v3101
        %v3150 = vadd.f32 %v3028, %v3103
        %v3151 = vadd.f32 %v3029, %v3143
        %s3152 = scalar_lea.vmem %s4, 176
        %v3153 = vld [vmem:[%s3152] sm:$0xf]
        %v3154 = vld [vmem:[%s3152 + $0x4] sm:$0xf]
        %v3157 = vunpack.c.l.b16 %v3153
        %v3158 = vunpack.c.l.b16 %v3154
        %v3159 = vpack.c.b16 %v3158, %v3157
        %3160 = vrot.lane.b32.xlu0 %v594, 30
        %v3161 = vpop.permute.xlu0 %3160
        %3162 = vrot.lane.b32.xlu0 %v595, 30
        %v3163 = vpop.permute.xlu0 %3162
        %3164 = vrot.lane.b32.xlu0 %v596, 30
        %v3165 = vpop.permute.xlu0 %3164
        %3166 = vrot.lane.b32.xlu0 %v597, 30
        %v3167 = vpop.permute.xlu0 %3166
        %vm3168 = vcmask 244736
        %v3169 = vsel %vm3168, %v3161, %v3163
        %v3170 = vsel %vm3168, %v3163, %v3165
        %v3171 = vsel %vm3168, %v3165, %v3167
        %v3173 = vsel %vm267, %v3159, 0
        %v3176 = vsel %vm271, %v3169, 0
        %v3179 = vsel %vm271, %v3170, 0
        %v3182 = vsel %vm271, %v3171, 0
        %3184 = vmatprep.subr.bf16.mxu0 %v3179
        %3185 = vmatpush1.bf16.msra.mxu0 %v3176
        %3186 = vmatprep.subr.bf16.mxu0 0
        %3187 = vmatpush1.bf16.msra.mxu0 0
        %3188 = vmatprep.subr.bf16.mxu0 0
        %3189 = vmatpush1.bf16.msra.mxu0 0
        %3190 = vmatprep.subr.bf16.mxu0 0
        %3191 = vmatpush1.bf16.msra.mxu0 0
        %3192 = vmatprep.subr.bf16.mxu0 0
        %3193 = vmatpush1.bf16.msra.mxu0 0
        %3194 = vmatprep.subr.bf16.mxu0 0
        %3195 = vmatpush1.bf16.msra.mxu0 0
        %3196 = vmatprep.subr.bf16.mxu0 0
        %3197 = vmatpush1.bf16.msra.mxu0 0
        %3198 = vmatprep.subr.bf16.mxu0 0
        %3199 = vmatpush1.bf16.msra.mxu0 0
        %3200 = vmatprep.subr.bf16.mxu0 0
        %3201 = vmatpush1.bf16.msra.mxu0 0
        %3202 = vmatprep.subr.bf16.mxu0 0
        %3203 = vmatpush1.bf16.msra.mxu0 0
        %3204 = vmatprep.subr.bf16.mxu0 0
        %3205 = vmatpush1.bf16.msra.mxu0 0
        %3206 = vmatprep.subr.bf16.mxu0 0
        %3207 = vmatpush1.bf16.msra.mxu0 0
        %3208 = vmatprep.subr.bf16.mxu0 0
        %3209 = vmatpush1.bf16.msra.mxu0 0
        %3210 = vmatprep.subr.bf16.mxu0 0
        %3211 = vmatpush1.bf16.msra.mxu0 0
        %3212 = vmatprep.subr.bf16.mxu0 0
        %3213 = vmatpush1.bf16.msra.mxu0 0
        %3214 = vmatprep.subr.bf16.mxu0 0
        %3215 = vmatpush1.bf16.msra.mxu0 0
        %3216 = vmatprep.mubr.bf16.mxu0 0
        %3217 = vmatmul.mubr.bf16.gmra.mrb[0].mxu0 %v3173
        %v3218 = vpop.f32.mrb[0].mxu0
        %v3219 = vadd.f32 0.0, %v3218
        %v3220 = vpop.f32.mrb[0].mxu0
        %v3221 = vadd.f32 0.0, %v3220
        %v3222 = vpop.f32.mrb[0].mxu0
        %v3223 = vadd.f32 0.0, %v3222
        %v3224 = vpop.f32.mrb[0].mxu0
        %v3225 = vadd.f32 0.0, %v3224
        %3226 = vdwg.mxu0
        %3227 = vmatprep.subr.bf16.mxu0 0
        %3228 = vmatpush1.bf16.msra.mxu0 %v3182
        %3229 = vmatprep.subr.bf16.mxu0 0
        %3230 = vmatpush1.bf16.msra.mxu0 0
        %3231 = vmatprep.subr.bf16.mxu0 0
        %3232 = vmatpush1.bf16.msra.mxu0 0
        %3233 = vmatprep.subr.bf16.mxu0 0
        %3234 = vmatpush1.bf16.msra.mxu0 0
        %3235 = vmatprep.subr.bf16.mxu0 0
        %3236 = vmatpush1.bf16.msra.mxu0 0
        %3237 = vmatprep.subr.bf16.mxu0 0
        %3238 = vmatpush1.bf16.msra.mxu0 0
        %3239 = vmatprep.subr.bf16.mxu0 0
        %3240 = vmatpush1.bf16.msra.mxu0 0
        %3241 = vmatprep.subr.bf16.mxu0 0
        %3242 = vmatpush1.bf16.msra.mxu0 0
        %3243 = vmatprep.subr.bf16.mxu0 0
        %3244 = vmatpush1.bf16.msra.mxu0 0
        %3245 = vmatprep.subr.bf16.mxu0 0
        %3246 = vmatpush1.bf16.msra.mxu0 0
        %3247 = vmatprep.subr.bf16.mxu0 0
        %3248 = vmatpush1.bf16.msra.mxu0 0
        %3249 = vmatprep.subr.bf16.mxu0 0
        %3250 = vmatpush1.bf16.msra.mxu0 0
        %3251 = vmatprep.subr.bf16.mxu0 0
        %3252 = vmatpush1.bf16.msra.mxu0 0
        %3253 = vmatprep.subr.bf16.mxu0 0
        %3254 = vmatpush1.bf16.msra.mxu0 0
        %3255 = vmatprep.subr.bf16.mxu0 0
        %3256 = vmatpush1.bf16.msra.mxu0 0
        %3257 = vmatprep.subr.bf16.mxu0 0
        %3258 = vmatpush1.bf16.msra.mxu0 0
        %3259 = vmatprep.mubr.bf16.mxu0 0
        %3260 = vmatmul.mubr.bf16.gmra.mrb[0].mxu0 %v3173
        %v3261 = vpop.f32.mrb[0].mxu0
        %v3262 = vadd.f32 0.0, %v3261
        %v3263 = vpop.f32.mrb[0].mxu0
        %v3264 = vpop.f32.mrb[0].mxu0
        %v3265 = vadd.f32 0.0, %v3264
        %v3266 = vpop.f32.mrb[0].mxu0
        %3267 = vdwg.mxu0
        %v3268 = vadd.f32 %v3146, %v3219
        %v3269 = vadd.f32 %v3147, %v3221
        %v3270 = vadd.f32 %v3148, %v3262
        %v3271 = vadd.f32 %v3149, %v3223
        %v3272 = vadd.f32 %v3150, %v3225
        %v3273 = vadd.f32 %v3151, %v3265
        %s3274 = scalar_lea.vmem %s4, 184
        %v3275 = vld [vmem:[%s3274] sm:$0xf]
        %v3276 = vld [vmem:[%s3274 + $0x4] sm:$0xf]
        %v3279 = vunpack.c.l.b16 %v3275
        %v3280 = vunpack.c.l.b16 %v3276
        %v3281 = vpack.c.b16 %v3280, %v3279
        %3282 = vrot.lane.b32.xlu0 %v594, 29
        %v3283 = vpop.permute.xlu0 %3282
        %3284 = vrot.lane.b32.xlu0 %v595, 29
        %v3285 = vpop.permute.xlu0 %3284
        %3286 = vrot.lane.b32.xlu0 %v596, 29
        %v3287 = vpop.permute.xlu0 %3286
        %3288 = vrot.lane.b32.xlu0 %v597, 29
        %v3289 = vpop.permute.xlu0 %3288
        %vm3290 = vcmask 236544
        %v3291 = vsel %vm3290, %v3283, %v3285
        %v3292 = vsel %vm3290, %v3285, %v3287
        %v3293 = vsel %vm3290, %v3287, %v3289
        %v3295 = vsel %vm267, %v3281, 0
        %v3298 = vsel %vm271, %v3291, 0
        %v3301 = vsel %vm271, %v3292, 0
        %v3304 = vsel %vm271, %v3293, 0
        %3306 = vmatprep.subr.bf16.mxu0 %v3301
        %3307 = vmatpush1.bf16.msra.mxu0 %v3298
        %3308 = vmatprep.subr.bf16.mxu0 0
        %3309 = vmatpush1.bf16.msra.mxu0 0
        %3310 = vmatprep.subr.bf16.mxu0 0
        %3311 = vmatpush1.bf16.msra.mxu0 0
        %3312 = vmatprep.subr.bf16.mxu0 0
        %3313 = vmatpush1.bf16.msra.mxu0 0
        %3314 = vmatprep.subr.bf16.mxu0 0
        %3315 = vmatpush1.bf16.msra.mxu0 0
        %3316 = vmatprep.subr.bf16.mxu0 0
        %3317 = vmatpush1.bf16.msra.mxu0 0
        %3318 = vmatprep.subr.bf16.mxu0 0
        %3319 = vmatpush1.bf16.msra.mxu0 0
        %3320 = vmatprep.subr.bf16.mxu0 0
        %3321 = vmatpush1.bf16.msra.mxu0 0
        %3322 = vmatprep.subr.bf16.mxu0 0
        %3323 = vmatpush1.bf16.msra.mxu0 0
        %3324 = vmatprep.subr.bf16.mxu0 0
        %3325 = vmatpush1.bf16.msra.mxu0 0
        %3326 = vmatprep.subr.bf16.mxu0 0
        %3327 = vmatpush1.bf16.msra.mxu0 0
        %3328 = vmatprep.subr.bf16.mxu0 0
        %3329 = vmatpush1.bf16.msra.mxu0 0
        %3330 = vmatprep.subr.bf16.mxu0 0
        %3331 = vmatpush1.bf16.msra.mxu0 0
        %3332 = vmatprep.subr.bf16.mxu0 0
        %3333 = vmatpush1.bf16.msra.mxu0 0
        %3334 = vmatprep.subr.bf16.mxu0 0
        %3335 = vmatpush1.bf16.msra.mxu0 0
        %3336 = vmatprep.subr.bf16.mxu0 0
        %3337 = vmatpush1.bf16.msra.mxu0 0
        %3338 = vmatprep.mubr.bf16.mxu0 0
        %3339 = vmatmul.mubr.bf16.gmra.mrb[0].mxu0 %v3295
        %v3340 = vpop.f32.mrb[0].mxu0
        %v3341 = vadd.f32 0.0, %v3340
        %v3342 = vpop.f32.mrb[0].mxu0
        %v3343 = vadd.f32 0.0, %v3342
        %v3344 = vpop.f32.mrb[0].mxu0
        %v3345 = vadd.f32 0.0, %v3344
        %v3346 = vpop.f32.mrb[0].mxu0
        %v3347 = vadd.f32 0.0, %v3346
        %3348 = vdwg.mxu0
        %3349 = vmatprep.subr.bf16.mxu0 0
        %3350 = vmatpush1.bf16.msra.mxu0 %v3304
        %3351 = vmatprep.subr.bf16.mxu0 0
        %3352 = vmatpush1.bf16.msra.mxu0 0
        %3353 = vmatprep.subr.bf16.mxu0 0
        %3354 = vmatpush1.bf16.msra.mxu0 0
        %3355 = vmatprep.subr.bf16.mxu0 0
        %3356 = vmatpush1.bf16.msra.mxu0 0
        %3357 = vmatprep.subr.bf16.mxu0 0
        %3358 = vmatpush1.bf16.msra.mxu0 0
        %3359 = vmatprep.subr.bf16.mxu0 0
        %3360 = vmatpush1.bf16.msra.mxu0 0
        %3361 = vmatprep.subr.bf16.mxu0 0
        %3362 = vmatpush1.bf16.msra.mxu0 0
        %3363 = vmatprep.subr.bf16.mxu0 0
        %3364 = vmatpush1.bf16.msra.mxu0 0
        %3365 = vmatprep.subr.bf16.mxu0 0
        %3366 = vmatpush1.bf16.msra.mxu0 0
        %3367 = vmatprep.subr.bf16.mxu0 0
        %3368 = vmatpush1.bf16.msra.mxu0 0
        %3369 = vmatprep.subr.bf16.mxu0 0
        %3370 = vmatpush1.bf16.msra.mxu0 0
        %3371 = vmatprep.subr.bf16.mxu0 0
        %3372 = vmatpush1.bf16.msra.mxu0 0
        %3373 = vmatprep.subr.bf16.mxu0 0
        %3374 = vmatpush1.bf16.msra.mxu0 0
        %3375 = vmatprep.subr.bf16.mxu0 0
        %3376 = vmatpush1.bf16.msra.mxu0 0
        %3377 = vmatprep.subr.bf16.mxu0 0
        %3378 = vmatpush1.bf16.msra.mxu0 0
        %3379 = vmatprep.subr.bf16.mxu0 0
        %3380 = vmatpush1.bf16.msra.mxu0 0
        %3381 = vmatprep.mubr.bf16.mxu0 0
        %3382 = vmatmul.mubr.bf16.gmra.mrb[0].mxu0 %v3295
        %v3383 = vpop.f32.mrb[0].mxu0
        %v3384 = vadd.f32 0.0, %v3383
        %v3385 = vpop.f32.mrb[0].mxu0
        %v3386 = vpop.f32.mrb[0].mxu0
        %v3387 = vadd.f32 0.0, %v3386
        %v3388 = vpop.f32.mrb[0].mxu0
        %3389 = vdwg.mxu0
        %v3390 = vadd.f32 %v3268, %v3341
        %v3391 = vadd.f32 %v3269, %v3343
        %v3392 = vadd.f32 %v3270, %v3384
        %v3393 = vadd.f32 %v3271, %v3345
        %v3394 = vadd.f32 %v3272, %v3347
        %v3395 = vadd.f32 %v3273, %v3387
        %s3396 = scalar_lea.vmem %s4, 192
        %v3397 = vld [vmem:[%s3396] sm:$0xf]
        %v3398 = vld [vmem:[%s3396 + $0x4] sm:$0xf]
        %v3401 = vunpack.c.l.b16 %v3397
        %v3402 = vunpack.c.l.b16 %v3398
        %v3403 = vpack.c.b16 %v3402, %v3401
        %3404 = vrot.lane.b32.xlu0 %v594, 28
        %v3405 = vpop.permute.xlu0 %3404
        %3406 = vrot.lane.b32.xlu0 %v595, 28
        %v3407 = vpop.permute.xlu0 %3406
        %3408 = vrot.lane.b32.xlu0 %v596, 28
        %v3409 = vpop.permute.xlu0 %3408
        %3410 = vrot.lane.b32.xlu0 %v597, 28
        %v3411 = vpop.permute.xlu0 %3410
        %vm3412 = vcmask 228352
        %v3413 = vsel %vm3412, %v3405, %v3407
        %v3414 = vsel %vm3412, %v3407, %v3409
        %v3415 = vsel %vm3412, %v3409, %v3411
        %v3417 = vsel %vm267, %v3403, 0
        %v3420 = vsel %vm271, %v3413, 0
        %v3423 = vsel %vm271, %v3414, 0
        %v3426 = vsel %vm271, %v3415, 0
        %3428 = vmatprep.subr.bf16.mxu0 %v3423
        %3429 = vmatpush1.bf16.msra.mxu0 %v3420
        %3430 = vmatprep.subr.bf16.mxu0 0
        %3431 = vmatpush1.bf16.msra.mxu0 0
        %3432 = vmatprep.subr.bf16.mxu0 0
        %3433 = vmatpush1.bf16.msra.mxu0 0
        %3434 = vmatprep.subr.bf16.mxu0 0
        %3435 = vmatpush1.bf16.msra.mxu0 0
        %3436 = vmatprep.subr.bf16.mxu0 0
        %3437 = vmatpush1.bf16.msra.mxu0 0
        %3438 = vmatprep.subr.bf16.mxu0 0
        %3439 = vmatpush1.bf16.msra.mxu0 0
        %3440 = vmatprep.subr.bf16.mxu0 0
        %3441 = vmatpush1.bf16.msra.mxu0 0
        %3442 = vmatprep.subr.bf16.mxu0 0
        %3443 = vmatpush1.bf16.msra.mxu0 0
        %3444 = vmatprep.subr.bf16.mxu0 0
        %3445 = vmatpush1.bf16.msra.mxu0 0
        %3446 = vmatprep.subr.bf16.mxu0 0
        %3447 = vmatpush1.bf16.msra.mxu0 0
        %3448 = vmatprep.subr.bf16.mxu0 0
        %3449 = vmatpush1.bf16.msra.mxu0 0
        %3450 = vmatprep.subr.bf16.mxu0 0
        %3451 = vmatpush1.bf16.msra.mxu0 0
        %3452 = vmatprep.subr.bf16.mxu0 0
        %3453 = vmatpush1.bf16.msra.mxu0 0
        %3454 = vmatprep.subr.bf16.mxu0 0
        %3455 = vmatpush1.bf16.msra.mxu0 0
        %3456 = vmatprep.subr.bf16.mxu0 0
        %3457 = vmatpush1.bf16.msra.mxu0 0
        %3458 = vmatprep.subr.bf16.mxu0 0
        %3459 = vmatpush1.bf16.msra.mxu0 0
        %3460 = vmatprep.mubr.bf16.mxu0 0
        %3461 = vmatmul.mubr.bf16.gmra.mrb[0].mxu0 %v3417
        %v3462 = vpop.f32.mrb[0].mxu0
        %v3463 = vadd.f32 0.0, %v3462
        %v3464 = vpop.f32.mrb[0].mxu0
        %v3465 = vadd.f32 0.0, %v3464
        %v3466 = vpop.f32.mrb[0].mxu0
        %v3467 = vadd.f32 0.0, %v3466
        %v3468 = vpop.f32.mrb[0].mxu0
        %v3469 = vadd.f32 0.0, %v3468
        %3470 = vdwg.mxu0
        %3471 = vmatprep.subr.bf16.mxu0 0
        %3472 = vmatpush1.bf16.msra.mxu0 %v3426
        %3473 = vmatprep.subr.bf16.mxu0 0
        %3474 = vmatpush1.bf16.msra.mxu0 0
        %3475 = vmatprep.subr.bf16.mxu0 0
        %3476 = vmatpush1.bf16.msra.mxu0 0
        %3477 = vmatprep.subr.bf16.mxu0 0
        %3478 = vmatpush1.bf16.msra.mxu0 0
        %3479 = vmatprep.subr.bf16.mxu0 0
        %3480 = vmatpush1.bf16.msra.mxu0 0
        %3481 = vmatprep.subr.bf16.mxu0 0
        %3482 = vmatpush1.bf16.msra.mxu0 0
        %3483 = vmatprep.subr.bf16.mxu0 0
        %3484 = vmatpush1.bf16.msra.mxu0 0
        %3485 = vmatprep.subr.bf16.mxu0 0
        %3486 = vmatpush1.bf16.msra.mxu0 0
        %3487 = vmatprep.subr.bf16.mxu0 0
        %3488 = vmatpush1.bf16.msra.mxu0 0
        %3489 = vmatprep.subr.bf16.mxu0 0
        %3490 = vmatpush1.bf16.msra.mxu0 0
        %3491 = vmatprep.subr.bf16.mxu0 0
        %3492 = vmatpush1.bf16.msra.mxu0 0
        %3493 = vmatprep.subr.bf16.mxu0 0
        %3494 = vmatpush1.bf16.msra.mxu0 0
        %3495 = vmatprep.subr.bf16.mxu0 0
        %3496 = vmatpush1.bf16.msra.mxu0 0
        %3497 = vmatprep.subr.bf16.mxu0 0
        %3498 = vmatpush1.bf16.msra.mxu0 0
        %3499 = vmatprep.subr.bf16.mxu0 0
        %3500 = vmatpush1.bf16.msra.mxu0 0
        %3501 = vmatprep.subr.bf16.mxu0 0
        %3502 = vmatpush1.bf16.msra.mxu0 0
        %3503 = vmatprep.mubr.bf16.mxu0 0
        %3504 = vmatmul.mubr.bf16.gmra.mrb[0].mxu0 %v3417
        %v3505 = vpop.f32.mrb[0].mxu0
        %v3506 = vadd.f32 0.0, %v3505
        %v3507 = vpop.f32.mrb[0].mxu0
        %v3508 = vpop.f32.mrb[0].mxu0
        %v3509 = vadd.f32 0.0, %v3508
        %v3510 = vpop.f32.mrb[0].mxu0
        %3511 = vdwg.mxu0
        %v3512 = vadd.f32 %v3390, %v3463
        %v3513 = vadd.f32 %v3391, %v3465
        %v3514 = vadd.f32 %v3392, %v3506
        %v3515 = vadd.f32 %v3393, %v3467
        %v3516 = vadd.f32 %v3394, %v3469
        %v3517 = vadd.f32 %v3395, %v3509
        %v3518 = vmax.f32 %v3512, 0.0
        %v3519 = vmax.f32 %v3513, 0.0
        %v3520 = vmax.f32 %v3514, 0.0
        %v3521 = vmax.f32 %v3515, 0.0
        %v3522 = vmax.f32 %v3516, 0.0
        %v3523 = vmax.f32 %v3517, 0.0
        %v3524 = vld [vmem:[#allocation3] sm:$0xff]
        %v3525 = vld [vmem:[#allocation3 + $0x8] sm:$0xff]
        %v3526 = vld [vmem:[#allocation3 + $0x10] sm:$0xff]
        %v3527 = vld [vmem:[#allocation3 + $0x18] sm:$0xff]
        %3532 = vrot.lane.b32.xlu0 %v3524, 127
        %v3533 = vpop.permute.xlu0 %3532
        %3534 = vrot.lane.b32.xlu0 %v3525, 127
        %v3535 = vpop.permute.xlu0 %3534
        %3536 = vrot.lane.b32.xlu0 %v3526, 127
        %v3537 = vpop.permute.xlu0 %3536
        %3538 = vrot.lane.b32.xlu0 %v3527, 127
        %v3539 = vpop.permute.xlu0 %3538
        %vm3540 = vcmask 1039360
        %v3541 = vsel %vm3540, %v3533, %v3535
        %v3542 = vsel %vm3540, %v3535, %v3537
        %v3543 = vsel %vm3540, %v3537, %v3539
        %v3548 = vmax.f32 %v3524, %v3541
        %v3549 = vmax.f32 %v3525, %v3542
        %v3550 = vmax.f32 %v3526, %v3543
        %v3551 = vmax.f32 %v3527, %v3539
        %3552 = vrot.lane.b32.xlu0 %v3524, 126
        %v3553 = vpop.permute.xlu0 %3552
        %3554 = vrot.lane.b32.xlu0 %v3525, 126
        %v3555 = vpop.permute.xlu0 %3554
        %3556 = vrot.lane.b32.xlu0 %v3526, 126
        %v3557 = vpop.permute.xlu0 %3556
        %3558 = vrot.lane.b32.xlu0 %v3527, 126
        %v3559 = vpop.permute.xlu0 %3558
        %vm3560 = vcmask 1031168
        %v3561 = vsel %vm3560, %v3553, %v3555
        %v3562 = vsel %vm3560, %v3555, %v3557
        %v3563 = vsel %vm3560, %v3557, %v3559
        %v3568 = vmax.f32 %v3548, %v3561
        %v3569 = vmax.f32 %v3549, %v3562
        %v3570 = vmax.f32 %v3550, %v3563
        %v3571 = vmax.f32 %v3551, %v3559
        %3572 = vrot.lane.b32.xlu0 %v3524, 104
        %v3573 = vpop.permute.xlu0 %3572
        %3574 = vrot.lane.b32.xlu0 %v3525, 104
        %v3575 = vpop.permute.xlu0 %3574
        %3576 = vrot.lane.b32.xlu0 %v3526, 104
        %v3577 = vpop.permute.xlu0 %3576
        %3578 = vrot.lane.b32.xlu0 %v3527, 104
        %v3579 = vpop.permute.xlu0 %3578
        %vm3580 = vcmask 850944
        %v3581 = vsel %vm3580, %v3573, %v3575
        %v3582 = vsel %vm3580, %v3575, %v3577
        %v3583 = vsel %vm3580, %v3577, %v3579
        %v3588 = vmax.f32 %v3568, %v3581
        %v3589 = vmax.f32 %v3569, %v3582
        %v3590 = vmax.f32 %v3570, %v3583
        %v3591 = vmax.f32 %v3571, %v3579
        %3592 = vrot.lane.b32.xlu0 %v3524, 103
        %v3593 = vpop.permute.xlu0 %3592
        %3594 = vrot.lane.b32.xlu0 %v3525, 103
        %v3595 = vpop.permute.xlu0 %3594
        %3596 = vrot.lane.b32.xlu0 %v3526, 103
        %v3597 = vpop.permute.xlu0 %3596
        %3598 = vrot.lane.b32.xlu0 %v3527, 103
        %v3599 = vpop.permute.xlu0 %3598
        %vm3600 = vcmask 842752
        %v3601 = vsel %vm3600, %v3593, %v3595
        %v3602 = vsel %vm3600, %v3595, %v3597
        %v3603 = vsel %vm3600, %v3597, %v3599
        %v3608 = vmax.f32 %v3588, %v3601
        %v3609 = vmax.f32 %v3589, %v3602
        %v3610 = vmax.f32 %v3590, %v3603
        %v3611 = vmax.f32 %v3591, %v3599
        %3612 = vrot.lane.b32.xlu0 %v3524, 102
        %v3613 = vpop.permute.xlu0 %3612
        %3614 = vrot.lane.b32.xlu0 %v3525, 102
        %v3615 = vpop.permute.xlu0 %3614
        %3616 = vrot.lane.b32.xlu0 %v3526, 102
        %v3617 = vpop.permute.xlu0 %3616
        %3618 = vrot.lane.b32.xlu0 %v3527, 102
        %v3619 = vpop.permute.xlu0 %3618
        %vm3620 = vcmask 834560
        %v3621 = vsel %vm3620, %v3613, %v3615
        %v3622 = vsel %vm3620, %v3615, %v3617
        %v3623 = vsel %vm3620, %v3617, %v3619
        %v3628 = vmax.f32 %v3608, %v3621
        %v3629 = vmax.f32 %v3609, %v3622
        %v3630 = vmax.f32 %v3610, %v3623
        %v3631 = vmax.f32 %v3611, %v3619
        %3632 = vrot.lane.b32.xlu0 %v3524, 80
        %v3633 = vpop.permute.xlu0 %3632
        %3634 = vrot.lane.b32.xlu0 %v3525, 80
        %v3635 = vpop.permute.xlu0 %3634
        %3636 = vrot.lane.b32.xlu0 %v3526, 80
        %v3637 = vpop.permute.xlu0 %3636
        %3638 = vrot.lane.b32.xlu0 %v3527, 80
        %v3639 = vpop.permute.xlu0 %3638
        %vm3640 = vcmask 654336
        %v3641 = vsel %vm3640, %v3633, %v3635
        %v3642 = vsel %vm3640, %v3635, %v3637
        %v3643 = vsel %vm3640, %v3637, %v3639
        %v3648 = vmax.f32 %v3628, %v3641
        %v3649 = vmax.f32 %v3629, %v3642
        %v3650 = vmax.f32 %v3630, %v3643
        %v3651 = vmax.f32 %v3631, %v3639
        %3652 = vrot.lane.b32.xlu0 %v3524, 79
        %v3653 = vpop.permute.xlu0 %3652
        %3654 = vrot.lane.b32.xlu0 %v3525, 79
        %v3655 = vpop.permute.xlu0 %3654
        %3656 = vrot.lane.b32.xlu0 %v3526, 79
        %v3657 = vpop.permute.xlu0 %3656
        %3658 = vrot.lane.b32.xlu0 %v3527, 79
        %v3659 = vpop.permute.xlu0 %3658
        %vm3660 = vcmask 646144
        %v3661 = vsel %vm3660, %v3653, %v3655
        %v3662 = vsel %vm3660, %v3655, %v3657
        %v3663 = vsel %vm3660, %v3657, %v3659
        %v3668 = vmax.f32 %v3648, %v3661
        %v3669 = vmax.f32 %v3649, %v3662
        %v3670 = vmax.f32 %v3650, %v3663
        %v3671 = vmax.f32 %v3651, %v3659
        %3672 = vrot.lane.b32.xlu0 %v3524, 78
        %v3673 = vpop.permute.xlu0 %3672
        %3674 = vrot.lane.b32.xlu0 %v3525, 78
        %v3675 = vpop.permute.xlu0 %3674
        %3676 = vrot.lane.b32.xlu0 %v3526, 78
        %v3677 = vpop.permute.xlu0 %3676
        %3678 = vrot.lane.b32.xlu0 %v3527, 78
        %v3679 = vpop.permute.xlu0 %3678
        %vm3680 = vcmask 637952
        %v3681 = vsel %vm3680, %v3673, %v3675
        %v3682 = vsel %vm3680, %v3675, %v3677
        %v3683 = vsel %vm3680, %v3677, %v3679
        %v3688 = vmax.f32 %v3668, %v3681
        %v3689 = vmax.f32 %v3669, %v3682
        %v3690 = vmax.f32 %v3670, %v3683
        %v3691 = vmax.f32 %v3671, %v3679
        %3695 = vrot.lane.b32.xlu0 %v3518, 50
        %v3696 = vpop.permute.xlu0 %3695
        %3697 = vrot.lane.b32.xlu0 %v3519, 50
        %v3698 = vpop.permute.xlu0 %3697
        %3699 = vrot.lane.b32.xlu0 %v3520, 50
        %v3700 = vpop.permute.xlu0 %3699
        %vm3701 = vcmask 408576
        %v3702 = vsel %vm3701, %v3696, %v3698
        %v3703 = vsel %vm3701, %v3698, %v3700
        %v3708 = vadd.f32 %v445, %v3696
        %v3709 = vadd.f32 %v446, %v3702
        %v3710 = vadd.f32 %v447, %v3703
        %v3711 = vadd.f32 %v448, %v3700
        %3715 = vrot.lane.b32.xlu0 %v3521, 50
        %v3716 = vpop.permute.xlu0 %3715
        %3717 = vrot.lane.b32.xlu0 %v3522, 50
        %v3718 = vpop.permute.xlu0 %3717
        %3719 = vrot.lane.b32.xlu0 %v3523, 50
        %v3720 = vpop.permute.xlu0 %3719
        %v3721 = vsel %vm3701, %v3716, %v3718
        %v3722 = vsel %vm3701, %v3718, %v3720
        %v3727 = vadd.f32 %v3708, %v3716
        %v3728 = vadd.f32 %v3709, %v3721
        %v3729 = vadd.f32 %v3710, %v3722
        %v3730 = vadd.f32 %v3711, %v3720
        %3735 = vrot.lane.b32.xlu0 %v3688, 25
        %v3736 = vpop.permute.xlu0 %3735
        %3737 = vrot.lane.b32.xlu0 %v3689, 25
        %v3738 = vpop.permute.xlu0 %3737
        %3739 = vrot.lane.b32.xlu0 %v3690, 25
        %v3740 = vpop.permute.xlu0 %3739
        %3741 = vrot.lane.b32.xlu0 %v3691, 25
        %v3742 = vpop.permute.xlu0 %3741
        %vm3743 = vcmask 203776
        %v3744 = vsel %vm3743, %v3736, %v3738
        %v3745 = vsel %vm3743, %v3738, %v3740
        %v3746 = vsel %vm3743, %v3740, %v3742
        %v3751 = vadd.f32 %v3727, %v3736
        %v3752 = vadd.f32 %v3728, %v3744
        %v3753 = vadd.f32 %v3729, %v3745
        %v3754 = vadd.f32 %v3730, %v3746
        %3759 = vrot.lane.b32.xlu0 %v3751, 78
        %v3760 = vpop.permute.xlu0 %3759
        %3761 = vrot.lane.b32.xlu0 %v3752, 78
        %v3762 = vpop.permute.xlu0 %3761
        %3763 = vrot.lane.b32.xlu0 %v3753, 78
        %v3764 = vpop.permute.xlu0 %3763
        %3765 = vrot.lane.b32.xlu0 %v3754, 78
        %v3766 = vpop.permute.xlu0 %3765
        %v3767 = vsel %vm3680, %v3760, %v3762
        %v3768 = vsel %vm3680, %v3762, %v3764
        %v3769 = vsel %vm3680, %v3764, %v3766
        %3773 = vst [vmem:[%s244] sm:$0xff] %v3767
        %3774 = vst [vmem:[%s244 + $0x8] sm:$0xff] %v3768
        %3775 = vst [vmem:[%s244 + $0x10] sm:$0xff] %v3769
        %s3776 = sand.u32 %s159, 1
        %s3777 = scalar_lea.sflag [#allocation5], %s3776
        %s3778 = sand.u32 %s159, 1
        %s3779 = smul.addr %s3778, 24
        %s3780 = scalar_lea.vmem [#allocation4], %s3779
        // Predicated region
        $region45: #{tpu_custom_call.1} parent=43 // pred_check
          %p3781 = pneg %p169
        $region46: #{tpu_custom_call.1} parent=43 // pred_check_branch
          %3783 = sbr.rel (%p3781) target = $region48
        $region47: #{tpu_custom_call.1} parent=43 // pred_region
          %s3785 = ssub.s32 384, 384
          %3786 = vsyncadd %s3777, %s3785
          %s3787 = smul.addr %s20, 3
          %s3788 = smul.addr %s3787, 128
          %s3789 = scalar_lea.hbm %s6, %s3788
          %s3791 = sshll.u32 %s3780, 4
          %s3792 = int_to_ptr.vmem [resolvable:$true] %s3791
          %3794 = dma.vmem_to_hbm [thread:$0]  %s3792, 384, %s3789, %s3777
        $region48: #{tpu_custom_call.1} parent=43 // pred_fallthru
          _
      $region44: #{tpu_custom_call.1} parent=5 // pred_fallthru
        _
      %p3795 = scmp.le.s32.totalorder 2, %s15
      // Predicated region
      $region49: #{tpu_custom_call.1} parent=5 // pred_check
        %p3796 = pneg %p3795
      $region50: #{tpu_custom_call.1} parent=5 // pred_check_branch
        %3798 = sbr.rel (%p3796) target = $region52
      $region51: #{tpu_custom_call.1} parent=5 // pred_region
        %s3799 = ssub.s32 %s15, 2
        // Predicated region
        $region53: #{tpu_custom_call.1} parent=51 // pred_check
          %p3800 = pneg %p175
        $region54: #{tpu_custom_call.1} parent=51 // pred_check_branch
          %3802 = sbr.rel (%p3800) target = $region56
        $region55: #{tpu_custom_call.1} parent=51 // pred_region
          %s3803 = sand.u32 %s160, 1
          %s3804 = scalar_lea.sflag [#allocation5], %s3803
          %s3805 = sand.u32 %s160, 1
          %s3806 = smul.addr %s3805, 24
          %s3807 = scalar_lea.vmem [#allocation4], %s3806
          %3808 = dma.done %s3804, 384
        $region56: #{tpu_custom_call.1} parent=51 // pred_fallthru
          _
      $region52: #{tpu_custom_call.1} parent=5 // pred_fallthru
        _
    $region6: #{tpu_custom_call.1} parent=1 // loop_footer
      %s19 = sadd.s32 1, %s15
    $region7: #{tpu_custom_call.1} parent=1 // loop_footer_branch
      %14 = sbr.rel target = $region3
    $region8: #{tpu_custom_call.1} parent=1 // loop_exit
      _
    %3809 = vsyncpa [#allocation5], 1
    %s3810 = scalar_lea.sflag [#allocation5], 1
    %3811 = vsyncpa %s3810, 1

</llo_original>
